<compile_context>
chip_gen: v5e
topology: v5e:2x2
jax: 0.10.0
libtpu: 0.0.40
codegen_flags: <defaults>
</compile_context>

<pallas_src>
import jax
import jax.numpy as jnp
from jax import lax
from jax.experimental import pallas as pl
from jax.experimental.pallas import tpu as pltpu


def _make_kernel(P, T, TB, Wp_pad, Cin, CK, NCOL):
    MB = TB * Wp_pad

    def kernel(x_ref, w_ref, b_ref, o_ref):
        # x_ref: (1, Hin_pad, Win_pad, Cin)  bf16, full padded image (resident across rb)
        # w_ref: (NCOL, CK)                  bf16, phase-flattened weight, pre-transposed
        # b_ref: (NCOL, 1)                   f32,  phase-tiled bias
        # o_ref: (1, 1, NCOL, MB)            f32,  lane-dense pixel-shuffle output block
        rb = pl.program_id(1)
        row0 = pl.multiple_of(rb * TB, TB)

        # im2col slab: T row-slabs loaded once, T*T shifted windows concatenated along
        # the channel axis -> (TB, Wp_pad, CK) -> (TB*Wp_pad, CK).
        taps = []
        for dh in range(T):
            rows = x_ref[0, pl.ds(row0 + (P - dh), TB), :, :]      # (TB, Win_pad, Cin)
            for dw in range(T):
                c0 = P - dw                                        # static width shift
                taps.append(rows[:, c0:c0 + Wp_pad, :])
        slab = jnp.concatenate(taps, axis=-1).reshape(TB * Wp_pad, CK)

        # Single MXU dot, transposed (trans_b) so the spatial dim lands on lanes.
        acc = lax.dot_general(w_ref[...], slab, (((1,), (1,)), ((), ())),
                              preferred_element_type=jnp.float32)   # (NCOL, MB)
        acc = acc + b_ref[...]                                       # bias: once, hoisted
        o_ref[...] = acc.reshape(1, 1, NCOL, MB).astype(o_ref.dtype)

    return kernel


def upsample_conv_layer(x_nchw, weight, bias, stride, *, row_block=None,
                        compute_dtype=jnp.bfloat16):
    """Forward of UpsampleConvLayer (ConvTranspose2d, padding=0, output_padding=0).

    x_nchw: (N, Cin, H, W)
    weight: (Cin, Cout, K, K)   -- PyTorch ConvTranspose2d weight layout
    bias:   (Cout,)
    Returns (N, Cout, Hout, Wout) float32, Hout = (H-1)*stride + K.
    """
    N, Cin, H, W = x_nchw.shape
    Cin_w, Cout, K, K2 = weight.shape
    assert Cin_w == Cin and K == K2
    s = int(stride)
    Hout = (H - 1) * s + K
    Wout = (W - 1) * s + K

    P = -(-(K - 1) // s)            # ceil((K-1)/s): taps per axis per phase - 1
    T = P + 1
    Hp = -(-Hout // s)              # phase rows / cols actually needed
    Wp = -(-Wout // s)
    Wp_pad = -(-Wp // 8) * 8        # sublane-aligned phase-column count
    if row_block is None:
        TB = 16 if Hp <= 16 else 32
    else:
        TB = int(row_block)
    assert TB % 16 == 0, "row_block must be a multiple of 16 (lane-dense stores)"
    RB = -(-Hp // TB)               # number of row blocks (1 for the demo shapes)
    MB = TB * Wp_pad                # lane-dense output minor dim (multiple of 128)
    Hin_pad = RB * TB + P
    Win_pad = Wp_pad + P
    CK = T * T * Cin
    NCOL = s * s * Cout

    # ---- input: NCHW -> NHWC, bf16, compact spatial padding (no zero dilation) ----
    x_nhwc = jnp.transpose(x_nchw, (0, 2, 3, 1)).astype(compute_dtype)
    x_pad = jnp.pad(x_nhwc, ((0, 0), (P, Hin_pad - P - H), (P, Win_pad - P - W), (0, 0)))

    # ---- phase-decomposed weight via pad + reshape + transpose (trace-time constant) ----
    # W[dh,dw,ci,py,px,co] = w[ci,co, py+dh*s, px+dw*s], zero when the tap exits the KxK grid.
    pad_k = T * s - K
    w_padk = jnp.pad(weight.astype(compute_dtype), ((0, 0), (0, 0), (0, pad_k), (0, pad_k)))
    w6 = w_padk.reshape(Cin, Cout, T, s, T, s)                 # (ci, co, dh, py, dw, px)
    wz = jnp.transpose(w6, (2, 4, 0, 3, 5, 1))                 # (dh, dw, ci, py, px, co)
    w_t = jnp.transpose(wz.reshape(CK, NCOL))                  # (NCOL, CK) for trans_b dot
    b_col = jnp.tile(bias.astype(jnp.float32).reshape(1, Cout),
                     (s * s, 1)).reshape(NCOL, 1)              # (NCOL, 1)

    kernel = _make_kernel(P, T, TB, Wp_pad, Cin, CK, NCOL)

    cost = pl.CostEstimate(
        flops=2 * N * RB * NCOL * MB * CK,
        transcendentals=0,
        bytes_accessed=(x_pad.size * x_pad.dtype.itemsize
                        + w_t.size * w_t.dtype.itemsize
                        + b_col.size * 4
                        + N * RB * NCOL * MB * 4))

    # Scoped-VMEM sized to the resident blocks (image + double-buffered output + operands),
    # with headroom; capped at v7x physical capacity.
    img_bytes = Hin_pad * Win_pad * Cin * 2
    out_blk_bytes = NCOL * MB * 4
    slab_bytes = MB * CK * 2 + NCOL * MB * 4
    vmem_needed = 2 * (img_bytes + out_blk_bytes) + NCOL * CK * 2 + NCOL * 128 * 4 + slab_bytes
    vmem_limit = int(min(64 << 20, max(32 << 20, 4 * vmem_needed)))

    out_ps = pl.pallas_call(
        kernel,
        out_shape=jax.ShapeDtypeStruct((N, RB, NCOL, MB), jnp.float32),
        grid_spec=pltpu.PrefetchScalarGridSpec(
            num_scalar_prefetch=0,
            grid=(N, RB),
            in_specs=[
                # full padded image per batch; constant index across rb -> stays resident
                pl.BlockSpec((1, Hin_pad, Win_pad, Cin), lambda n, rb: (n, 0, 0, 0)),
                pl.BlockSpec((NCOL, CK), lambda n, rb: (0, 0)),
                pl.BlockSpec((NCOL, 1), lambda n, rb: (0, 0)),
            ],
            out_specs=pl.BlockSpec((1, 1, NCOL, MB), lambda n, rb: (n, rb, 0, 0)),
        ),
        compiler_params=pltpu.CompilerParams(
            # batch axis megacore-sharded on v7x; row axis kept serial until halo tiling
            # exists (avoids duplicated whole-image fetches when N == 1).
            dimension_semantics=("parallel", "arbitrary"),
            vmem_limit_bytes=vmem_limit),
        cost_estimate=cost,
    )(x_pad, w_t, b_col)

    # ---- depth-to-space de-interleave (cheap HBM layout plumbing), directly to NCHW ----
    o = out_ps.reshape(N, RB, s, s, Cout, TB, Wp_pad)          # (n, rb, py, px, co, tb, wp)
    o = jnp.transpose(o, (0, 4, 1, 5, 2, 6, 3))                # (n, co, rb, tb, py, wp, px)
    o = o.reshape(N, Cout, RB * TB * s, Wp_pad * s)
    return o[:, :, :Hout, :Wout]


if __name__ == "__main__":
    # Module config: UpsampleConvLayer(in_channels=4, out_channels=8,
    #                                  kernel_size=3, stride=2)
    N, Cin, H, W = 2, 4, 16, 16
    Cout, K, stride = 8, 3, 2

    key = jax.random.PRNGKey(0)
    kx, kw, kb = jax.random.split(key, 3)
    x = jax.random.normal(kx, (N, Cin, H, W), jnp.float32)
    weight = 0.1 * jax.random.normal(kw, (Cin, Cout, K, K), jnp.float32)
    bias = 0.1 * jax.random.normal(kb, (Cout,), jnp.float32)

    out = upsample_conv_layer(x, weight, bias, stride)
    out = jax.block_until_ready(out)

    # Reference: transposed conv via lhs-dilated ordinary conv (matches PyTorch).
    # Use the same bf16-rounded operands the kernel consumes, f32 accumulation.
    xq = x.astype(jnp.bfloat16).astype(jnp.float32)
    wq = weight.astype(jnp.bfloat16).astype(jnp.float32)
    w_oihw = jnp.transpose(wq[:, :, ::-1, ::-1], (1, 0, 2, 3))   # (Cout, Cin, K, K)
    ref = lax.conv_general_dilated(
        xq, w_oihw, window_strides=(1, 1),
        padding=[(K - 1, K - 1), (K - 1, K - 1)],
        lhs_dilation=(stride, stride),
        dimension_numbers=("NCHW", "OIHW", "NCHW"),
        precision=lax.Precision.HIGHEST,
    ) + bias[None, :, None, None]

    assert out.shape == (N, Cout, (H - 1) * stride + K, (W - 1) * stride + K), out.shape
    assert jnp.allclose(out, ref, atol=2e-4, rtol=2e-4), \
        float(jnp.max(jnp.abs(out - ref)))
    print("KERNEL_OK")
</pallas_src>

<mosaic_0001>
module attributes {stable_mosaic.version = 11 : i64} {
  func.func @kernel(%arg0: i32, %arg1: i32, %arg2: memref<1x33x25x4xbf16, #tpu.memory_space<vmem>>, %arg3: memref<32x16xbf16, #tpu.memory_space<vmem>>, %arg4: memref<32x1xf32, #tpu.memory_space<vmem>>, %arg5: memref<1x1x32x768xf32, #tpu.memory_space<vmem>>) attributes {dimension_semantics = [#tpu.dimension_semantics<parallel>, #tpu.dimension_semantics<arbitrary>], iteration_bounds = array<i64: 2, 1>, scalar_prefetch = 0 : i64, scratch_operands = 0 : i64, tpu.core_type = #tpu.core_type<tc>, window_params = [{transform_indices = @transform_0, window_bounds = array<i64: 1, 33, 25, 4>}, {pipeline_mode = #tpu.pipeline_mode<synchronous>, transform_indices = @transform_1, window_bounds = array<i64: 32, 16>}, {pipeline_mode = #tpu.pipeline_mode<synchronous>, transform_indices = @transform_2, window_bounds = array<i64: 32, 1>}, {transform_indices = @transform_3, window_bounds = array<i64: 1, 1, 32, 768>}]} {
    %c32_i32 = arith.constant 32 : i32
    %0 = arith.muli %arg1, %c32_i32 : i32
    %1 = tpu.assume_multiple %0, 32 : i32
    %c1_i32 = arith.constant 1 : i32
    %2 = arith.addi %1, %c1_i32 : i32
    %c0 = arith.constant 0 : index
    %3 = arith.index_cast %2 : i32 to index
    %c0_0 = arith.constant 0 : index
    %c0_1 = arith.constant 0 : index
    %4 = vector.load %arg2[%c0, %3, %c0_0, %c0_1] : memref<1x33x25x4xbf16, #tpu.memory_space<vmem>>, vector<1x32x25x4xbf16>
    %5 = vector.shape_cast %4 : vector<1x32x25x4xbf16> to vector<32x25x4xbf16>
    %6 = vector.extract_strided_slice %5 {offsets = [0, 1, 0], sizes = [32, 24, 4], strides = [1, 1, 1]} : vector<32x25x4xbf16> to vector<32x24x4xbf16>
    %7 = vector.extract_strided_slice %5 {offsets = [0, 0, 0], sizes = [32, 24, 4], strides = [1, 1, 1]} : vector<32x25x4xbf16> to vector<32x24x4xbf16>
    %c0_i32 = arith.constant 0 : i32
    %8 = arith.addi %1, %c0_i32 : i32
    %c0_2 = arith.constant 0 : index
    %9 = arith.index_cast %8 : i32 to index
    %c0_3 = arith.constant 0 : index
    %c0_4 = arith.constant 0 : index
    %10 = vector.load %arg2[%c0_2, %9, %c0_3, %c0_4] : memref<1x33x25x4xbf16, #tpu.memory_space<vmem>>, vector<1x32x25x4xbf16>
    %11 = vector.shape_cast %10 : vector<1x32x25x4xbf16> to vector<32x25x4xbf16>
    %12 = vector.extract_strided_slice %11 {offsets = [0, 1, 0], sizes = [32, 24, 4], strides = [1, 1, 1]} : vector<32x25x4xbf16> to vector<32x24x4xbf16>
    %13 = vector.extract_strided_slice %11 {offsets = [0, 0, 0], sizes = [32, 24, 4], strides = [1, 1, 1]} : vector<32x25x4xbf16> to vector<32x24x4xbf16>
    %14 = tpu.concatenate %6, %7, %12, %13 in 2 : vector<32x24x4xbf16>, vector<32x24x4xbf16>, vector<32x24x4xbf16>, vector<32x24x4xbf16> -> vector<32x24x16xbf16>
    %15 = vector.shape_cast %14 : vector<32x24x16xbf16> to vector<768x16xbf16>
    %c0_5 = arith.constant 0 : index
    %c0_6 = arith.constant 0 : index
    %16 = vector.load %arg3[%c0_5, %c0_6] : memref<32x16xbf16, #tpu.memory_space<vmem>>, vector<32x16xbf16>
    %cst = arith.constant dense<0.000000e+00> : vector<32x768xf32>
    %17 = tpu.matmul %16, %15, %cst {dimension_numbers = #tpu.dot_dimension_numbers<[1], [1], [0], [0], [0, 0, 1, 0], [], []>} : vector<32x16xbf16>, vector<768x16xbf16>, vector<32x768xf32> -> vector<32x768xf32>
    %c0_7 = arith.constant 0 : index
    %c0_8 = arith.constant 0 : index
    %18 = vector.load %arg4[%c0_7, %c0_8] : memref<32x1xf32, #tpu.memory_space<vmem>>, vector<32x1xf32>
    %19 = vector.broadcast %18 : vector<32x1xf32> to vector<32x768xf32>
    %20 = arith.addf %17, %19 : vector<32x768xf32>
    %21 = vector.shape_cast %20 : vector<32x768xf32> to vector<1x1x32x768xf32>
    %c0_9 = arith.constant 0 : index
    %c0_10 = arith.constant 0 : index
    %c0_11 = arith.constant 0 : index
    %c0_12 = arith.constant 0 : index
    %22 = vector.load %arg5[%c0_9, %c0_10, %c0_11, %c0_12] : memref<1x1x32x768xf32, #tpu.memory_space<vmem>>, vector<1x1x32x768xf32>
    tpu.vector_store %arg5[%c0_9, %c0_10, %c0_11, %c0_12], %21 {strides = array<i32>} : memref<1x1x32x768xf32, #tpu.memory_space<vmem>>, vector<1x1x32x768xf32>,
    return
  }
  func.func @transform_0(%arg0: i32, %arg1: i32) -> (i32, i32, i32, i32) {
    %c0_i32 = arith.constant 0 : i32
    %c0_i32_0 = arith.constant 0 : i32
    %c0_i32_1 = arith.constant 0 : i32
    %c0_i32_2 = arith.constant 0 : i32
    return %arg0, %c0_i32, %c0_i32_0, %c0_i32_1 : i32, i32, i32, i32
  }
  func.func @transform_1(%arg0: i32, %arg1: i32) -> (i32, i32) {
    %c0_i32 = arith.constant 0 : i32
    %c0_i32_0 = arith.constant 0 : i32
    %c0_i32_1 = arith.constant 0 : i32
    return %c0_i32, %c0_i32_0 : i32, i32
  }
  func.func @transform_2(%arg0: i32, %arg1: i32) -> (i32, i32) {
    %c0_i32 = arith.constant 0 : i32
    %c0_i32_0 = arith.constant 0 : i32
    %c0_i32_1 = arith.constant 0 : i32
    return %c0_i32, %c0_i32_0 : i32, i32
  }
  func.func @transform_3(%arg0: i32, %arg1: i32) -> (i32, i32, i32, i32) {
    %c0_i32 = arith.constant 0 : i32
    %c0_i32_0 = arith.constant 0 : i32
    %c0_i32_1 = arith.constant 0 : i32
    return %arg0, %arg1, %c0_i32, %c0_i32_0 : i32, i32, i32, i32
  }
}

</mosaic_0001>

<llo_original>
// kernel: tpu_custom_call.1
$region0: #{tpu_custom_call.1}
  #allocation0 [shape = 'u32[]', space=smem, size = 0x4, offset = 0x4, fixed_abs, tag = 'smem constant byte address 0x4 - core index']
  #allocation1 [shape = 'u32[72,128]{1,0:T(1,128)}', space=vmem, size = 0x9000, scoped, tag = 'internal scratch']
  %s0 = inlined_call_operand.vmem [shape: bf16[2,33,25,4], index: 0, kind: input, shape index: {}]
  %s1 = inlined_call_operand.vmem [shape: bf16[32,16], index: 1, kind: input, shape index: {}]
  %s2 = inlined_call_operand.vmem [shape: f32[32,1], index: 2, kind: input, shape index: {}]
  %s3 = inlined_call_operand.hbm [shape: f32[2,1,32,768], index: 3, kind: output, shape index: {}]
  %s4 = sld [smem:[#allocation0]]
  $region45: #{tpu_custom_call.1} parent=0
    _
  %s6 = ssub.s32 1, %s4
  %s7 = scalar_select 0, %s6, %s4
  $region1: #{tpu_custom_call.1} parent=0
    #allocation2 [shape = 'u8[196608]{0}', space=vmem, size = 0x30000, scoped, tag = 'output window, operand 0']
    #allocation3 [shape = 's32[2]{0}', space=sflag, size = 0x8, scoped, tag = 'scoped memory for tpu_custom_call.1']
    %8 = vsyncpa [#allocation3], 0
    %s9 = scalar_lea.sflag [#allocation3], 1
    %10 = vsyncpa %s9, 0
    loop: start=0, step=1, limit=4
    $region2: #{tpu_custom_call.1} parent=1 // loop_pre_header
      _
    $region3: #{tpu_custom_call.1} parent=1 // loop_header
      %s12 = sphi 0, %s16
      %p13 = scmp.ge.s32.totalorder %s12, 4
      %s19 = sphi 0, %s31
      %s20 = sphi 0, %s27
      %s21 = sphi 0, %s19
      %s22 = sphi 0, %s20
      %s23 = sphi 0, %s21
      %s24 = sphi 0, %s22
      %s34 = sphi 0, %s36
      %s37 = sphi 0, %s34
      %s38 = sphi 0, %s37
      %s54 = sphi 0, %s38
      %s58 = sphi 0, %s58
      %s60 = sphi 0, %s58
      %s61 = sphi 0, %s60
      %s75 = sphi 0, %s61
      %s79 = sphi 0, %s79
      %s81 = sphi 0, %s79
      %s82 = sphi 0, %s81
      %s96 = sphi 0, %s82
      %s104 = sphi 0, %s106
      %s107 = sphi 0, %s104
      %s108 = sphi 0, %s107
      %s124 = sphi 0, %s108
    $region4: #{tpu_custom_call.1} parent=1 // loop_header_branch
      %15 = sbr.rel (%p13) target = $region8
    $region5: #{tpu_custom_call.1} parent=1 // loop_body
      %s17 = ssub.s32 %s12, 1
      %s18 = ssub.s32 %s12, 2
      %s25 = sadd.s32 1, %s20
      %p26 = scmp.ge.s32.totalorder %s25, 1
      %s27 = scalar_select %p26, 0, %s25
      %s28 = sadd.s32 1, %s19
      %s29 = scalar_select %p26, %s28, %s19
      %p30 = scmp.ge.s32.totalorder %s29, 2
      %s31 = scalar_select %p30, 0, %s29
      %s32 = ssub.s32 %s19, %s31
      %p33 = scmp.eq.s32.totalorder %s32, 0
      %s35 = sadd.s32 %s34, 1
      %s36 = scalar_select %p33, %s34, %s35
      %p39 = pneg %p33
      %p40 = scmp.eq.s32.totalorder %s12, 1
      %p41 = por %p39, %p40
      %p42 = scmp.ne.s32.totalorder %s34, %s37
      %p43 = scmp.eq.s32.totalorder %s12, 0
      %p44 = por %p42, %p43
      %p45 = scmp.ne.s32.totalorder %s34, %s37
      %p46 = scmp.eq.s32.totalorder %s17, 1
      %p47 = por %p45, %p46
      %p48 = scmp.ne.s32.totalorder %s37, %s38
      %p49 = scmp.eq.s32.totalorder %s17, 0
      %p50 = por %p48, %p49
      %p51 = scmp.ne.s32.totalorder %s37, %s38
      %p52 = scmp.eq.s32.totalorder %s18, 1
      %p53 = por %p51, %p52
      %p55 = scmp.ne.s32.totalorder %s38, %s54
      %p56 = scmp.eq.s32.totalorder %s18, 0
      %p57 = por %p55, %p56
      %s59 = sadd.s32 %s58, 1
      %p62 = scmp.eq.s32.totalorder %s12, 1
      %p63 = scmp.ne.s32.totalorder %s58, %s60
      %p64 = scmp.eq.s32.totalorder %s12, 0
      %p65 = por %p63, %p64
      %p66 = scmp.ne.s32.totalorder %s58, %s60
      %p67 = scmp.eq.s32.totalorder %s17, 1
      %p68 = por %p66, %p67
      %p69 = scmp.ne.s32.totalorder %s60, %s61
      %p70 = scmp.eq.s32.totalorder %s17, 0
      %p71 = por %p69, %p70
      %p72 = scmp.ne.s32.totalorder %s60, %s61
      %p73 = scmp.eq.s32.totalorder %s18, 1
      %p74 = por %p72, %p73
      %p76 = scmp.ne.s32.totalorder %s61, %s75
      %p77 = scmp.eq.s32.totalorder %s18, 0
      %p78 = por %p76, %p77
      %s80 = sadd.s32 %s79, 1
      %p83 = scmp.eq.s32.totalorder %s12, 1
      %p84 = scmp.ne.s32.totalorder %s79, %s81
      %p85 = scmp.eq.s32.totalorder %s12, 0
      %p86 = por %p84, %p85
      %p87 = scmp.ne.s32.totalorder %s79, %s81
      %p88 = scmp.eq.s32.totalorder %s17, 1
      %p89 = por %p87, %p88
      %p90 = scmp.ne.s32.totalorder %s81, %s82
      %p91 = scmp.eq.s32.totalorder %s17, 0
      %p92 = por %p90, %p91
      %p93 = scmp.ne.s32.totalorder %s81, %s82
      %p94 = scmp.eq.s32.totalorder %s18, 1
      %p95 = por %p93, %p94
      %p97 = scmp.ne.s32.totalorder %s82, %s96
      %p98 = scmp.eq.s32.totalorder %s18, 0
      %p99 = por %p97, %p98
      %s100 = ssub.s32 %s19, %s31
      %s101 = ssub.s32 %s20, %s27
      %s102 = sor.u32 %s100, %s101
      %p103 = scmp.eq.s32.totalorder %s102, 0
      %s105 = sadd.s32 %s104, 1
      %s106 = scalar_select %p103, %s104, %s105
      %p109 = pneg %p103
      %p110 = scmp.eq.s32.totalorder %s12, 1
      %p111 = por %p109, %p110
      %p112 = scmp.ne.s32.totalorder %s104, %s107
      %p113 = scmp.eq.s32.totalorder %s12, 0
      %p114 = por %p112, %p113
      %p115 = scmp.ne.s32.totalorder %s104, %s107
      %p116 = scmp.eq.s32.totalorder %s17, 1
      %p117 = por %p115, %p116
      %p118 = scmp.ne.s32.totalorder %s107, %s108
      %p119 = scmp.eq.s32.totalorder %s17, 0
      %p120 = por %p118, %p119
      %p121 = scmp.ne.s32.totalorder %s107, %s108
      %p122 = scmp.eq.s32.totalorder %s18, 1
      %p123 = por %p121, %p122
      %p125 = scmp.ne.s32.totalorder %s108, %s124
      %p126 = scmp.eq.s32.totalorder %s18, 0
      %p127 = por %p125, %p126
      %p128 = scmp.le.s32.totalorder 1, %s12
      %p129 = scmp.lt.s32.totalorder %s12, 3
      %p130 = pnand %p128, %p129
      %p131 = pneg %p130
      // Predicated region
      $region9: #{tpu_custom_call.1} parent=5 // pred_check
        _
      $region10: #{tpu_custom_call.1} parent=5 // pred_check_branch
        %133 = sbr.rel (%p130) target = $region12
      $region11: #{tpu_custom_call.1} parent=5 // pred_region
        %s134 = ssub.s32 %s12, 1
        // Predicated region
        $region13: #{tpu_custom_call.1} parent=11 // pred_check
          %p135 = pneg %p71
        $region14: #{tpu_custom_call.1} parent=11 // pred_check_branch
          %137 = sbr.rel (%p135) target = $region16
        $region15: #{tpu_custom_call.1} parent=11 // pred_region
          _
        $region16: #{tpu_custom_call.1} parent=11 // pred_fallthru
          _
        // Predicated region
        $region17: #{tpu_custom_call.1} parent=11 // pred_check
          %p138 = pneg %p92
        $region18: #{tpu_custom_call.1} parent=11 // pred_check_branch
          %140 = sbr.rel (%p138) target = $region20
        $region19: #{tpu_custom_call.1} parent=11 // pred_region
          _
        $region20: #{tpu_custom_call.1} parent=11 // pred_fallthru
          _
      $region12: #{tpu_custom_call.1} parent=5 // pred_fallthru
        _
      %p141 = scmp.lt.s32.totalorder %s12, 2
      // Predicated region
      $region21: #{tpu_custom_call.1} parent=5 // pred_check
        %p142 = pneg %p141
      $region22: #{tpu_custom_call.1} parent=5 // pred_check_branch
        %144 = sbr.rel (%p142) target = $region24
      $region23: #{tpu_custom_call.1} parent=5 // pred_region
        // Predicated region
        $region25: #{tpu_custom_call.1} parent=23 // pred_check
          %p145 = pneg %p44
        $region26: #{tpu_custom_call.1} parent=23 // pred_check_branch
          %147 = sbr.rel (%p145) target = $region28
        $region27: #{tpu_custom_call.1} parent=23 // pred_region
          %p148 = scmp.lt.s32.totalorder %s19, 1
          %s149 = scalar_select %p148, %s19, 1
          %s150 = smul.addr %s149, 132
          %s151 = smul.addr %s150, 4
          %s152 = scalar_lea.vmem %s0, %s151
        $region28: #{tpu_custom_call.1} parent=23 // pred_fallthru
          _
      $region24: #{tpu_custom_call.1} parent=5 // pred_fallthru
        _
      %p153 = scmp.le.s32.totalorder 1, %s12
      %p154 = scmp.lt.s32.totalorder %s12, 3
      %p155 = pnand %p153, %p154
      %p156 = pneg %p155
      // Predicated region
      $region29: #{tpu_custom_call.1} parent=5 // pred_check
        _
      $region30: #{tpu_custom_call.1} parent=5 // pred_check_branch
        %158 = sbr.rel (%p155) target = $region32
      $region31: #{tpu_custom_call.1} parent=5 // pred_region
        %s159 = ssub.s32 %s12, 1
        %p160 = scmp.lt.s32.totalorder %s21, 1
        %s161 = scalar_select %p160, %s21, 1
        %s162 = smul.addr %s161, 132
        %s163 = smul.addr %s162, 4
        %s164 = scalar_lea.vmem %s0, %s163
        %p165 = pneg %p50
        %p166 = pneg %p47
        %p167 = pneg %p71
        %p168 = pneg %p68
        %p169 = pneg %p92
        %p170 = pneg %p89
        %p171 = pneg %p120
        %p172 = pneg %p117
        %s173 = sand.u32 %s107, 1
        %s174 = scalar_lea.sflag [#allocation3], %s173
        %s175 = sand.u32 %s107, 1
        %s176 = smul.addr %s175, 192
        %s177 = scalar_lea.vmem [#allocation2], %s176
        %p178 = scmp.lt.s32.totalorder %s21, 1
        %s179 = scalar_select %p178, %s21, 1
        %s180 = smul.addr %s179, 132
        %s181 = smul.addr %s180, 4
        %s182 = scalar_lea.vmem %s0, %s181
        %s183 = smul.u32 %s22, 32
        %s184 = sadd.s32 %s183, 1
        %s185 = smul.u32 %s184, 4
        %s186 = smul.addr %s185, 4
        %s187 = scalar_lea.vmem %s182, %s186
        %v188 = vld [vmem:[%s187] sm:$0xf]
        %v189 = vld [vmem:[%s187 + $0x4] sm:$0xf]
        %v190 = vld [vmem:[%s187 + $0x8] sm:$0xf]
        %v191 = vld [vmem:[%s187 + $0xc] sm:$0x1]
        %v192 = vld [vmem:[%s187 + $0x10] sm:$0xf]
        %v193 = vld [vmem:[%s187 + $0x14] sm:$0xf]
        %v194 = vld [vmem:[%s187 + $0x18] sm:$0xf]
        %v195 = vld [vmem:[%s187 + $0x1c] sm:$0x1]
        %v196 = vld [vmem:[%s187 + $0x20] sm:$0xf]
        %v197 = vld [vmem:[%s187 + $0x24] sm:$0xf]
        %v198 = vld [vmem:[%s187 + $0x28] sm:$0xf]
        %v199 = vld [vmem:[%s187 + $0x2c] sm:$0x1]
        %v200 = vld [vmem:[%s187 + $0x30] sm:$0xf]
        %v201 = vld [vmem:[%s187 + $0x34] sm:$0xf]
        %v202 = vld [vmem:[%s187 + $0x38] sm:$0xf]
        %v203 = vld [vmem:[%s187 + $0x3c] sm:$0x1]
        %v204 = vld [vmem:[%s187 + $0x40] sm:$0xf]
        %v205 = vld [vmem:[%s187 + $0x44] sm:$0xf]
        %v206 = vld [vmem:[%s187 + $0x48] sm:$0xf]
        %v207 = vld [vmem:[%s187 + $0x4c] sm:$0x1]
        %v208 = vld [vmem:[%s187 + $0x50] sm:$0xf]
        %v209 = vld [vmem:[%s187 + $0x54] sm:$0xf]
        %v210 = vld [vmem:[%s187 + $0x58] sm:$0xf]
        %v211 = vld [vmem:[%s187 + $0x5c] sm:$0x1]
        %v212 = vld [vmem:[%s187 + $0x60] sm:$0xf]
        %v213 = vld [vmem:[%s187 + $0x64] sm:$0xf]
        %v214 = vld [vmem:[%s187 + $0x68] sm:$0xf]
        %v215 = vld [vmem:[%s187 + $0x6c] sm:$0x1]
        %v216 = vld [vmem:[%s187 + $0x70] sm:$0xf]
        %v217 = vld [vmem:[%s187 + $0x74] sm:$0xf]
        %v218 = vld [vmem:[%s187 + $0x78] sm:$0xf]
        %v219 = vld [vmem:[%s187 + $0x7c] sm:$0x1]
        %v220 = vld [vmem:[%s187 + $0x80] sm:$0xf]
        %v221 = vld [vmem:[%s187 + $0x84] sm:$0xf]
        %v222 = vld [vmem:[%s187 + $0x88] sm:$0xf]
        %v223 = vld [vmem:[%s187 + $0x8c] sm:$0x1]
        %v224 = vld [vmem:[%s187 + $0x90] sm:$0xf]
        %v225 = vld [vmem:[%s187 + $0x94] sm:$0xf]
        %v226 = vld [vmem:[%s187 + $0x98] sm:$0xf]
        %v227 = vld [vmem:[%s187 + $0x9c] sm:$0x1]
        %v228 = vld [vmem:[%s187 + $0xa0] sm:$0xf]
        %v229 = vld [vmem:[%s187 + $0xa4] sm:$0xf]
        %v230 = vld [vmem:[%s187 + $0xa8] sm:$0xf]
        %v231 = vld [vmem:[%s187 + $0xac] sm:$0x1]
        %v232 = vld [vmem:[%s187 + $0xb0] sm:$0xf]
        %v233 = vld [vmem:[%s187 + $0xb4] sm:$0xf]
        %v234 = vld [vmem:[%s187 + $0xb8] sm:$0xf]
        %v235 = vld [vmem:[%s187 + $0xbc] sm:$0x1]
        %v236 = vld [vmem:[%s187 + $0xc0] sm:$0xf]
        %v237 = vld [vmem:[%s187 + $0xc4] sm:$0xf]
        %v238 = vld [vmem:[%s187 + $0xc8] sm:$0xf]
        %v239 = vld [vmem:[%s187 + $0xcc] sm:$0x1]
        %v240 = vld [vmem:[%s187 + $0xd0] sm:$0xf]
        %v241 = vld [vmem:[%s187 + $0xd4] sm:$0xf]
        %v242 = vld [vmem:[%s187 + $0xd8] sm:$0xf]
        %v243 = vld [vmem:[%s187 + $0xdc] sm:$0x1]
        %v244 = vld [vmem:[%s187 + $0xe0] sm:$0xf]
        %v245 = vld [vmem:[%s187 + $0xe4] sm:$0xf]
        %v246 = vld [vmem:[%s187 + $0xe8] sm:$0xf]
        %v247 = vld [vmem:[%s187 + $0xec] sm:$0x1]
        %v248 = vld [vmem:[%s187 + $0xf0] sm:$0xf]
        %v249 = vld [vmem:[%s187 + $0xf4] sm:$0xf]
        %v250 = vld [vmem:[%s187 + $0xf8] sm:$0xf]
        %v251 = vld [vmem:[%s187 + $0xfc] sm:$0x1]
        %v252 = vld [vmem:[%s187 + $0x100] sm:$0xf]
        %v253 = vld [vmem:[%s187 + $0x104] sm:$0xf]
        %v254 = vld [vmem:[%s187 + $0x108] sm:$0xf]
        %v255 = vld [vmem:[%s187 + $0x10c] sm:$0x1]
        %v256 = vld [vmem:[%s187 + $0x110] sm:$0xf]
        %v257 = vld [vmem:[%s187 + $0x114] sm:$0xf]
        %v258 = vld [vmem:[%s187 + $0x118] sm:$0xf]
        %v259 = vld [vmem:[%s187 + $0x11c] sm:$0x1]
        %v260 = vld [vmem:[%s187 + $0x120] sm:$0xf]
        %v261 = vld [vmem:[%s187 + $0x124] sm:$0xf]
        %v262 = vld [vmem:[%s187 + $0x128] sm:$0xf]
        %v263 = vld [vmem:[%s187 + $0x12c] sm:$0x1]
        %v264 = vld [vmem:[%s187 + $0x130] sm:$0xf]
        %v265 = vld [vmem:[%s187 + $0x134] sm:$0xf]
        %v266 = vld [vmem:[%s187 + $0x138] sm:$0xf]
        %v267 = vld [vmem:[%s187 + $0x13c] sm:$0x1]
        %v268 = vld [vmem:[%s187 + $0x140] sm:$0xf]
        %v269 = vld [vmem:[%s187 + $0x144] sm:$0xf]
        %v270 = vld [vmem:[%s187 + $0x148] sm:$0xf]
        %v271 = vld [vmem:[%s187 + $0x14c] sm:$0x1]
        %v272 = vld [vmem:[%s187 + $0x150] sm:$0xf]
        %v273 = vld [vmem:[%s187 + $0x154] sm:$0xf]
        %v274 = vld [vmem:[%s187 + $0x158] sm:$0xf]
        %v275 = vld [vmem:[%s187 + $0x15c] sm:$0x1]
        %v276 = vld [vmem:[%s187 + $0x160] sm:$0xf]
        %v277 = vld [vmem:[%s187 + $0x164] sm:$0xf]
        %v278 = vld [vmem:[%s187 + $0x168] sm:$0xf]
        %v279 = vld [vmem:[%s187 + $0x16c] sm:$0x1]
        %v280 = vld [vmem:[%s187 + $0x170] sm:$0xf]
        %v281 = vld [vmem:[%s187 + $0x174] sm:$0xf]
        %v282 = vld [vmem:[%s187 + $0x178] sm:$0xf]
        %v283 = vld [vmem:[%s187 + $0x17c] sm:$0x1]
        %v284 = vld [vmem:[%s187 + $0x180] sm:$0xf]
        %v285 = vld [vmem:[%s187 + $0x184] sm:$0xf]
        %v286 = vld [vmem:[%s187 + $0x188] sm:$0xf]
        %v287 = vld [vmem:[%s187 + $0x18c] sm:$0x1]
        %v288 = vld [vmem:[%s187 + $0x190] sm:$0xf]
        %v289 = vld [vmem:[%s187 + $0x194] sm:$0xf]
        %v290 = vld [vmem:[%s187 + $0x198] sm:$0xf]
        %v291 = vld [vmem:[%s187 + $0x19c] sm:$0x1]
        %v292 = vld [vmem:[%s187 + $0x1a0] sm:$0xf]
        %v293 = vld [vmem:[%s187 + $0x1a4] sm:$0xf]
        %v294 = vld [vmem:[%s187 + $0x1a8] sm:$0xf]
        %v295 = vld [vmem:[%s187 + $0x1ac] sm:$0x1]
        %v296 = vld [vmem:[%s187 + $0x1b0] sm:$0xf]
        %v297 = vld [vmem:[%s187 + $0x1b4] sm:$0xf]
        %v298 = vld [vmem:[%s187 + $0x1b8] sm:$0xf]
        %v299 = vld [vmem:[%s187 + $0x1bc] sm:$0x1]
        %v300 = vld [vmem:[%s187 + $0x1c0] sm:$0xf]
        %v301 = vld [vmem:[%s187 + $0x1c4] sm:$0xf]
        %v302 = vld [vmem:[%s187 + $0x1c8] sm:$0xf]
        %v303 = vld [vmem:[%s187 + $0x1cc] sm:$0x1]
        %v304 = vld [vmem:[%s187 + $0x1d0] sm:$0xf]
        %v305 = vld [vmem:[%s187 + $0x1d4] sm:$0xf]
        %v306 = vld [vmem:[%s187 + $0x1d8] sm:$0xf]
        %v307 = vld [vmem:[%s187 + $0x1dc] sm:$0x1]
        %v308 = vld [vmem:[%s187 + $0x1e0] sm:$0xf]
        %v309 = vld [vmem:[%s187 + $0x1e4] sm:$0xf]
        %v310 = vld [vmem:[%s187 + $0x1e8] sm:$0xf]
        %v311 = vld [vmem:[%s187 + $0x1ec] sm:$0x1]
        %v312 = vld [vmem:[%s187 + $0x1f0] sm:$0xf]
        %v313 = vld [vmem:[%s187 + $0x1f4] sm:$0xf]
        %v314 = vld [vmem:[%s187 + $0x1f8] sm:$0xf]
        %v315 = vld [vmem:[%s187 + $0x1fc] sm:$0x1]
        %s316 = smul.u32 %s183, 4
        %s317 = smul.addr %s316, 4
        %s318 = scalar_lea.vmem %s182, %s317
        %v319 = vld [vmem:[%s318] sm:$0xf]
        %v320 = vld [vmem:[%s318 + $0x4] sm:$0xf]
        %v321 = vld [vmem:[%s318 + $0x8] sm:$0xf]
        %v322 = vld [vmem:[%s318 + $0xc] sm:$0x1]
        %v323 = vld [vmem:[%s318 + $0x10] sm:$0xf]
        %v324 = vld [vmem:[%s318 + $0x14] sm:$0xf]
        %v325 = vld [vmem:[%s318 + $0x18] sm:$0xf]
        %v326 = vld [vmem:[%s318 + $0x1c] sm:$0x1]
        %v327 = vld [vmem:[%s318 + $0x20] sm:$0xf]
        %v328 = vld [vmem:[%s318 + $0x24] sm:$0xf]
        %v329 = vld [vmem:[%s318 + $0x28] sm:$0xf]
        %v330 = vld [vmem:[%s318 + $0x2c] sm:$0x1]
        %v331 = vld [vmem:[%s318 + $0x30] sm:$0xf]
        %v332 = vld [vmem:[%s318 + $0x34] sm:$0xf]
        %v333 = vld [vmem:[%s318 + $0x38] sm:$0xf]
        %v334 = vld [vmem:[%s318 + $0x3c] sm:$0x1]
        %v335 = vld [vmem:[%s318 + $0x40] sm:$0xf]
        %v336 = vld [vmem:[%s318 + $0x44] sm:$0xf]
        %v337 = vld [vmem:[%s318 + $0x48] sm:$0xf]
        %v338 = vld [vmem:[%s318 + $0x4c] sm:$0x1]
        %v339 = vld [vmem:[%s318 + $0x50] sm:$0xf]
        %v340 = vld [vmem:[%s318 + $0x54] sm:$0xf]
        %v341 = vld [vmem:[%s318 + $0x58] sm:$0xf]
        %v342 = vld [vmem:[%s318 + $0x5c] sm:$0x1]
        %v343 = vld [vmem:[%s318 + $0x60] sm:$0xf]
        %v344 = vld [vmem:[%s318 + $0x64] sm:$0xf]
        %v345 = vld [vmem:[%s318 + $0x68] sm:$0xf]
        %v346 = vld [vmem:[%s318 + $0x6c] sm:$0x1]
        %v347 = vld [vmem:[%s318 + $0x70] sm:$0xf]
        %v348 = vld [vmem:[%s318 + $0x74] sm:$0xf]
        %v349 = vld [vmem:[%s318 + $0x78] sm:$0xf]
        %v350 = vld [vmem:[%s318 + $0x7c] sm:$0x1]
        %v351 = vld [vmem:[%s318 + $0x80] sm:$0xf]
        %v352 = vld [vmem:[%s318 + $0x84] sm:$0xf]
        %v353 = vld [vmem:[%s318 + $0x88] sm:$0xf]
        %v354 = vld [vmem:[%s318 + $0x8c] sm:$0x1]
        %v355 = vld [vmem:[%s318 + $0x90] sm:$0xf]
        %v356 = vld [vmem:[%s318 + $0x94] sm:$0xf]
        %v357 = vld [vmem:[%s318 + $0x98] sm:$0xf]
        %v358 = vld [vmem:[%s318 + $0x9c] sm:$0x1]
        %v359 = vld [vmem:[%s318 + $0xa0] sm:$0xf]
        %v360 = vld [vmem:[%s318 + $0xa4] sm:$0xf]
        %v361 = vld [vmem:[%s318 + $0xa8] sm:$0xf]
        %v362 = vld [vmem:[%s318 + $0xac] sm:$0x1]
        %v363 = vld [vmem:[%s318 + $0xb0] sm:$0xf]
        %v364 = vld [vmem:[%s318 + $0xb4] sm:$0xf]
        %v365 = vld [vmem:[%s318 + $0xb8] sm:$0xf]
        %v366 = vld [vmem:[%s318 + $0xbc] sm:$0x1]
        %v367 = vld [vmem:[%s318 + $0xc0] sm:$0xf]
        %v368 = vld [vmem:[%s318 + $0xc4] sm:$0xf]
        %v369 = vld [vmem:[%s318 + $0xc8] sm:$0xf]
        %v370 = vld [vmem:[%s318 + $0xcc] sm:$0x1]
        %v371 = vld [vmem:[%s318 + $0xd0] sm:$0xf]
        %v372 = vld [vmem:[%s318 + $0xd4] sm:$0xf]
        %v373 = vld [vmem:[%s318 + $0xd8] sm:$0xf]
        %v374 = vld [vmem:[%s318 + $0xdc] sm:$0x1]
        %v375 = vld [vmem:[%s318 + $0xe0] sm:$0xf]
        %v376 = vld [vmem:[%s318 + $0xe4] sm:$0xf]
        %v377 = vld [vmem:[%s318 + $0xe8] sm:$0xf]
        %v378 = vld [vmem:[%s318 + $0xec] sm:$0x1]
        %v379 = vld [vmem:[%s318 + $0xf0] sm:$0xf]
        %v380 = vld [vmem:[%s318 + $0xf4] sm:$0xf]
        %v381 = vld [vmem:[%s318 + $0xf8] sm:$0xf]
        %v382 = vld [vmem:[%s318 + $0xfc] sm:$0x1]
        %v383 = vld [vmem:[%s318 + $0x100] sm:$0xf]
        %v384 = vld [vmem:[%s318 + $0x104] sm:$0xf]
        %v385 = vld [vmem:[%s318 + $0x108] sm:$0xf]
        %v386 = vld [vmem:[%s318 + $0x10c] sm:$0x1]
        %v387 = vld [vmem:[%s318 + $0x110] sm:$0xf]
        %v388 = vld [vmem:[%s318 + $0x114] sm:$0xf]
        %v389 = vld [vmem:[%s318 + $0x118] sm:$0xf]
        %v390 = vld [vmem:[%s318 + $0x11c] sm:$0x1]
        %v391 = vld [vmem:[%s318 + $0x120] sm:$0xf]
        %v392 = vld [vmem:[%s318 + $0x124] sm:$0xf]
        %v393 = vld [vmem:[%s318 + $0x128] sm:$0xf]
        %v394 = vld [vmem:[%s318 + $0x12c] sm:$0x1]
        %v395 = vld [vmem:[%s318 + $0x130] sm:$0xf]
        %v396 = vld [vmem:[%s318 + $0x134] sm:$0xf]
        %v397 = vld [vmem:[%s318 + $0x138] sm:$0xf]
        %v398 = vld [vmem:[%s318 + $0x13c] sm:$0x1]
        %v399 = vld [vmem:[%s318 + $0x140] sm:$0xf]
        %v400 = vld [vmem:[%s318 + $0x144] sm:$0xf]
        %v401 = vld [vmem:[%s318 + $0x148] sm:$0xf]
        %v402 = vld [vmem:[%s318 + $0x14c] sm:$0x1]
        %v403 = vld [vmem:[%s318 + $0x150] sm:$0xf]
        %v404 = vld [vmem:[%s318 + $0x154] sm:$0xf]
        %v405 = vld [vmem:[%s318 + $0x158] sm:$0xf]
        %v406 = vld [vmem:[%s318 + $0x15c] sm:$0x1]
        %v407 = vld [vmem:[%s318 + $0x160] sm:$0xf]
        %v408 = vld [vmem:[%s318 + $0x164] sm:$0xf]
        %v409 = vld [vmem:[%s318 + $0x168] sm:$0xf]
        %v410 = vld [vmem:[%s318 + $0x16c] sm:$0x1]
        %v411 = vld [vmem:[%s318 + $0x170] sm:$0xf]
        %v412 = vld [vmem:[%s318 + $0x174] sm:$0xf]
        %v413 = vld [vmem:[%s318 + $0x178] sm:$0xf]
        %v414 = vld [vmem:[%s318 + $0x17c] sm:$0x1]
        %v415 = vld [vmem:[%s318 + $0x180] sm:$0xf]
        %v416 = vld [vmem:[%s318 + $0x184] sm:$0xf]
        %v417 = vld [vmem:[%s318 + $0x188] sm:$0xf]
        %v418 = vld [vmem:[%s318 + $0x18c] sm:$0x1]
        %v419 = vld [vmem:[%s318 + $0x190] sm:$0xf]
        %v420 = vld [vmem:[%s318 + $0x194] sm:$0xf]
        %v421 = vld [vmem:[%s318 + $0x198] sm:$0xf]
        %v422 = vld [vmem:[%s318 + $0x19c] sm:$0x1]
        %v423 = vld [vmem:[%s318 + $0x1a0] sm:$0xf]
        %v424 = vld [vmem:[%s318 + $0x1a4] sm:$0xf]
        %v425 = vld [vmem:[%s318 + $0x1a8] sm:$0xf]
        %v426 = vld [vmem:[%s318 + $0x1ac] sm:$0x1]
        %v427 = vld [vmem:[%s318 + $0x1b0] sm:$0xf]
        %v428 = vld [vmem:[%s318 + $0x1b4] sm:$0xf]
        %v429 = vld [vmem:[%s318 + $0x1b8] sm:$0xf]
        %v430 = vld [vmem:[%s318 + $0x1bc] sm:$0x1]
        %v431 = vld [vmem:[%s318 + $0x1c0] sm:$0xf]
        %v432 = vld [vmem:[%s318 + $0x1c4] sm:$0xf]
        %v433 = vld [vmem:[%s318 + $0x1c8] sm:$0xf]
        %v434 = vld [vmem:[%s318 + $0x1cc] sm:$0x1]
        %v435 = vld [vmem:[%s318 + $0x1d0] sm:$0xf]
        %v436 = vld [vmem:[%s318 + $0x1d4] sm:$0xf]
        %v437 = vld [vmem:[%s318 + $0x1d8] sm:$0xf]
        %v438 = vld [vmem:[%s318 + $0x1dc] sm:$0x1]
        %v439 = vld [vmem:[%s318 + $0x1e0] sm:$0xf]
        %v440 = vld [vmem:[%s318 + $0x1e4] sm:$0xf]
        %v441 = vld [vmem:[%s318 + $0x1e8] sm:$0xf]
        %v442 = vld [vmem:[%s318 + $0x1ec] sm:$0x1]
        %v443 = vld [vmem:[%s318 + $0x1f0] sm:$0xf]
        %v444 = vld [vmem:[%s318 + $0x1f4] sm:$0xf]
        %v445 = vld [vmem:[%s318 + $0x1f8] sm:$0xf]
        %v446 = vld [vmem:[%s318 + $0x1fc] sm:$0x1]
        %v575 = vunpack.c.l.b16 %v188
        %v576 = vunpack.c.l.b16 %v189
        %v577 = vunpack.c.l.b16 %v190
        %v578 = vunpack.c.l.b16 %v191
        %v579 = vunpack.c.l.b16 %v192
        %v580 = vunpack.c.l.b16 %v193
        %v581 = vunpack.c.l.b16 %v194
        %v582 = vunpack.c.l.b16 %v195
        %v583 = vunpack.c.l.b16 %v196
        %v584 = vunpack.c.l.b16 %v197
        %v585 = vunpack.c.l.b16 %v198
        %v586 = vunpack.c.l.b16 %v199
        %v587 = vunpack.c.l.b16 %v200
        %v588 = vunpack.c.l.b16 %v201
        %v589 = vunpack.c.l.b16 %v202
        %v590 = vunpack.c.l.b16 %v203
        %v591 = vunpack.c.l.b16 %v204
        %v592 = vunpack.c.l.b16 %v205
        %v593 = vunpack.c.l.b16 %v206
        %v594 = vunpack.c.l.b16 %v207
        %v595 = vunpack.c.l.b16 %v208
        %v596 = vunpack.c.l.b16 %v209
        %v597 = vunpack.c.l.b16 %v210
        %v598 = vunpack.c.l.b16 %v211
        %v599 = vunpack.c.l.b16 %v212
        %v600 = vunpack.c.l.b16 %v213
        %v601 = vunpack.c.l.b16 %v214
        %v602 = vunpack.c.l.b16 %v215
        %v603 = vunpack.c.l.b16 %v216
        %v604 = vunpack.c.l.b16 %v217
        %v605 = vunpack.c.l.b16 %v218
        %v606 = vunpack.c.l.b16 %v219
        %v607 = vunpack.c.l.b16 %v220
        %v608 = vunpack.c.l.b16 %v221
        %v609 = vunpack.c.l.b16 %v222
        %v610 = vunpack.c.l.b16 %v223
        %v611 = vunpack.c.l.b16 %v224
        %v612 = vunpack.c.l.b16 %v225
        %v613 = vunpack.c.l.b16 %v226
        %v614 = vunpack.c.l.b16 %v227
        %v615 = vunpack.c.l.b16 %v228
        %v616 = vunpack.c.l.b16 %v229
        %v617 = vunpack.c.l.b16 %v230
        %v618 = vunpack.c.l.b16 %v231
        %v619 = vunpack.c.l.b16 %v232
        %v620 = vunpack.c.l.b16 %v233
        %v621 = vunpack.c.l.b16 %v234
        %v622 = vunpack.c.l.b16 %v235
        %v623 = vunpack.c.l.b16 %v236
        %v624 = vunpack.c.l.b16 %v237
        %v625 = vunpack.c.l.b16 %v238
        %v626 = vunpack.c.l.b16 %v239
        %v627 = vunpack.c.l.b16 %v240
        %v628 = vunpack.c.l.b16 %v241
        %v629 = vunpack.c.l.b16 %v242
        %v630 = vunpack.c.l.b16 %v243
        %v631 = vunpack.c.l.b16 %v244
        %v632 = vunpack.c.l.b16 %v245
        %v633 = vunpack.c.l.b16 %v246
        %v634 = vunpack.c.l.b16 %v247
        %v635 = vunpack.c.l.b16 %v248
        %v636 = vunpack.c.l.b16 %v249
        %v637 = vunpack.c.l.b16 %v250
        %v638 = vunpack.c.l.b16 %v251
        %v639 = vunpack.c.l.b16 %v252
        %v640 = vunpack.c.l.b16 %v253
        %v641 = vunpack.c.l.b16 %v254
        %v642 = vunpack.c.l.b16 %v255
        %v643 = vunpack.c.l.b16 %v256
        %v644 = vunpack.c.l.b16 %v257
        %v645 = vunpack.c.l.b16 %v258
        %v646 = vunpack.c.l.b16 %v259
        %v647 = vunpack.c.l.b16 %v260
        %v648 = vunpack.c.l.b16 %v261
        %v649 = vunpack.c.l.b16 %v262
        %v650 = vunpack.c.l.b16 %v263
        %v651 = vunpack.c.l.b16 %v264
        %v652 = vunpack.c.l.b16 %v265
        %v653 = vunpack.c.l.b16 %v266
        %v654 = vunpack.c.l.b16 %v267
        %v655 = vunpack.c.l.b16 %v268
        %v656 = vunpack.c.l.b16 %v269
        %v657 = vunpack.c.l.b16 %v270
        %v658 = vunpack.c.l.b16 %v271
        %v659 = vunpack.c.l.b16 %v272
        %v660 = vunpack.c.l.b16 %v273
        %v661 = vunpack.c.l.b16 %v274
        %v662 = vunpack.c.l.b16 %v275
        %v663 = vunpack.c.l.b16 %v276
        %v664 = vunpack.c.l.b16 %v277
        %v665 = vunpack.c.l.b16 %v278
        %v666 = vunpack.c.l.b16 %v279
        %v667 = vunpack.c.l.b16 %v280
        %v668 = vunpack.c.l.b16 %v281
        %v669 = vunpack.c.l.b16 %v282
        %v670 = vunpack.c.l.b16 %v283
        %v671 = vunpack.c.l.b16 %v284
        %v672 = vunpack.c.l.b16 %v285
        %v673 = vunpack.c.l.b16 %v286
        %v674 = vunpack.c.l.b16 %v287
        %v675 = vunpack.c.l.b16 %v288
        %v676 = vunpack.c.l.b16 %v289
        %v677 = vunpack.c.l.b16 %v290
        %v678 = vunpack.c.l.b16 %v291
        %v679 = vunpack.c.l.b16 %v292
        %v680 = vunpack.c.l.b16 %v293
        %v681 = vunpack.c.l.b16 %v294
        %v682 = vunpack.c.l.b16 %v295
        %v683 = vunpack.c.l.b16 %v296
        %v684 = vunpack.c.l.b16 %v297
        %v685 = vunpack.c.l.b16 %v298
        %v686 = vunpack.c.l.b16 %v299
        %v687 = vunpack.c.l.b16 %v300
        %v688 = vunpack.c.l.b16 %v301
        %v689 = vunpack.c.l.b16 %v302
        %v690 = vunpack.c.l.b16 %v303
        %v691 = vunpack.c.l.b16 %v304
        %v692 = vunpack.c.l.b16 %v305
        %v693 = vunpack.c.l.b16 %v306
        %v694 = vunpack.c.l.b16 %v307
        %v695 = vunpack.c.l.b16 %v308
        %v696 = vunpack.c.l.b16 %v309
        %v697 = vunpack.c.l.b16 %v310
        %v698 = vunpack.c.l.b16 %v311
        %v699 = vunpack.c.l.b16 %v312
        %v700 = vunpack.c.l.b16 %v313
        %v701 = vunpack.c.l.b16 %v314
        %v702 = vunpack.c.l.b16 %v315
        %v703 = vpack.c.b16 %v576, %v575
        %v704 = vpack.c.b16 %v578, %v577
        %v705 = vpack.c.b16 %v580, %v579
        %v706 = vpack.c.b16 %v582, %v581
        %v707 = vpack.c.b16 %v584, %v583
        %v708 = vpack.c.b16 %v586, %v585
        %v709 = vpack.c.b16 %v588, %v587
        %v710 = vpack.c.b16 %v590, %v589
        %v711 = vpack.c.b16 %v592, %v591
        %v712 = vpack.c.b16 %v594, %v593
        %v713 = vpack.c.b16 %v596, %v595
        %v714 = vpack.c.b16 %v598, %v597
        %v715 = vpack.c.b16 %v600, %v599
        %v716 = vpack.c.b16 %v602, %v601
        %v717 = vpack.c.b16 %v604, %v603
        %v718 = vpack.c.b16 %v606, %v605
        %v719 = vpack.c.b16 %v608, %v607
        %v720 = vpack.c.b16 %v610, %v609
        %v721 = vpack.c.b16 %v612, %v611
        %v722 = vpack.c.b16 %v614, %v613
        %v723 = vpack.c.b16 %v616, %v615
        %v724 = vpack.c.b16 %v618, %v617
        %v725 = vpack.c.b16 %v620, %v619
        %v726 = vpack.c.b16 %v622, %v621
        %v727 = vpack.c.b16 %v624, %v623
        %v728 = vpack.c.b16 %v626, %v625
        %v729 = vpack.c.b16 %v628, %v627
        %v730 = vpack.c.b16 %v630, %v629
        %v731 = vpack.c.b16 %v632, %v631
        %v732 = vpack.c.b16 %v634, %v633
        %v733 = vpack.c.b16 %v636, %v635
        %v734 = vpack.c.b16 %v638, %v637
        %v735 = vpack.c.b16 %v640, %v639
        %v736 = vpack.c.b16 %v642, %v641
        %v737 = vpack.c.b16 %v644, %v643
        %v738 = vpack.c.b16 %v646, %v645
        %v739 = vpack.c.b16 %v648, %v647
        %v740 = vpack.c.b16 %v650, %v649
        %v741 = vpack.c.b16 %v652, %v651
        %v742 = vpack.c.b16 %v654, %v653
        %v743 = vpack.c.b16 %v656, %v655
        %v744 = vpack.c.b16 %v658, %v657
        %v745 = vpack.c.b16 %v660, %v659
        %v746 = vpack.c.b16 %v662, %v661
        %v747 = vpack.c.b16 %v664, %v663
        %v748 = vpack.c.b16 %v666, %v665
        %v749 = vpack.c.b16 %v668, %v667
        %v750 = vpack.c.b16 %v670, %v669
        %v751 = vpack.c.b16 %v672, %v671
        %v752 = vpack.c.b16 %v674, %v673
        %v753 = vpack.c.b16 %v676, %v675
        %v754 = vpack.c.b16 %v678, %v677
        %v755 = vpack.c.b16 %v680, %v679
        %v756 = vpack.c.b16 %v682, %v681
        %v757 = vpack.c.b16 %v684, %v683
        %v758 = vpack.c.b16 %v686, %v685
        %v759 = vpack.c.b16 %v688, %v687
        %v760 = vpack.c.b16 %v690, %v689
        %v761 = vpack.c.b16 %v692, %v691
        %v762 = vpack.c.b16 %v694, %v693
        %v763 = vpack.c.b16 %v696, %v695
        %v764 = vpack.c.b16 %v698, %v697
        %v765 = vpack.c.b16 %v700, %v699
        %v766 = vpack.c.b16 %v702, %v701
        %v767 = vpack.c.b16 %v577, %v577
        %v768 = vpack.c.b16 %v581, %v581
        %v769 = vpack.c.b16 %v585, %v585
        %v770 = vpack.c.b16 %v589, %v589
        %v771 = vpack.c.b16 %v593, %v593
        %v772 = vpack.c.b16 %v597, %v597
        %v773 = vpack.c.b16 %v601, %v601
        %v774 = vpack.c.b16 %v605, %v605
        %v775 = vpack.c.b16 %v609, %v609
        %v776 = vpack.c.b16 %v613, %v613
        %v777 = vpack.c.b16 %v617, %v617
        %v778 = vpack.c.b16 %v621, %v621
        %v779 = vpack.c.b16 %v625, %v625
        %v780 = vpack.c.b16 %v629, %v629
        %v781 = vpack.c.b16 %v633, %v633
        %v782 = vpack.c.b16 %v637, %v637
        %v783 = vpack.c.b16 %v641, %v641
        %v784 = vpack.c.b16 %v645, %v645
        %v785 = vpack.c.b16 %v649, %v649
        %v786 = vpack.c.b16 %v653, %v653
        %v787 = vpack.c.b16 %v657, %v657
        %v788 = vpack.c.b16 %v661, %v661
        %v789 = vpack.c.b16 %v665, %v665
        %v790 = vpack.c.b16 %v669, %v669
        %v791 = vpack.c.b16 %v673, %v673
        %v792 = vpack.c.b16 %v677, %v677
        %v793 = vpack.c.b16 %v681, %v681
        %v794 = vpack.c.b16 %v685, %v685
        %v795 = vpack.c.b16 %v689, %v689
        %v796 = vpack.c.b16 %v693, %v693
        %v797 = vpack.c.b16 %v697, %v697
        %v798 = vpack.c.b16 %v701, %v701
        %vm799 = vsmask.f32 256
        %v801 = vshrl.u32 %v703, 16
        %v803 = vrot.slane %v801, 7
        %v804 = vshll.u32 %v703, 16
        %v806 = vor.u32 %v803, %v804
        %v808 = vshrl.u32 %v767, 16
        %v810 = vrot.slane %v808, 7
        %v811 = vshll.u32 %v767, 16
        %v813 = vor.u32 %v810, %v811
        %v814 = vsel %vm799, %v803, %v813
        %v816 = vshrl.u32 %v705, 16
        %v818 = vrot.slane %v816, 7
        %v819 = vshll.u32 %v705, 16
        %v821 = vor.u32 %v818, %v819
        %v823 = vshrl.u32 %v768, 16
        %v825 = vrot.slane %v823, 7
        %v826 = vshll.u32 %v768, 16
        %v828 = vor.u32 %v825, %v826
        %v829 = vsel %vm799, %v818, %v828
        %v831 = vshrl.u32 %v707, 16
        %v833 = vrot.slane %v831, 7
        %v834 = vshll.u32 %v707, 16
        %v836 = vor.u32 %v833, %v834
        %v838 = vshrl.u32 %v769, 16
        %v840 = vrot.slane %v838, 7
        %v841 = vshll.u32 %v769, 16
        %v843 = vor.u32 %v840, %v841
        %v844 = vsel %vm799, %v833, %v843
        %v846 = vshrl.u32 %v709, 16
        %v848 = vrot.slane %v846, 7
        %v849 = vshll.u32 %v709, 16
        %v851 = vor.u32 %v848, %v849
        %v853 = vshrl.u32 %v770, 16
        %v855 = vrot.slane %v853, 7
        %v856 = vshll.u32 %v770, 16
        %v858 = vor.u32 %v855, %v856
        %v859 = vsel %vm799, %v848, %v858
        %v861 = vshrl.u32 %v711, 16
        %v863 = vrot.slane %v861, 7
        %v864 = vshll.u32 %v711, 16
        %v866 = vor.u32 %v863, %v864
        %v868 = vshrl.u32 %v771, 16
        %v870 = vrot.slane %v868, 7
        %v871 = vshll.u32 %v771, 16
        %v873 = vor.u32 %v870, %v871
        %v874 = vsel %vm799, %v863, %v873
        %v876 = vshrl.u32 %v713, 16
        %v878 = vrot.slane %v876, 7
        %v879 = vshll.u32 %v713, 16
        %v881 = vor.u32 %v878, %v879
        %v883 = vshrl.u32 %v772, 16
        %v885 = vrot.slane %v883, 7
        %v886 = vshll.u32 %v772, 16
        %v888 = vor.u32 %v885, %v886
        %v889 = vsel %vm799, %v878, %v888
        %v891 = vshrl.u32 %v715, 16
        %v893 = vrot.slane %v891, 7
        %v894 = vshll.u32 %v715, 16
        %v896 = vor.u32 %v893, %v894
        %v898 = vshrl.u32 %v773, 16
        %v900 = vrot.slane %v898, 7
        %v901 = vshll.u32 %v773, 16
        %v903 = vor.u32 %v900, %v901
        %v904 = vsel %vm799, %v893, %v903
        %v906 = vshrl.u32 %v717, 16
        %v908 = vrot.slane %v906, 7
        %v909 = vshll.u32 %v717, 16
        %v911 = vor.u32 %v908, %v909
        %v913 = vshrl.u32 %v774, 16
        %v915 = vrot.slane %v913, 7
        %v916 = vshll.u32 %v774, 16
        %v918 = vor.u32 %v915, %v916
        %v919 = vsel %vm799, %v908, %v918
        %v921 = vshrl.u32 %v719, 16
        %v923 = vrot.slane %v921, 7
        %v924 = vshll.u32 %v719, 16
        %v926 = vor.u32 %v923, %v924
        %v928 = vshrl.u32 %v775, 16
        %v930 = vrot.slane %v928, 7
        %v931 = vshll.u32 %v775, 16
        %v933 = vor.u32 %v930, %v931
        %v934 = vsel %vm799, %v923, %v933
        %v936 = vshrl.u32 %v721, 16
        %v938 = vrot.slane %v936, 7
        %v939 = vshll.u32 %v721, 16
        %v941 = vor.u32 %v938, %v939
        %v943 = vshrl.u32 %v776, 16
        %v945 = vrot.slane %v943, 7
        %v946 = vshll.u32 %v776, 16
        %v948 = vor.u32 %v945, %v946
        %v949 = vsel %vm799, %v938, %v948
        %v951 = vshrl.u32 %v723, 16
        %v953 = vrot.slane %v951, 7
        %v954 = vshll.u32 %v723, 16
        %v956 = vor.u32 %v953, %v954
        %v958 = vshrl.u32 %v777, 16
        %v960 = vrot.slane %v958, 7
        %v961 = vshll.u32 %v777, 16
        %v963 = vor.u32 %v960, %v961
        %v964 = vsel %vm799, %v953, %v963
        %v966 = vshrl.u32 %v725, 16
        %v968 = vrot.slane %v966, 7
        %v969 = vshll.u32 %v725, 16
        %v971 = vor.u32 %v968, %v969
        %v973 = vshrl.u32 %v778, 16
        %v975 = vrot.slane %v973, 7
        %v976 = vshll.u32 %v778, 16
        %v978 = vor.u32 %v975, %v976
        %v979 = vsel %vm799, %v968, %v978
        %v981 = vshrl.u32 %v727, 16
        %v983 = vrot.slane %v981, 7
        %v984 = vshll.u32 %v727, 16
        %v986 = vor.u32 %v983, %v984
        %v988 = vshrl.u32 %v779, 16
        %v990 = vrot.slane %v988, 7
        %v991 = vshll.u32 %v779, 16
        %v993 = vor.u32 %v990, %v991
        %v994 = vsel %vm799, %v983, %v993
        %v996 = vshrl.u32 %v729, 16
        %v998 = vrot.slane %v996, 7
        %v999 = vshll.u32 %v729, 16
        %v1001 = vor.u32 %v998, %v999
        %v1003 = vshrl.u32 %v780, 16
        %v1005 = vrot.slane %v1003, 7
        %v1006 = vshll.u32 %v780, 16
        %v1008 = vor.u32 %v1005, %v1006
        %v1009 = vsel %vm799, %v998, %v1008
        %v1011 = vshrl.u32 %v731, 16
        %v1013 = vrot.slane %v1011, 7
        %v1014 = vshll.u32 %v731, 16
        %v1016 = vor.u32 %v1013, %v1014
        %v1018 = vshrl.u32 %v781, 16
        %v1020 = vrot.slane %v1018, 7
        %v1021 = vshll.u32 %v781, 16
        %v1023 = vor.u32 %v1020, %v1021
        %v1024 = vsel %vm799, %v1013, %v1023
        %v1026 = vshrl.u32 %v733, 16
        %v1028 = vrot.slane %v1026, 7
        %v1029 = vshll.u32 %v733, 16
        %v1031 = vor.u32 %v1028, %v1029
        %v1033 = vshrl.u32 %v782, 16
        %v1035 = vrot.slane %v1033, 7
        %v1036 = vshll.u32 %v782, 16
        %v1038 = vor.u32 %v1035, %v1036
        %v1039 = vsel %vm799, %v1028, %v1038
        %v1041 = vshrl.u32 %v735, 16
        %v1043 = vrot.slane %v1041, 7
        %v1044 = vshll.u32 %v735, 16
        %v1046 = vor.u32 %v1043, %v1044
        %v1048 = vshrl.u32 %v783, 16
        %v1050 = vrot.slane %v1048, 7
        %v1051 = vshll.u32 %v783, 16
        %v1053 = vor.u32 %v1050, %v1051
        %v1054 = vsel %vm799, %v1043, %v1053
        %v1056 = vshrl.u32 %v737, 16
        %v1058 = vrot.slane %v1056, 7
        %v1059 = vshll.u32 %v737, 16
        %v1061 = vor.u32 %v1058, %v1059
        %v1063 = vshrl.u32 %v784, 16
        %v1065 = vrot.slane %v1063, 7
        %v1066 = vshll.u32 %v784, 16
        %v1068 = vor.u32 %v1065, %v1066
        %v1069 = vsel %vm799, %v1058, %v1068
        %v1071 = vshrl.u32 %v739, 16
        %v1073 = vrot.slane %v1071, 7
        %v1074 = vshll.u32 %v739, 16
        %v1076 = vor.u32 %v1073, %v1074
        %v1078 = vshrl.u32 %v785, 16
        %v1080 = vrot.slane %v1078, 7
        %v1081 = vshll.u32 %v785, 16
        %v1083 = vor.u32 %v1080, %v1081
        %v1084 = vsel %vm799, %v1073, %v1083
        %v1086 = vshrl.u32 %v741, 16
        %v1088 = vrot.slane %v1086, 7
        %v1089 = vshll.u32 %v741, 16
        %v1091 = vor.u32 %v1088, %v1089
        %v1093 = vshrl.u32 %v786, 16
        %v1095 = vrot.slane %v1093, 7
        %v1096 = vshll.u32 %v786, 16
        %v1098 = vor.u32 %v1095, %v1096
        %v1099 = vsel %vm799, %v1088, %v1098
        %v1101 = vshrl.u32 %v743, 16
        %v1103 = vrot.slane %v1101, 7
        %v1104 = vshll.u32 %v743, 16
        %v1106 = vor.u32 %v1103, %v1104
        %v1108 = vshrl.u32 %v787, 16
        %v1110 = vrot.slane %v1108, 7
        %v1111 = vshll.u32 %v787, 16
        %v1113 = vor.u32 %v1110, %v1111
        %v1114 = vsel %vm799, %v1103, %v1113
        %v1116 = vshrl.u32 %v745, 16
        %v1118 = vrot.slane %v1116, 7
        %v1119 = vshll.u32 %v745, 16
        %v1121 = vor.u32 %v1118, %v1119
        %v1123 = vshrl.u32 %v788, 16
        %v1125 = vrot.slane %v1123, 7
        %v1126 = vshll.u32 %v788, 16
        %v1128 = vor.u32 %v1125, %v1126
        %v1129 = vsel %vm799, %v1118, %v1128
        %v1131 = vshrl.u32 %v747, 16
        %v1133 = vrot.slane %v1131, 7
        %v1134 = vshll.u32 %v747, 16
        %v1136 = vor.u32 %v1133, %v1134
        %v1138 = vshrl.u32 %v789, 16
        %v1140 = vrot.slane %v1138, 7
        %v1141 = vshll.u32 %v789, 16
        %v1143 = vor.u32 %v1140, %v1141
        %v1144 = vsel %vm799, %v1133, %v1143
        %v1146 = vshrl.u32 %v749, 16
        %v1148 = vrot.slane %v1146, 7
        %v1149 = vshll.u32 %v749, 16
        %v1151 = vor.u32 %v1148, %v1149
        %v1153 = vshrl.u32 %v790, 16
        %v1155 = vrot.slane %v1153, 7
        %v1156 = vshll.u32 %v790, 16
        %v1158 = vor.u32 %v1155, %v1156
        %v1159 = vsel %vm799, %v1148, %v1158
        %v1161 = vshrl.u32 %v751, 16
        %v1163 = vrot.slane %v1161, 7
        %v1164 = vshll.u32 %v751, 16
        %v1166 = vor.u32 %v1163, %v1164
        %v1168 = vshrl.u32 %v791, 16
        %v1170 = vrot.slane %v1168, 7
        %v1171 = vshll.u32 %v791, 16
        %v1173 = vor.u32 %v1170, %v1171
        %v1174 = vsel %vm799, %v1163, %v1173
        %v1176 = vshrl.u32 %v753, 16
        %v1178 = vrot.slane %v1176, 7
        %v1179 = vshll.u32 %v753, 16
        %v1181 = vor.u32 %v1178, %v1179
        %v1183 = vshrl.u32 %v792, 16
        %v1185 = vrot.slane %v1183, 7
        %v1186 = vshll.u32 %v792, 16
        %v1188 = vor.u32 %v1185, %v1186
        %v1189 = vsel %vm799, %v1178, %v1188
        %v1191 = vshrl.u32 %v755, 16
        %v1193 = vrot.slane %v1191, 7
        %v1194 = vshll.u32 %v755, 16
        %v1196 = vor.u32 %v1193, %v1194
        %v1198 = vshrl.u32 %v793, 16
        %v1200 = vrot.slane %v1198, 7
        %v1201 = vshll.u32 %v793, 16
        %v1203 = vor.u32 %v1200, %v1201
        %v1204 = vsel %vm799, %v1193, %v1203
        %v1206 = vshrl.u32 %v757, 16
        %v1208 = vrot.slane %v1206, 7
        %v1209 = vshll.u32 %v757, 16
        %v1211 = vor.u32 %v1208, %v1209
        %v1213 = vshrl.u32 %v794, 16
        %v1215 = vrot.slane %v1213, 7
        %v1216 = vshll.u32 %v794, 16
        %v1218 = vor.u32 %v1215, %v1216
        %v1219 = vsel %vm799, %v1208, %v1218
        %v1221 = vshrl.u32 %v759, 16
        %v1223 = vrot.slane %v1221, 7
        %v1224 = vshll.u32 %v759, 16
        %v1226 = vor.u32 %v1223, %v1224
        %v1228 = vshrl.u32 %v795, 16
        %v1230 = vrot.slane %v1228, 7
        %v1231 = vshll.u32 %v795, 16
        %v1233 = vor.u32 %v1230, %v1231
        %v1234 = vsel %vm799, %v1223, %v1233
        %v1236 = vshrl.u32 %v761, 16
        %v1238 = vrot.slane %v1236, 7
        %v1239 = vshll.u32 %v761, 16
        %v1241 = vor.u32 %v1238, %v1239
        %v1243 = vshrl.u32 %v796, 16
        %v1245 = vrot.slane %v1243, 7
        %v1246 = vshll.u32 %v796, 16
        %v1248 = vor.u32 %v1245, %v1246
        %v1249 = vsel %vm799, %v1238, %v1248
        %v1251 = vshrl.u32 %v763, 16
        %v1253 = vrot.slane %v1251, 7
        %v1254 = vshll.u32 %v763, 16
        %v1256 = vor.u32 %v1253, %v1254
        %v1258 = vshrl.u32 %v797, 16
        %v1260 = vrot.slane %v1258, 7
        %v1261 = vshll.u32 %v797, 16
        %v1263 = vor.u32 %v1260, %v1261
        %v1264 = vsel %vm799, %v1253, %v1263
        %v1266 = vshrl.u32 %v765, 16
        %v1268 = vrot.slane %v1266, 7
        %v1269 = vshll.u32 %v765, 16
        %v1271 = vor.u32 %v1268, %v1269
        %v1273 = vshrl.u32 %v798, 16
        %v1275 = vrot.slane %v1273, 7
        %v1276 = vshll.u32 %v798, 16
        %v1278 = vor.u32 %v1275, %v1276
        %v1279 = vsel %vm799, %v1268, %v1278
        %1280 = vrot.lane.b32.xlu0 %v806, 4
        %v1281 = vpop.permute.xlu0 %1280
        %1282 = vrot.lane.b32.xlu0 %v814, 4
        %v1283 = vpop.permute.xlu0 %1282
        %1284 = vrot.lane.b32.xlu0 %v821, 4
        %v1285 = vpop.permute.xlu0 %1284
        %1286 = vrot.lane.b32.xlu0 %v829, 4
        %v1287 = vpop.permute.xlu0 %1286
        %1288 = vrot.lane.b32.xlu0 %v836, 4
        %v1289 = vpop.permute.xlu0 %1288
        %1290 = vrot.lane.b32.xlu0 %v844, 4
        %v1291 = vpop.permute.xlu0 %1290
        %1292 = vrot.lane.b32.xlu0 %v851, 4
        %v1293 = vpop.permute.xlu0 %1292
        %1294 = vrot.lane.b32.xlu0 %v859, 4
        %v1295 = vpop.permute.xlu0 %1294
        %1296 = vrot.lane.b32.xlu0 %v866, 4
        %v1297 = vpop.permute.xlu0 %1296
        %1298 = vrot.lane.b32.xlu0 %v874, 4
        %v1299 = vpop.permute.xlu0 %1298
        %1300 = vrot.lane.b32.xlu0 %v881, 4
        %v1301 = vpop.permute.xlu0 %1300
        %1302 = vrot.lane.b32.xlu0 %v889, 4
        %v1303 = vpop.permute.xlu0 %1302
        %1304 = vrot.lane.b32.xlu0 %v896, 4
        %v1305 = vpop.permute.xlu0 %1304
        %1306 = vrot.lane.b32.xlu0 %v904, 4
        %v1307 = vpop.permute.xlu0 %1306
        %1308 = vrot.lane.b32.xlu0 %v911, 4
        %v1309 = vpop.permute.xlu0 %1308
        %1310 = vrot.lane.b32.xlu0 %v919, 4
        %v1311 = vpop.permute.xlu0 %1310
        %1312 = vrot.lane.b32.xlu0 %v926, 4
        %v1313 = vpop.permute.xlu0 %1312
        %1314 = vrot.lane.b32.xlu0 %v934, 4
        %v1315 = vpop.permute.xlu0 %1314
        %1316 = vrot.lane.b32.xlu0 %v941, 4
        %v1317 = vpop.permute.xlu0 %1316
        %1318 = vrot.lane.b32.xlu0 %v949, 4
        %v1319 = vpop.permute.xlu0 %1318
        %1320 = vrot.lane.b32.xlu0 %v956, 4
        %v1321 = vpop.permute.xlu0 %1320
        %1322 = vrot.lane.b32.xlu0 %v964, 4
        %v1323 = vpop.permute.xlu0 %1322
        %1324 = vrot.lane.b32.xlu0 %v971, 4
        %v1325 = vpop.permute.xlu0 %1324
        %1326 = vrot.lane.b32.xlu0 %v979, 4
        %v1327 = vpop.permute.xlu0 %1326
        %1328 = vrot.lane.b32.xlu0 %v986, 4
        %v1329 = vpop.permute.xlu0 %1328
        %1330 = vrot.lane.b32.xlu0 %v994, 4
        %v1331 = vpop.permute.xlu0 %1330
        %1332 = vrot.lane.b32.xlu0 %v1001, 4
        %v1333 = vpop.permute.xlu0 %1332
        %1334 = vrot.lane.b32.xlu0 %v1009, 4
        %v1335 = vpop.permute.xlu0 %1334
        %1336 = vrot.lane.b32.xlu0 %v1016, 4
        %v1337 = vpop.permute.xlu0 %1336
        %1338 = vrot.lane.b32.xlu0 %v1024, 4
        %v1339 = vpop.permute.xlu0 %1338
        %1340 = vrot.lane.b32.xlu0 %v1031, 4
        %v1341 = vpop.permute.xlu0 %1340
        %1342 = vrot.lane.b32.xlu0 %v1039, 4
        %v1343 = vpop.permute.xlu0 %1342
        %1344 = vrot.lane.b32.xlu0 %v1046, 4
        %v1345 = vpop.permute.xlu0 %1344
        %1346 = vrot.lane.b32.xlu0 %v1054, 4
        %v1347 = vpop.permute.xlu0 %1346
        %1348 = vrot.lane.b32.xlu0 %v1061, 4
        %v1349 = vpop.permute.xlu0 %1348
        %1350 = vrot.lane.b32.xlu0 %v1069, 4
        %v1351 = vpop.permute.xlu0 %1350
        %1352 = vrot.lane.b32.xlu0 %v1076, 4
        %v1353 = vpop.permute.xlu0 %1352
        %1354 = vrot.lane.b32.xlu0 %v1084, 4
        %v1355 = vpop.permute.xlu0 %1354
        %1356 = vrot.lane.b32.xlu0 %v1091, 4
        %v1357 = vpop.permute.xlu0 %1356
        %1358 = vrot.lane.b32.xlu0 %v1099, 4
        %v1359 = vpop.permute.xlu0 %1358
        %1360 = vrot.lane.b32.xlu0 %v1106, 4
        %v1361 = vpop.permute.xlu0 %1360
        %1362 = vrot.lane.b32.xlu0 %v1114, 4
        %v1363 = vpop.permute.xlu0 %1362
        %1364 = vrot.lane.b32.xlu0 %v1121, 4
        %v1365 = vpop.permute.xlu0 %1364
        %1366 = vrot.lane.b32.xlu0 %v1129, 4
        %v1367 = vpop.permute.xlu0 %1366
        %1368 = vrot.lane.b32.xlu0 %v1136, 4
        %v1369 = vpop.permute.xlu0 %1368
        %1370 = vrot.lane.b32.xlu0 %v1144, 4
        %v1371 = vpop.permute.xlu0 %1370
        %1372 = vrot.lane.b32.xlu0 %v1151, 4
        %v1373 = vpop.permute.xlu0 %1372
        %1374 = vrot.lane.b32.xlu0 %v1159, 4
        %v1375 = vpop.permute.xlu0 %1374
        %1376 = vrot.lane.b32.xlu0 %v1166, 4
        %v1377 = vpop.permute.xlu0 %1376
        %1378 = vrot.lane.b32.xlu0 %v1174, 4
        %v1379 = vpop.permute.xlu0 %1378
        %1380 = vrot.lane.b32.xlu0 %v1181, 4
        %v1381 = vpop.permute.xlu0 %1380
        %1382 = vrot.lane.b32.xlu0 %v1189, 4
        %v1383 = vpop.permute.xlu0 %1382
        %1384 = vrot.lane.b32.xlu0 %v1196, 4
        %v1385 = vpop.permute.xlu0 %1384
        %1386 = vrot.lane.b32.xlu0 %v1204, 4
        %v1387 = vpop.permute.xlu0 %1386
        %1388 = vrot.lane.b32.xlu0 %v1211, 4
        %v1389 = vpop.permute.xlu0 %1388
        %1390 = vrot.lane.b32.xlu0 %v1219, 4
        %v1391 = vpop.permute.xlu0 %1390
        %1392 = vrot.lane.b32.xlu0 %v1226, 4
        %v1393 = vpop.permute.xlu0 %1392
        %1394 = vrot.lane.b32.xlu0 %v1234, 4
        %v1395 = vpop.permute.xlu0 %1394
        %1396 = vrot.lane.b32.xlu0 %v1241, 4
        %v1397 = vpop.permute.xlu0 %1396
        %1398 = vrot.lane.b32.xlu0 %v1249, 4
        %v1399 = vpop.permute.xlu0 %1398
        %1400 = vrot.lane.b32.xlu0 %v1256, 4
        %v1401 = vpop.permute.xlu0 %1400
        %1402 = vrot.lane.b32.xlu0 %v1264, 4
        %v1403 = vpop.permute.xlu0 %1402
        %1404 = vrot.lane.b32.xlu0 %v1271, 4
        %v1405 = vpop.permute.xlu0 %1404
        %1406 = vrot.lane.b32.xlu0 %v1279, 4
        %v1407 = vpop.permute.xlu0 %1406
        %v1536 = vunpack.c.l.b16 %v319
        %v1537 = vunpack.c.l.b16 %v320
        %v1538 = vunpack.c.l.b16 %v321
        %v1539 = vunpack.c.l.b16 %v322
        %v1540 = vunpack.c.l.b16 %v323
        %v1541 = vunpack.c.l.b16 %v324
        %v1542 = vunpack.c.l.b16 %v325
        %v1543 = vunpack.c.l.b16 %v326
        %v1544 = vunpack.c.l.b16 %v327
        %v1545 = vunpack.c.l.b16 %v328
        %v1546 = vunpack.c.l.b16 %v329
        %v1547 = vunpack.c.l.b16 %v330
        %v1548 = vunpack.c.l.b16 %v331
        %v1549 = vunpack.c.l.b16 %v332
        %v1550 = vunpack.c.l.b16 %v333
        %v1551 = vunpack.c.l.b16 %v334
        %v1552 = vunpack.c.l.b16 %v335
        %v1553 = vunpack.c.l.b16 %v336
        %v1554 = vunpack.c.l.b16 %v337
        %v1555 = vunpack.c.l.b16 %v338
        %v1556 = vunpack.c.l.b16 %v339
        %v1557 = vunpack.c.l.b16 %v340
        %v1558 = vunpack.c.l.b16 %v341
        %v1559 = vunpack.c.l.b16 %v342
        %v1560 = vunpack.c.l.b16 %v343
        %v1561 = vunpack.c.l.b16 %v344
        %v1562 = vunpack.c.l.b16 %v345
        %v1563 = vunpack.c.l.b16 %v346
        %v1564 = vunpack.c.l.b16 %v347
        %v1565 = vunpack.c.l.b16 %v348
        %v1566 = vunpack.c.l.b16 %v349
        %v1567 = vunpack.c.l.b16 %v350
        %v1568 = vunpack.c.l.b16 %v351
        %v1569 = vunpack.c.l.b16 %v352
        %v1570 = vunpack.c.l.b16 %v353
        %v1571 = vunpack.c.l.b16 %v354
        %v1572 = vunpack.c.l.b16 %v355
        %v1573 = vunpack.c.l.b16 %v356
        %v1574 = vunpack.c.l.b16 %v357
        %v1575 = vunpack.c.l.b16 %v358
        %v1576 = vunpack.c.l.b16 %v359
        %v1577 = vunpack.c.l.b16 %v360
        %v1578 = vunpack.c.l.b16 %v361
        %v1579 = vunpack.c.l.b16 %v362
        %v1580 = vunpack.c.l.b16 %v363
        %v1581 = vunpack.c.l.b16 %v364
        %v1582 = vunpack.c.l.b16 %v365
        %v1583 = vunpack.c.l.b16 %v366
        %v1584 = vunpack.c.l.b16 %v367
        %v1585 = vunpack.c.l.b16 %v368
        %v1586 = vunpack.c.l.b16 %v369
        %v1587 = vunpack.c.l.b16 %v370
        %v1588 = vunpack.c.l.b16 %v371
        %v1589 = vunpack.c.l.b16 %v372
        %v1590 = vunpack.c.l.b16 %v373
        %v1591 = vunpack.c.l.b16 %v374
        %v1592 = vunpack.c.l.b16 %v375
        %v1593 = vunpack.c.l.b16 %v376
        %v1594 = vunpack.c.l.b16 %v377
        %v1595 = vunpack.c.l.b16 %v378
        %v1596 = vunpack.c.l.b16 %v379
        %v1597 = vunpack.c.l.b16 %v380
        %v1598 = vunpack.c.l.b16 %v381
        %v1599 = vunpack.c.l.b16 %v382
        %v1600 = vunpack.c.l.b16 %v383
        %v1601 = vunpack.c.l.b16 %v384
        %v1602 = vunpack.c.l.b16 %v385
        %v1603 = vunpack.c.l.b16 %v386
        %v1604 = vunpack.c.l.b16 %v387
        %v1605 = vunpack.c.l.b16 %v388
        %v1606 = vunpack.c.l.b16 %v389
        %v1607 = vunpack.c.l.b16 %v390
        %v1608 = vunpack.c.l.b16 %v391
        %v1609 = vunpack.c.l.b16 %v392
        %v1610 = vunpack.c.l.b16 %v393
        %v1611 = vunpack.c.l.b16 %v394
        %v1612 = vunpack.c.l.b16 %v395
        %v1613 = vunpack.c.l.b16 %v396
        %v1614 = vunpack.c.l.b16 %v397
        %v1615 = vunpack.c.l.b16 %v398
        %v1616 = vunpack.c.l.b16 %v399
        %v1617 = vunpack.c.l.b16 %v400
        %v1618 = vunpack.c.l.b16 %v401
        %v1619 = vunpack.c.l.b16 %v402
        %v1620 = vunpack.c.l.b16 %v403
        %v1621 = vunpack.c.l.b16 %v404
        %v1622 = vunpack.c.l.b16 %v405
        %v1623 = vunpack.c.l.b16 %v406
        %v1624 = vunpack.c.l.b16 %v407
        %v1625 = vunpack.c.l.b16 %v408
        %v1626 = vunpack.c.l.b16 %v409
        %v1627 = vunpack.c.l.b16 %v410
        %v1628 = vunpack.c.l.b16 %v411
        %v1629 = vunpack.c.l.b16 %v412
        %v1630 = vunpack.c.l.b16 %v413
        %v1631 = vunpack.c.l.b16 %v414
        %v1632 = vunpack.c.l.b16 %v415
        %v1633 = vunpack.c.l.b16 %v416
        %v1634 = vunpack.c.l.b16 %v417
        %v1635 = vunpack.c.l.b16 %v418
        %v1636 = vunpack.c.l.b16 %v419
        %v1637 = vunpack.c.l.b16 %v420
        %v1638 = vunpack.c.l.b16 %v421
        %v1639 = vunpack.c.l.b16 %v422
        %v1640 = vunpack.c.l.b16 %v423
        %v1641 = vunpack.c.l.b16 %v424
        %v1642 = vunpack.c.l.b16 %v425
        %v1643 = vunpack.c.l.b16 %v426
        %v1644 = vunpack.c.l.b16 %v427
        %v1645 = vunpack.c.l.b16 %v428
        %v1646 = vunpack.c.l.b16 %v429
        %v1647 = vunpack.c.l.b16 %v430
        %v1648 = vunpack.c.l.b16 %v431
        %v1649 = vunpack.c.l.b16 %v432
        %v1650 = vunpack.c.l.b16 %v433
        %v1651 = vunpack.c.l.b16 %v434
        %v1652 = vunpack.c.l.b16 %v435
        %v1653 = vunpack.c.l.b16 %v436
        %v1654 = vunpack.c.l.b16 %v437
        %v1655 = vunpack.c.l.b16 %v438
        %v1656 = vunpack.c.l.b16 %v439
        %v1657 = vunpack.c.l.b16 %v440
        %v1658 = vunpack.c.l.b16 %v441
        %v1659 = vunpack.c.l.b16 %v442
        %v1660 = vunpack.c.l.b16 %v443
        %v1661 = vunpack.c.l.b16 %v444
        %v1662 = vunpack.c.l.b16 %v445
        %v1663 = vunpack.c.l.b16 %v446
        %v1664 = vpack.c.b16 %v1537, %v1536
        %v1665 = vpack.c.b16 %v1539, %v1538
        %v1666 = vpack.c.b16 %v1541, %v1540
        %v1667 = vpack.c.b16 %v1543, %v1542
        %v1668 = vpack.c.b16 %v1545, %v1544
        %v1669 = vpack.c.b16 %v1547, %v1546
        %v1670 = vpack.c.b16 %v1549, %v1548
        %v1671 = vpack.c.b16 %v1551, %v1550
        %v1672 = vpack.c.b16 %v1553, %v1552
        %v1673 = vpack.c.b16 %v1555, %v1554
        %v1674 = vpack.c.b16 %v1557, %v1556
        %v1675 = vpack.c.b16 %v1559, %v1558
        %v1676 = vpack.c.b16 %v1561, %v1560
        %v1677 = vpack.c.b16 %v1563, %v1562
        %v1678 = vpack.c.b16 %v1565, %v1564
        %v1679 = vpack.c.b16 %v1567, %v1566
        %v1680 = vpack.c.b16 %v1569, %v1568
        %v1681 = vpack.c.b16 %v1571, %v1570
        %v1682 = vpack.c.b16 %v1573, %v1572
        %v1683 = vpack.c.b16 %v1575, %v1574
        %v1684 = vpack.c.b16 %v1577, %v1576
        %v1685 = vpack.c.b16 %v1579, %v1578
        %v1686 = vpack.c.b16 %v1581, %v1580
        %v1687 = vpack.c.b16 %v1583, %v1582
        %v1688 = vpack.c.b16 %v1585, %v1584
        %v1689 = vpack.c.b16 %v1587, %v1586
        %v1690 = vpack.c.b16 %v1589, %v1588
        %v1691 = vpack.c.b16 %v1591, %v1590
        %v1692 = vpack.c.b16 %v1593, %v1592
        %v1693 = vpack.c.b16 %v1595, %v1594
        %v1694 = vpack.c.b16 %v1597, %v1596
        %v1695 = vpack.c.b16 %v1599, %v1598
        %v1696 = vpack.c.b16 %v1601, %v1600
        %v1697 = vpack.c.b16 %v1603, %v1602
        %v1698 = vpack.c.b16 %v1605, %v1604
        %v1699 = vpack.c.b16 %v1607, %v1606
        %v1700 = vpack.c.b16 %v1609, %v1608
        %v1701 = vpack.c.b16 %v1611, %v1610
        %v1702 = vpack.c.b16 %v1613, %v1612
        %v1703 = vpack.c.b16 %v1615, %v1614
        %v1704 = vpack.c.b16 %v1617, %v1616
        %v1705 = vpack.c.b16 %v1619, %v1618
        %v1706 = vpack.c.b16 %v1621, %v1620
        %v1707 = vpack.c.b16 %v1623, %v1622
        %v1708 = vpack.c.b16 %v1625, %v1624
        %v1709 = vpack.c.b16 %v1627, %v1626
        %v1710 = vpack.c.b16 %v1629, %v1628
        %v1711 = vpack.c.b16 %v1631, %v1630
        %v1712 = vpack.c.b16 %v1633, %v1632
        %v1713 = vpack.c.b16 %v1635, %v1634
        %v1714 = vpack.c.b16 %v1637, %v1636
        %v1715 = vpack.c.b16 %v1639, %v1638
        %v1716 = vpack.c.b16 %v1641, %v1640
        %v1717 = vpack.c.b16 %v1643, %v1642
        %v1718 = vpack.c.b16 %v1645, %v1644
        %v1719 = vpack.c.b16 %v1647, %v1646
        %v1720 = vpack.c.b16 %v1649, %v1648
        %v1721 = vpack.c.b16 %v1651, %v1650
        %v1722 = vpack.c.b16 %v1653, %v1652
        %v1723 = vpack.c.b16 %v1655, %v1654
        %v1724 = vpack.c.b16 %v1657, %v1656
        %v1725 = vpack.c.b16 %v1659, %v1658
        %v1726 = vpack.c.b16 %v1661, %v1660
        %v1727 = vpack.c.b16 %v1663, %v1662
        %1728 = vrot.lane.b32.xlu0 %v1664, 8
        %v1729 = vpop.permute.xlu0 %1728
        %1730 = vrot.lane.b32.xlu0 %v1665, 8
        %v1731 = vpop.permute.xlu0 %1730
        %1732 = vrot.lane.b32.xlu0 %v1666, 8
        %v1733 = vpop.permute.xlu0 %1732
        %1734 = vrot.lane.b32.xlu0 %v1667, 8
        %v1735 = vpop.permute.xlu0 %1734
        %1736 = vrot.lane.b32.xlu0 %v1668, 8
        %v1737 = vpop.permute.xlu0 %1736
        %1738 = vrot.lane.b32.xlu0 %v1669, 8
        %v1739 = vpop.permute.xlu0 %1738
        %1740 = vrot.lane.b32.xlu0 %v1670, 8
        %v1741 = vpop.permute.xlu0 %1740
        %1742 = vrot.lane.b32.xlu0 %v1671, 8
        %v1743 = vpop.permute.xlu0 %1742
        %1744 = vrot.lane.b32.xlu0 %v1672, 8
        %v1745 = vpop.permute.xlu0 %1744
        %1746 = vrot.lane.b32.xlu0 %v1673, 8
        %v1747 = vpop.permute.xlu0 %1746
        %1748 = vrot.lane.b32.xlu0 %v1674, 8
        %v1749 = vpop.permute.xlu0 %1748
        %1750 = vrot.lane.b32.xlu0 %v1675, 8
        %v1751 = vpop.permute.xlu0 %1750
        %1752 = vrot.lane.b32.xlu0 %v1676, 8
        %v1753 = vpop.permute.xlu0 %1752
        %1754 = vrot.lane.b32.xlu0 %v1677, 8
        %v1755 = vpop.permute.xlu0 %1754
        %1756 = vrot.lane.b32.xlu0 %v1678, 8
        %v1757 = vpop.permute.xlu0 %1756
        %1758 = vrot.lane.b32.xlu0 %v1679, 8
        %v1759 = vpop.permute.xlu0 %1758
        %1760 = vrot.lane.b32.xlu0 %v1680, 8
        %v1761 = vpop.permute.xlu0 %1760
        %1762 = vrot.lane.b32.xlu0 %v1681, 8
        %v1763 = vpop.permute.xlu0 %1762
        %1764 = vrot.lane.b32.xlu0 %v1682, 8
        %v1765 = vpop.permute.xlu0 %1764
        %1766 = vrot.lane.b32.xlu0 %v1683, 8
        %v1767 = vpop.permute.xlu0 %1766
        %1768 = vrot.lane.b32.xlu0 %v1684, 8
        %v1769 = vpop.permute.xlu0 %1768
        %1770 = vrot.lane.b32.xlu0 %v1685, 8
        %v1771 = vpop.permute.xlu0 %1770
        %1772 = vrot.lane.b32.xlu0 %v1686, 8
        %v1773 = vpop.permute.xlu0 %1772
        %1774 = vrot.lane.b32.xlu0 %v1687, 8
        %v1775 = vpop.permute.xlu0 %1774
        %1776 = vrot.lane.b32.xlu0 %v1688, 8
        %v1777 = vpop.permute.xlu0 %1776
        %1778 = vrot.lane.b32.xlu0 %v1689, 8
        %v1779 = vpop.permute.xlu0 %1778
        %1780 = vrot.lane.b32.xlu0 %v1690, 8
        %v1781 = vpop.permute.xlu0 %1780
        %1782 = vrot.lane.b32.xlu0 %v1691, 8
        %v1783 = vpop.permute.xlu0 %1782
        %1784 = vrot.lane.b32.xlu0 %v1692, 8
        %v1785 = vpop.permute.xlu0 %1784
        %1786 = vrot.lane.b32.xlu0 %v1693, 8
        %v1787 = vpop.permute.xlu0 %1786
        %1788 = vrot.lane.b32.xlu0 %v1694, 8
        %v1789 = vpop.permute.xlu0 %1788
        %1790 = vrot.lane.b32.xlu0 %v1695, 8
        %v1791 = vpop.permute.xlu0 %1790
        %1792 = vrot.lane.b32.xlu0 %v1696, 8
        %v1793 = vpop.permute.xlu0 %1792
        %1794 = vrot.lane.b32.xlu0 %v1697, 8
        %v1795 = vpop.permute.xlu0 %1794
        %1796 = vrot.lane.b32.xlu0 %v1698, 8
        %v1797 = vpop.permute.xlu0 %1796
        %1798 = vrot.lane.b32.xlu0 %v1699, 8
        %v1799 = vpop.permute.xlu0 %1798
        %1800 = vrot.lane.b32.xlu0 %v1700, 8
        %v1801 = vpop.permute.xlu0 %1800
        %1802 = vrot.lane.b32.xlu0 %v1701, 8
        %v1803 = vpop.permute.xlu0 %1802
        %1804 = vrot.lane.b32.xlu0 %v1702, 8
        %v1805 = vpop.permute.xlu0 %1804
        %1806 = vrot.lane.b32.xlu0 %v1703, 8
        %v1807 = vpop.permute.xlu0 %1806
        %1808 = vrot.lane.b32.xlu0 %v1704, 8
        %v1809 = vpop.permute.xlu0 %1808
        %1810 = vrot.lane.b32.xlu0 %v1705, 8
        %v1811 = vpop.permute.xlu0 %1810
        %1812 = vrot.lane.b32.xlu0 %v1706, 8
        %v1813 = vpop.permute.xlu0 %1812
        %1814 = vrot.lane.b32.xlu0 %v1707, 8
        %v1815 = vpop.permute.xlu0 %1814
        %1816 = vrot.lane.b32.xlu0 %v1708, 8
        %v1817 = vpop.permute.xlu0 %1816
        %1818 = vrot.lane.b32.xlu0 %v1709, 8
        %v1819 = vpop.permute.xlu0 %1818
        %1820 = vrot.lane.b32.xlu0 %v1710, 8
        %v1821 = vpop.permute.xlu0 %1820
        %1822 = vrot.lane.b32.xlu0 %v1711, 8
        %v1823 = vpop.permute.xlu0 %1822
        %1824 = vrot.lane.b32.xlu0 %v1712, 8
        %v1825 = vpop.permute.xlu0 %1824
        %1826 = vrot.lane.b32.xlu0 %v1713, 8
        %v1827 = vpop.permute.xlu0 %1826
        %1828 = vrot.lane.b32.xlu0 %v1714, 8
        %v1829 = vpop.permute.xlu0 %1828
        %1830 = vrot.lane.b32.xlu0 %v1715, 8
        %v1831 = vpop.permute.xlu0 %1830
        %1832 = vrot.lane.b32.xlu0 %v1716, 8
        %v1833 = vpop.permute.xlu0 %1832
        %1834 = vrot.lane.b32.xlu0 %v1717, 8
        %v1835 = vpop.permute.xlu0 %1834
        %1836 = vrot.lane.b32.xlu0 %v1718, 8
        %v1837 = vpop.permute.xlu0 %1836
        %1838 = vrot.lane.b32.xlu0 %v1719, 8
        %v1839 = vpop.permute.xlu0 %1838
        %1840 = vrot.lane.b32.xlu0 %v1720, 8
        %v1841 = vpop.permute.xlu0 %1840
        %1842 = vrot.lane.b32.xlu0 %v1721, 8
        %v1843 = vpop.permute.xlu0 %1842
        %1844 = vrot.lane.b32.xlu0 %v1722, 8
        %v1845 = vpop.permute.xlu0 %1844
        %1846 = vrot.lane.b32.xlu0 %v1723, 8
        %v1847 = vpop.permute.xlu0 %1846
        %1848 = vrot.lane.b32.xlu0 %v1724, 8
        %v1849 = vpop.permute.xlu0 %1848
        %1850 = vrot.lane.b32.xlu0 %v1725, 8
        %v1851 = vpop.permute.xlu0 %1850
        %1852 = vrot.lane.b32.xlu0 %v1726, 8
        %v1853 = vpop.permute.xlu0 %1852
        %1854 = vrot.lane.b32.xlu0 %v1727, 8
        %v1855 = vpop.permute.xlu0 %1854
        %v1856 = vpack.c.b16 %v1538, %v1538
        %v1857 = vpack.c.b16 %v1542, %v1542
        %v1858 = vpack.c.b16 %v1546, %v1546
        %v1859 = vpack.c.b16 %v1550, %v1550
        %v1860 = vpack.c.b16 %v1554, %v1554
        %v1861 = vpack.c.b16 %v1558, %v1558
        %v1862 = vpack.c.b16 %v1562, %v1562
        %v1863 = vpack.c.b16 %v1566, %v1566
        %v1864 = vpack.c.b16 %v1570, %v1570
        %v1865 = vpack.c.b16 %v1574, %v1574
        %v1866 = vpack.c.b16 %v1578, %v1578
        %v1867 = vpack.c.b16 %v1582, %v1582
        %v1868 = vpack.c.b16 %v1586, %v1586
        %v1869 = vpack.c.b16 %v1590, %v1590
        %v1870 = vpack.c.b16 %v1594, %v1594
        %v1871 = vpack.c.b16 %v1598, %v1598
        %v1872 = vpack.c.b16 %v1602, %v1602
        %v1873 = vpack.c.b16 %v1606, %v1606
        %v1874 = vpack.c.b16 %v1610, %v1610
        %v1875 = vpack.c.b16 %v1614, %v1614
        %v1876 = vpack.c.b16 %v1618, %v1618
        %v1877 = vpack.c.b16 %v1622, %v1622
        %v1878 = vpack.c.b16 %v1626, %v1626
        %v1879 = vpack.c.b16 %v1630, %v1630
        %v1880 = vpack.c.b16 %v1634, %v1634
        %v1881 = vpack.c.b16 %v1638, %v1638
        %v1882 = vpack.c.b16 %v1642, %v1642
        %v1883 = vpack.c.b16 %v1646, %v1646
        %v1884 = vpack.c.b16 %v1650, %v1650
        %v1885 = vpack.c.b16 %v1654, %v1654
        %v1886 = vpack.c.b16 %v1658, %v1658
        %v1887 = vpack.c.b16 %v1662, %v1662
        %v1889 = vshrl.u32 %v1664, 16
        %v1891 = vrot.slane %v1889, 7
        %v1892 = vshll.u32 %v1664, 16
        %v1894 = vor.u32 %v1891, %v1892
        %v1896 = vshrl.u32 %v1856, 16
        %v1898 = vrot.slane %v1896, 7
        %v1899 = vshll.u32 %v1856, 16
        %v1901 = vor.u32 %v1898, %v1899
        %v1902 = vsel %vm799, %v1891, %v1901
        %v1904 = vshrl.u32 %v1666, 16
        %v1906 = vrot.slane %v1904, 7
        %v1907 = vshll.u32 %v1666, 16
        %v1909 = vor.u32 %v1906, %v1907
        %v1911 = vshrl.u32 %v1857, 16
        %v1913 = vrot.slane %v1911, 7
        %v1914 = vshll.u32 %v1857, 16
        %v1916 = vor.u32 %v1913, %v1914
        %v1917 = vsel %vm799, %v1906, %v1916
        %v1919 = vshrl.u32 %v1668, 16
        %v1921 = vrot.slane %v1919, 7
        %v1922 = vshll.u32 %v1668, 16
        %v1924 = vor.u32 %v1921, %v1922
        %v1926 = vshrl.u32 %v1858, 16
        %v1928 = vrot.slane %v1926, 7
        %v1929 = vshll.u32 %v1858, 16
        %v1931 = vor.u32 %v1928, %v1929
        %v1932 = vsel %vm799, %v1921, %v1931
        %v1934 = vshrl.u32 %v1670, 16
        %v1936 = vrot.slane %v1934, 7
        %v1937 = vshll.u32 %v1670, 16
        %v1939 = vor.u32 %v1936, %v1937
        %v1941 = vshrl.u32 %v1859, 16
        %v1943 = vrot.slane %v1941, 7
        %v1944 = vshll.u32 %v1859, 16
        %v1946 = vor.u32 %v1943, %v1944
        %v1947 = vsel %vm799, %v1936, %v1946
        %v1949 = vshrl.u32 %v1672, 16
        %v1951 = vrot.slane %v1949, 7
        %v1952 = vshll.u32 %v1672, 16
        %v1954 = vor.u32 %v1951, %v1952
        %v1956 = vshrl.u32 %v1860, 16
        %v1958 = vrot.slane %v1956, 7
        %v1959 = vshll.u32 %v1860, 16
        %v1961 = vor.u32 %v1958, %v1959
        %v1962 = vsel %vm799, %v1951, %v1961
        %v1964 = vshrl.u32 %v1674, 16
        %v1966 = vrot.slane %v1964, 7
        %v1967 = vshll.u32 %v1674, 16
        %v1969 = vor.u32 %v1966, %v1967
        %v1971 = vshrl.u32 %v1861, 16
        %v1973 = vrot.slane %v1971, 7
        %v1974 = vshll.u32 %v1861, 16
        %v1976 = vor.u32 %v1973, %v1974
        %v1977 = vsel %vm799, %v1966, %v1976
        %v1979 = vshrl.u32 %v1676, 16
        %v1981 = vrot.slane %v1979, 7
        %v1982 = vshll.u32 %v1676, 16
        %v1984 = vor.u32 %v1981, %v1982
        %v1986 = vshrl.u32 %v1862, 16
        %v1988 = vrot.slane %v1986, 7
        %v1989 = vshll.u32 %v1862, 16
        %v1991 = vor.u32 %v1988, %v1989
        %v1992 = vsel %vm799, %v1981, %v1991
        %v1994 = vshrl.u32 %v1678, 16
        %v1996 = vrot.slane %v1994, 7
        %v1997 = vshll.u32 %v1678, 16
        %v1999 = vor.u32 %v1996, %v1997
        %v2001 = vshrl.u32 %v1863, 16
        %v2003 = vrot.slane %v2001, 7
        %v2004 = vshll.u32 %v1863, 16
        %v2006 = vor.u32 %v2003, %v2004
        %v2007 = vsel %vm799, %v1996, %v2006
        %v2009 = vshrl.u32 %v1680, 16
        %v2011 = vrot.slane %v2009, 7
        %v2012 = vshll.u32 %v1680, 16
        %v2014 = vor.u32 %v2011, %v2012
        %v2016 = vshrl.u32 %v1864, 16
        %v2018 = vrot.slane %v2016, 7
        %v2019 = vshll.u32 %v1864, 16
        %v2021 = vor.u32 %v2018, %v2019
        %v2022 = vsel %vm799, %v2011, %v2021
        %v2024 = vshrl.u32 %v1682, 16
        %v2026 = vrot.slane %v2024, 7
        %v2027 = vshll.u32 %v1682, 16
        %v2029 = vor.u32 %v2026, %v2027
        %v2031 = vshrl.u32 %v1865, 16
        %v2033 = vrot.slane %v2031, 7
        %v2034 = vshll.u32 %v1865, 16
        %v2036 = vor.u32 %v2033, %v2034
        %v2037 = vsel %vm799, %v2026, %v2036
        %v2039 = vshrl.u32 %v1684, 16
        %v2041 = vrot.slane %v2039, 7
        %v2042 = vshll.u32 %v1684, 16
        %v2044 = vor.u32 %v2041, %v2042
        %v2046 = vshrl.u32 %v1866, 16
        %v2048 = vrot.slane %v2046, 7
        %v2049 = vshll.u32 %v1866, 16
        %v2051 = vor.u32 %v2048, %v2049
        %v2052 = vsel %vm799, %v2041, %v2051
        %v2054 = vshrl.u32 %v1686, 16
        %v2056 = vrot.slane %v2054, 7
        %v2057 = vshll.u32 %v1686, 16
        %v2059 = vor.u32 %v2056, %v2057
        %v2061 = vshrl.u32 %v1867, 16
        %v2063 = vrot.slane %v2061, 7
        %v2064 = vshll.u32 %v1867, 16
        %v2066 = vor.u32 %v2063, %v2064
        %v2067 = vsel %vm799, %v2056, %v2066
        %v2069 = vshrl.u32 %v1688, 16
        %v2071 = vrot.slane %v2069, 7
        %v2072 = vshll.u32 %v1688, 16
        %v2074 = vor.u32 %v2071, %v2072
        %v2076 = vshrl.u32 %v1868, 16
        %v2078 = vrot.slane %v2076, 7
        %v2079 = vshll.u32 %v1868, 16
        %v2081 = vor.u32 %v2078, %v2079
        %v2082 = vsel %vm799, %v2071, %v2081
        %v2084 = vshrl.u32 %v1690, 16
        %v2086 = vrot.slane %v2084, 7
        %v2087 = vshll.u32 %v1690, 16
        %v2089 = vor.u32 %v2086, %v2087
        %v2091 = vshrl.u32 %v1869, 16
        %v2093 = vrot.slane %v2091, 7
        %v2094 = vshll.u32 %v1869, 16
        %v2096 = vor.u32 %v2093, %v2094
        %v2097 = vsel %vm799, %v2086, %v2096
        %v2099 = vshrl.u32 %v1692, 16
        %v2101 = vrot.slane %v2099, 7
        %v2102 = vshll.u32 %v1692, 16
        %v2104 = vor.u32 %v2101, %v2102
        %v2106 = vshrl.u32 %v1870, 16
        %v2108 = vrot.slane %v2106, 7
        %v2109 = vshll.u32 %v1870, 16
        %v2111 = vor.u32 %v2108, %v2109
        %v2112 = vsel %vm799, %v2101, %v2111
        %v2114 = vshrl.u32 %v1694, 16
        %v2116 = vrot.slane %v2114, 7
        %v2117 = vshll.u32 %v1694, 16
        %v2119 = vor.u32 %v2116, %v2117
        %v2121 = vshrl.u32 %v1871, 16
        %v2123 = vrot.slane %v2121, 7
        %v2124 = vshll.u32 %v1871, 16
        %v2126 = vor.u32 %v2123, %v2124
        %v2127 = vsel %vm799, %v2116, %v2126
        %v2129 = vshrl.u32 %v1696, 16
        %v2131 = vrot.slane %v2129, 7
        %v2132 = vshll.u32 %v1696, 16
        %v2134 = vor.u32 %v2131, %v2132
        %v2136 = vshrl.u32 %v1872, 16
        %v2138 = vrot.slane %v2136, 7
        %v2139 = vshll.u32 %v1872, 16
        %v2141 = vor.u32 %v2138, %v2139
        %v2142 = vsel %vm799, %v2131, %v2141
        %v2144 = vshrl.u32 %v1698, 16
        %v2146 = vrot.slane %v2144, 7
        %v2147 = vshll.u32 %v1698, 16
        %v2149 = vor.u32 %v2146, %v2147
        %v2151 = vshrl.u32 %v1873, 16
        %v2153 = vrot.slane %v2151, 7
        %v2154 = vshll.u32 %v1873, 16
        %v2156 = vor.u32 %v2153, %v2154
        %v2157 = vsel %vm799, %v2146, %v2156
        %v2159 = vshrl.u32 %v1700, 16
        %v2161 = vrot.slane %v2159, 7
        %v2162 = vshll.u32 %v1700, 16
        %v2164 = vor.u32 %v2161, %v2162
        %v2166 = vshrl.u32 %v1874, 16
        %v2168 = vrot.slane %v2166, 7
        %v2169 = vshll.u32 %v1874, 16
        %v2171 = vor.u32 %v2168, %v2169
        %v2172 = vsel %vm799, %v2161, %v2171
        %v2174 = vshrl.u32 %v1702, 16
        %v2176 = vrot.slane %v2174, 7
        %v2177 = vshll.u32 %v1702, 16
        %v2179 = vor.u32 %v2176, %v2177
        %v2181 = vshrl.u32 %v1875, 16
        %v2183 = vrot.slane %v2181, 7
        %v2184 = vshll.u32 %v1875, 16
        %v2186 = vor.u32 %v2183, %v2184
        %v2187 = vsel %vm799, %v2176, %v2186
        %v2189 = vshrl.u32 %v1704, 16
        %v2191 = vrot.slane %v2189, 7
        %v2192 = vshll.u32 %v1704, 16
        %v2194 = vor.u32 %v2191, %v2192
        %v2196 = vshrl.u32 %v1876, 16
        %v2198 = vrot.slane %v2196, 7
        %v2199 = vshll.u32 %v1876, 16
        %v2201 = vor.u32 %v2198, %v2199
        %v2202 = vsel %vm799, %v2191, %v2201
        %v2204 = vshrl.u32 %v1706, 16
        %v2206 = vrot.slane %v2204, 7
        %v2207 = vshll.u32 %v1706, 16
        %v2209 = vor.u32 %v2206, %v2207
        %v2211 = vshrl.u32 %v1877, 16
        %v2213 = vrot.slane %v2211, 7
        %v2214 = vshll.u32 %v1877, 16
        %v2216 = vor.u32 %v2213, %v2214
        %v2217 = vsel %vm799, %v2206, %v2216
        %v2219 = vshrl.u32 %v1708, 16
        %v2221 = vrot.slane %v2219, 7
        %v2222 = vshll.u32 %v1708, 16
        %v2224 = vor.u32 %v2221, %v2222
        %v2226 = vshrl.u32 %v1878, 16
        %v2228 = vrot.slane %v2226, 7
        %v2229 = vshll.u32 %v1878, 16
        %v2231 = vor.u32 %v2228, %v2229
        %v2232 = vsel %vm799, %v2221, %v2231
        %v2234 = vshrl.u32 %v1710, 16
        %v2236 = vrot.slane %v2234, 7
        %v2237 = vshll.u32 %v1710, 16
        %v2239 = vor.u32 %v2236, %v2237
        %v2241 = vshrl.u32 %v1879, 16
        %v2243 = vrot.slane %v2241, 7
        %v2244 = vshll.u32 %v1879, 16
        %v2246 = vor.u32 %v2243, %v2244
        %v2247 = vsel %vm799, %v2236, %v2246
        %v2249 = vshrl.u32 %v1712, 16
        %v2251 = vrot.slane %v2249, 7
        %v2252 = vshll.u32 %v1712, 16
        %v2254 = vor.u32 %v2251, %v2252
        %v2256 = vshrl.u32 %v1880, 16
        %v2258 = vrot.slane %v2256, 7
        %v2259 = vshll.u32 %v1880, 16
        %v2261 = vor.u32 %v2258, %v2259
        %v2262 = vsel %vm799, %v2251, %v2261
        %v2264 = vshrl.u32 %v1714, 16
        %v2266 = vrot.slane %v2264, 7
        %v2267 = vshll.u32 %v1714, 16
        %v2269 = vor.u32 %v2266, %v2267
        %v2271 = vshrl.u32 %v1881, 16
        %v2273 = vrot.slane %v2271, 7
        %v2274 = vshll.u32 %v1881, 16
        %v2276 = vor.u32 %v2273, %v2274
        %v2277 = vsel %vm799, %v2266, %v2276
        %v2279 = vshrl.u32 %v1716, 16
        %v2281 = vrot.slane %v2279, 7
        %v2282 = vshll.u32 %v1716, 16
        %v2284 = vor.u32 %v2281, %v2282
        %v2286 = vshrl.u32 %v1882, 16
        %v2288 = vrot.slane %v2286, 7
        %v2289 = vshll.u32 %v1882, 16
        %v2291 = vor.u32 %v2288, %v2289
        %v2292 = vsel %vm799, %v2281, %v2291
        %v2294 = vshrl.u32 %v1718, 16
        %v2296 = vrot.slane %v2294, 7
        %v2297 = vshll.u32 %v1718, 16
        %v2299 = vor.u32 %v2296, %v2297
        %v2301 = vshrl.u32 %v1883, 16
        %v2303 = vrot.slane %v2301, 7
        %v2304 = vshll.u32 %v1883, 16
        %v2306 = vor.u32 %v2303, %v2304
        %v2307 = vsel %vm799, %v2296, %v2306
        %v2309 = vshrl.u32 %v1720, 16
        %v2311 = vrot.slane %v2309, 7
        %v2312 = vshll.u32 %v1720, 16
        %v2314 = vor.u32 %v2311, %v2312
        %v2316 = vshrl.u32 %v1884, 16
        %v2318 = vrot.slane %v2316, 7
        %v2319 = vshll.u32 %v1884, 16
        %v2321 = vor.u32 %v2318, %v2319
        %v2322 = vsel %vm799, %v2311, %v2321
        %v2324 = vshrl.u32 %v1722, 16
        %v2326 = vrot.slane %v2324, 7
        %v2327 = vshll.u32 %v1722, 16
        %v2329 = vor.u32 %v2326, %v2327
        %v2331 = vshrl.u32 %v1885, 16
        %v2333 = vrot.slane %v2331, 7
        %v2334 = vshll.u32 %v1885, 16
        %v2336 = vor.u32 %v2333, %v2334
        %v2337 = vsel %vm799, %v2326, %v2336
        %v2339 = vshrl.u32 %v1724, 16
        %v2341 = vrot.slane %v2339, 7
        %v2342 = vshll.u32 %v1724, 16
        %v2344 = vor.u32 %v2341, %v2342
        %v2346 = vshrl.u32 %v1886, 16
        %v2348 = vrot.slane %v2346, 7
        %v2349 = vshll.u32 %v1886, 16
        %v2351 = vor.u32 %v2348, %v2349
        %v2352 = vsel %vm799, %v2341, %v2351
        %v2354 = vshrl.u32 %v1726, 16
        %v2356 = vrot.slane %v2354, 7
        %v2357 = vshll.u32 %v1726, 16
        %v2359 = vor.u32 %v2356, %v2357
        %v2361 = vshrl.u32 %v1887, 16
        %v2363 = vrot.slane %v2361, 7
        %v2364 = vshll.u32 %v1887, 16
        %v2366 = vor.u32 %v2363, %v2364
        %v2367 = vsel %vm799, %v2356, %v2366
        %2368 = vrot.lane.b32.xlu0 %v1894, 12
        %v2369 = vpop.permute.xlu0 %2368
        %2370 = vrot.lane.b32.xlu0 %v1902, 12
        %v2371 = vpop.permute.xlu0 %2370
        %2372 = vrot.lane.b32.xlu0 %v1909, 12
        %v2373 = vpop.permute.xlu0 %2372
        %2374 = vrot.lane.b32.xlu0 %v1917, 12
        %v2375 = vpop.permute.xlu0 %2374
        %2376 = vrot.lane.b32.xlu0 %v1924, 12
        %v2377 = vpop.permute.xlu0 %2376
        %2378 = vrot.lane.b32.xlu0 %v1932, 12
        %v2379 = vpop.permute.xlu0 %2378
        %2380 = vrot.lane.b32.xlu0 %v1939, 12
        %v2381 = vpop.permute.xlu0 %2380
        %2382 = vrot.lane.b32.xlu0 %v1947, 12
        %v2383 = vpop.permute.xlu0 %2382
        %2384 = vrot.lane.b32.xlu0 %v1954, 12
        %v2385 = vpop.permute.xlu0 %2384
        %2386 = vrot.lane.b32.xlu0 %v1962, 12
        %v2387 = vpop.permute.xlu0 %2386
        %2388 = vrot.lane.b32.xlu0 %v1969, 12
        %v2389 = vpop.permute.xlu0 %2388
        %2390 = vrot.lane.b32.xlu0 %v1977, 12
        %v2391 = vpop.permute.xlu0 %2390
        %2392 = vrot.lane.b32.xlu0 %v1984, 12
        %v2393 = vpop.permute.xlu0 %2392
        %2394 = vrot.lane.b32.xlu0 %v1992, 12
        %v2395 = vpop.permute.xlu0 %2394
        %2396 = vrot.lane.b32.xlu0 %v1999, 12
        %v2397 = vpop.permute.xlu0 %2396
        %2398 = vrot.lane.b32.xlu0 %v2007, 12
        %v2399 = vpop.permute.xlu0 %2398
        %2400 = vrot.lane.b32.xlu0 %v2014, 12
        %v2401 = vpop.permute.xlu0 %2400
        %2402 = vrot.lane.b32.xlu0 %v2022, 12
        %v2403 = vpop.permute.xlu0 %2402
        %2404 = vrot.lane.b32.xlu0 %v2029, 12
        %v2405 = vpop.permute.xlu0 %2404
        %2406 = vrot.lane.b32.xlu0 %v2037, 12
        %v2407 = vpop.permute.xlu0 %2406
        %2408 = vrot.lane.b32.xlu0 %v2044, 12
        %v2409 = vpop.permute.xlu0 %2408
        %2410 = vrot.lane.b32.xlu0 %v2052, 12
        %v2411 = vpop.permute.xlu0 %2410
        %2412 = vrot.lane.b32.xlu0 %v2059, 12
        %v2413 = vpop.permute.xlu0 %2412
        %2414 = vrot.lane.b32.xlu0 %v2067, 12
        %v2415 = vpop.permute.xlu0 %2414
        %2416 = vrot.lane.b32.xlu0 %v2074, 12
        %v2417 = vpop.permute.xlu0 %2416
        %2418 = vrot.lane.b32.xlu0 %v2082, 12
        %v2419 = vpop.permute.xlu0 %2418
        %2420 = vrot.lane.b32.xlu0 %v2089, 12
        %v2421 = vpop.permute.xlu0 %2420
        %2422 = vrot.lane.b32.xlu0 %v2097, 12
        %v2423 = vpop.permute.xlu0 %2422
        %2424 = vrot.lane.b32.xlu0 %v2104, 12
        %v2425 = vpop.permute.xlu0 %2424
        %2426 = vrot.lane.b32.xlu0 %v2112, 12
        %v2427 = vpop.permute.xlu0 %2426
        %2428 = vrot.lane.b32.xlu0 %v2119, 12
        %v2429 = vpop.permute.xlu0 %2428
        %2430 = vrot.lane.b32.xlu0 %v2127, 12
        %v2431 = vpop.permute.xlu0 %2430
        %2432 = vrot.lane.b32.xlu0 %v2134, 12
        %v2433 = vpop.permute.xlu0 %2432
        %2434 = vrot.lane.b32.xlu0 %v2142, 12
        %v2435 = vpop.permute.xlu0 %2434
        %2436 = vrot.lane.b32.xlu0 %v2149, 12
        %v2437 = vpop.permute.xlu0 %2436
        %2438 = vrot.lane.b32.xlu0 %v2157, 12
        %v2439 = vpop.permute.xlu0 %2438
        %2440 = vrot.lane.b32.xlu0 %v2164, 12
        %v2441 = vpop.permute.xlu0 %2440
        %2442 = vrot.lane.b32.xlu0 %v2172, 12
        %v2443 = vpop.permute.xlu0 %2442
        %2444 = vrot.lane.b32.xlu0 %v2179, 12
        %v2445 = vpop.permute.xlu0 %2444
        %2446 = vrot.lane.b32.xlu0 %v2187, 12
        %v2447 = vpop.permute.xlu0 %2446
        %2448 = vrot.lane.b32.xlu0 %v2194, 12
        %v2449 = vpop.permute.xlu0 %2448
        %2450 = vrot.lane.b32.xlu0 %v2202, 12
        %v2451 = vpop.permute.xlu0 %2450
        %2452 = vrot.lane.b32.xlu0 %v2209, 12
        %v2453 = vpop.permute.xlu0 %2452
        %2454 = vrot.lane.b32.xlu0 %v2217, 12
        %v2455 = vpop.permute.xlu0 %2454
        %2456 = vrot.lane.b32.xlu0 %v2224, 12
        %v2457 = vpop.permute.xlu0 %2456
        %2458 = vrot.lane.b32.xlu0 %v2232, 12
        %v2459 = vpop.permute.xlu0 %2458
        %2460 = vrot.lane.b32.xlu0 %v2239, 12
        %v2461 = vpop.permute.xlu0 %2460
        %2462 = vrot.lane.b32.xlu0 %v2247, 12
        %v2463 = vpop.permute.xlu0 %2462
        %2464 = vrot.lane.b32.xlu0 %v2254, 12
        %v2465 = vpop.permute.xlu0 %2464
        %2466 = vrot.lane.b32.xlu0 %v2262, 12
        %v2467 = vpop.permute.xlu0 %2466
        %2468 = vrot.lane.b32.xlu0 %v2269, 12
        %v2469 = vpop.permute.xlu0 %2468
        %2470 = vrot.lane.b32.xlu0 %v2277, 12
        %v2471 = vpop.permute.xlu0 %2470
        %2472 = vrot.lane.b32.xlu0 %v2284, 12
        %v2473 = vpop.permute.xlu0 %2472
        %2474 = vrot.lane.b32.xlu0 %v2292, 12
        %v2475 = vpop.permute.xlu0 %2474
        %2476 = vrot.lane.b32.xlu0 %v2299, 12
        %v2477 = vpop.permute.xlu0 %2476
        %2478 = vrot.lane.b32.xlu0 %v2307, 12
        %v2479 = vpop.permute.xlu0 %2478
        %2480 = vrot.lane.b32.xlu0 %v2314, 12
        %v2481 = vpop.permute.xlu0 %2480
        %2482 = vrot.lane.b32.xlu0 %v2322, 12
        %v2483 = vpop.permute.xlu0 %2482
        %2484 = vrot.lane.b32.xlu0 %v2329, 12
        %v2485 = vpop.permute.xlu0 %2484
        %2486 = vrot.lane.b32.xlu0 %v2337, 12
        %v2487 = vpop.permute.xlu0 %2486
        %2488 = vrot.lane.b32.xlu0 %v2344, 12
        %v2489 = vpop.permute.xlu0 %2488
        %2490 = vrot.lane.b32.xlu0 %v2352, 12
        %v2491 = vpop.permute.xlu0 %2490
        %2492 = vrot.lane.b32.xlu0 %v2359, 12
        %v2493 = vpop.permute.xlu0 %2492
        %2494 = vrot.lane.b32.xlu0 %v2367, 12
        %v2495 = vpop.permute.xlu0 %2494
        %vm2496 = vcmask 31744
        %v2498 = vsel %vm2496, %v703, %v1281
        %v2501 = vsel %vm2496, %v704, %v1283
        %v2503 = vsel %vm2496, %v705, %v1285
        %v2506 = vsel %vm2496, %v706, %v1287
        %v2508 = vsel %vm2496, %v707, %v1289
        %v2511 = vsel %vm2496, %v708, %v1291
        %v2513 = vsel %vm2496, %v709, %v1293
        %v2516 = vsel %vm2496, %v710, %v1295
        %v2518 = vsel %vm2496, %v711, %v1297
        %v2521 = vsel %vm2496, %v712, %v1299
        %v2523 = vsel %vm2496, %v713, %v1301
        %v2526 = vsel %vm2496, %v714, %v1303
        %v2528 = vsel %vm2496, %v715, %v1305
        %v2531 = vsel %vm2496, %v716, %v1307
        %v2533 = vsel %vm2496, %v717, %v1309
        %v2536 = vsel %vm2496, %v718, %v1311
        %v2538 = vsel %vm2496, %v719, %v1313
        %v2541 = vsel %vm2496, %v720, %v1315
        %v2543 = vsel %vm2496, %v721, %v1317
        %v2546 = vsel %vm2496, %v722, %v1319
        %v2548 = vsel %vm2496, %v723, %v1321
        %v2551 = vsel %vm2496, %v724, %v1323
        %v2553 = vsel %vm2496, %v725, %v1325
        %v2556 = vsel %vm2496, %v726, %v1327
        %v2558 = vsel %vm2496, %v727, %v1329
        %v2561 = vsel %vm2496, %v728, %v1331
        %v2563 = vsel %vm2496, %v729, %v1333
        %v2566 = vsel %vm2496, %v730, %v1335
        %v2568 = vsel %vm2496, %v731, %v1337
        %v2571 = vsel %vm2496, %v732, %v1339
        %v2573 = vsel %vm2496, %v733, %v1341
        %v2576 = vsel %vm2496, %v734, %v1343
        %v2578 = vsel %vm2496, %v735, %v1345
        %v2581 = vsel %vm2496, %v736, %v1347
        %v2583 = vsel %vm2496, %v737, %v1349
        %v2586 = vsel %vm2496, %v738, %v1351
        %v2588 = vsel %vm2496, %v739, %v1353
        %v2591 = vsel %vm2496, %v740, %v1355
        %v2593 = vsel %vm2496, %v741, %v1357
        %v2596 = vsel %vm2496, %v742, %v1359
        %v2598 = vsel %vm2496, %v743, %v1361
        %v2601 = vsel %vm2496, %v744, %v1363
        %v2603 = vsel %vm2496, %v745, %v1365
        %v2606 = vsel %vm2496, %v746, %v1367
        %v2608 = vsel %vm2496, %v747, %v1369
        %v2611 = vsel %vm2496, %v748, %v1371
        %v2613 = vsel %vm2496, %v749, %v1373
        %v2616 = vsel %vm2496, %v750, %v1375
        %v2618 = vsel %vm2496, %v751, %v1377
        %v2621 = vsel %vm2496, %v752, %v1379
        %v2623 = vsel %vm2496, %v753, %v1381
        %v2626 = vsel %vm2496, %v754, %v1383
        %v2628 = vsel %vm2496, %v755, %v1385
        %v2631 = vsel %vm2496, %v756, %v1387
        %v2633 = vsel %vm2496, %v757, %v1389
        %v2636 = vsel %vm2496, %v758, %v1391
        %v2638 = vsel %vm2496, %v759, %v1393
        %v2641 = vsel %vm2496, %v760, %v1395
        %v2643 = vsel %vm2496, %v761, %v1397
        %v2646 = vsel %vm2496, %v762, %v1399
        %v2648 = vsel %vm2496, %v763, %v1401
        %v2651 = vsel %vm2496, %v764, %v1403
        %v2653 = vsel %vm2496, %v765, %v1405
        %v2656 = vsel %vm2496, %v766, %v1407
        %vm2657 = vcmask 64512
        %v2659 = vsel %vm2657, %v2498, %v1729
        %v2661 = vsel %vm2657, %v2501, %v1731
        %v2663 = vsel %vm2657, %v2503, %v1733
        %v2665 = vsel %vm2657, %v2506, %v1735
        %v2667 = vsel %vm2657, %v2508, %v1737
        %v2669 = vsel %vm2657, %v2511, %v1739
        %v2671 = vsel %vm2657, %v2513, %v1741
        %v2673 = vsel %vm2657, %v2516, %v1743
        %v2675 = vsel %vm2657, %v2518, %v1745
        %v2677 = vsel %vm2657, %v2521, %v1747
        %v2679 = vsel %vm2657, %v2523, %v1749
        %v2681 = vsel %vm2657, %v2526, %v1751
        %v2683 = vsel %vm2657, %v2528, %v1753
        %v2685 = vsel %vm2657, %v2531, %v1755
        %v2687 = vsel %vm2657, %v2533, %v1757
        %v2689 = vsel %vm2657, %v2536, %v1759
        %v2691 = vsel %vm2657, %v2538, %v1761
        %v2693 = vsel %vm2657, %v2541, %v1763
        %v2695 = vsel %vm2657, %v2543, %v1765
        %v2697 = vsel %vm2657, %v2546, %v1767
        %v2699 = vsel %vm2657, %v2548, %v1769
        %v2701 = vsel %vm2657, %v2551, %v1771
        %v2703 = vsel %vm2657, %v2553, %v1773
        %v2705 = vsel %vm2657, %v2556, %v1775
        %v2707 = vsel %vm2657, %v2558, %v1777
        %v2709 = vsel %vm2657, %v2561, %v1779
        %v2711 = vsel %vm2657, %v2563, %v1781
        %v2713 = vsel %vm2657, %v2566, %v1783
        %v2715 = vsel %vm2657, %v2568, %v1785
        %v2717 = vsel %vm2657, %v2571, %v1787
        %v2719 = vsel %vm2657, %v2573, %v1789
        %v2721 = vsel %vm2657, %v2576, %v1791
        %v2723 = vsel %vm2657, %v2578, %v1793
        %v2725 = vsel %vm2657, %v2581, %v1795
        %v2727 = vsel %vm2657, %v2583, %v1797
        %v2729 = vsel %vm2657, %v2586, %v1799
        %v2731 = vsel %vm2657, %v2588, %v1801
        %v2733 = vsel %vm2657, %v2591, %v1803
        %v2735 = vsel %vm2657, %v2593, %v1805
        %v2737 = vsel %vm2657, %v2596, %v1807
        %v2739 = vsel %vm2657, %v2598, %v1809
        %v2741 = vsel %vm2657, %v2601, %v1811
        %v2743 = vsel %vm2657, %v2603, %v1813
        %v2745 = vsel %vm2657, %v2606, %v1815
        %v2747 = vsel %vm2657, %v2608, %v1817
        %v2749 = vsel %vm2657, %v2611, %v1819
        %v2751 = vsel %vm2657, %v2613, %v1821
        %v2753 = vsel %vm2657, %v2616, %v1823
        %v2755 = vsel %vm2657, %v2618, %v1825
        %v2757 = vsel %vm2657, %v2621, %v1827
        %v2759 = vsel %vm2657, %v2623, %v1829
        %v2761 = vsel %vm2657, %v2626, %v1831
        %v2763 = vsel %vm2657, %v2628, %v1833
        %v2765 = vsel %vm2657, %v2631, %v1835
        %v2767 = vsel %vm2657, %v2633, %v1837
        %v2769 = vsel %vm2657, %v2636, %v1839
        %v2771 = vsel %vm2657, %v2638, %v1841
        %v2773 = vsel %vm2657, %v2641, %v1843
        %v2775 = vsel %vm2657, %v2643, %v1845
        %v2777 = vsel %vm2657, %v2646, %v1847
        %v2779 = vsel %vm2657, %v2648, %v1849
        %v2781 = vsel %vm2657, %v2651, %v1851
        %v2783 = vsel %vm2657, %v2653, %v1853
        %v2785 = vsel %vm2657, %v2656, %v1855
        %vm2786 = vcmask 97280
        %v2788 = vsel %vm2786, %v2659, %v2369
        %v2790 = vsel %vm2786, %v2661, %v2371
        %v2792 = vsel %vm2786, %v2663, %v2373
        %v2794 = vsel %vm2786, %v2665, %v2375
        %v2796 = vsel %vm2786, %v2667, %v2377
        %v2798 = vsel %vm2786, %v2669, %v2379
        %v2800 = vsel %vm2786, %v2671, %v2381
        %v2802 = vsel %vm2786, %v2673, %v2383
        %v2804 = vsel %vm2786, %v2675, %v2385
        %v2806 = vsel %vm2786, %v2677, %v2387
        %v2808 = vsel %vm2786, %v2679, %v2389
        %v2810 = vsel %vm2786, %v2681, %v2391
        %v2812 = vsel %vm2786, %v2683, %v2393
        %v2814 = vsel %vm2786, %v2685, %v2395
        %v2816 = vsel %vm2786, %v2687, %v2397
        %v2818 = vsel %vm2786, %v2689, %v2399
        %v2820 = vsel %vm2786, %v2691, %v2401
        %v2822 = vsel %vm2786, %v2693, %v2403
        %v2824 = vsel %vm2786, %v2695, %v2405
        %v2826 = vsel %vm2786, %v2697, %v2407
        %v2828 = vsel %vm2786, %v2699, %v2409
        %v2830 = vsel %vm2786, %v2701, %v2411
        %v2832 = vsel %vm2786, %v2703, %v2413
        %v2834 = vsel %vm2786, %v2705, %v2415
        %v2836 = vsel %vm2786, %v2707, %v2417
        %v2838 = vsel %vm2786, %v2709, %v2419
        %v2840 = vsel %vm2786, %v2711, %v2421
        %v2842 = vsel %vm2786, %v2713, %v2423
        %v2844 = vsel %vm2786, %v2715, %v2425
        %v2846 = vsel %vm2786, %v2717, %v2427
        %v2848 = vsel %vm2786, %v2719, %v2429
        %v2850 = vsel %vm2786, %v2721, %v2431
        %v2852 = vsel %vm2786, %v2723, %v2433
        %v2854 = vsel %vm2786, %v2725, %v2435
        %v2856 = vsel %vm2786, %v2727, %v2437
        %v2858 = vsel %vm2786, %v2729, %v2439
        %v2860 = vsel %vm2786, %v2731, %v2441
        %v2862 = vsel %vm2786, %v2733, %v2443
        %v2864 = vsel %vm2786, %v2735, %v2445
        %v2866 = vsel %vm2786, %v2737, %v2447
        %v2868 = vsel %vm2786, %v2739, %v2449
        %v2870 = vsel %vm2786, %v2741, %v2451
        %v2872 = vsel %vm2786, %v2743, %v2453
        %v2874 = vsel %vm2786, %v2745, %v2455
        %v2876 = vsel %vm2786, %v2747, %v2457
        %v2878 = vsel %vm2786, %v2749, %v2459
        %v2880 = vsel %vm2786, %v2751, %v2461
        %v2882 = vsel %vm2786, %v2753, %v2463
        %v2884 = vsel %vm2786, %v2755, %v2465
        %v2886 = vsel %vm2786, %v2757, %v2467
        %v2888 = vsel %vm2786, %v2759, %v2469
        %v2890 = vsel %vm2786, %v2761, %v2471
        %v2892 = vsel %vm2786, %v2763, %v2473
        %v2894 = vsel %vm2786, %v2765, %v2475
        %v2896 = vsel %vm2786, %v2767, %v2477
        %v2898 = vsel %vm2786, %v2769, %v2479
        %v2900 = vsel %vm2786, %v2771, %v2481
        %v2902 = vsel %vm2786, %v2773, %v2483
        %v2904 = vsel %vm2786, %v2775, %v2485
        %v2906 = vsel %vm2786, %v2777, %v2487
        %v2908 = vsel %vm2786, %v2779, %v2489
        %v2910 = vsel %vm2786, %v2781, %v2491
        %v2912 = vsel %vm2786, %v2783, %v2493
        %v2914 = vsel %vm2786, %v2785, %v2495
        %v2979 = vunpack.c.l.b16 %v2788
        %v2980 = vunpack.c.h.b16 %v2788
        %v2981 = vunpack.c.l.b16 %v2790
        %v2982 = vunpack.c.h.b16 %v2790
        %v2983 = vunpack.c.l.b16 %v2792
        %v2984 = vunpack.c.h.b16 %v2792
        %v2985 = vunpack.c.l.b16 %v2794
        %v2986 = vunpack.c.h.b16 %v2794
        %v2987 = vunpack.c.l.b16 %v2796
        %v2988 = vunpack.c.h.b16 %v2796
        %v2989 = vunpack.c.l.b16 %v2798
        %v2990 = vunpack.c.h.b16 %v2798
        %v2991 = vunpack.c.l.b16 %v2800
        %v2992 = vunpack.c.h.b16 %v2800
        %v2993 = vunpack.c.l.b16 %v2802
        %v2994 = vunpack.c.h.b16 %v2802
        %v2995 = vunpack.c.l.b16 %v2804
        %v2996 = vunpack.c.h.b16 %v2804
        %v2997 = vunpack.c.l.b16 %v2806
        %v2998 = vunpack.c.h.b16 %v2806
        %v2999 = vunpack.c.l.b16 %v2808
        %v3000 = vunpack.c.h.b16 %v2808
        %v3001 = vunpack.c.l.b16 %v2810
        %v3002 = vunpack.c.h.b16 %v2810
        %v3003 = vunpack.c.l.b16 %v2812
        %v3004 = vunpack.c.h.b16 %v2812
        %v3005 = vunpack.c.l.b16 %v2814
        %v3006 = vunpack.c.h.b16 %v2814
        %v3007 = vunpack.c.l.b16 %v2816
        %v3008 = vunpack.c.h.b16 %v2816
        %v3009 = vunpack.c.l.b16 %v2818
        %v3010 = vunpack.c.h.b16 %v2818
        %v3011 = vunpack.c.l.b16 %v2820
        %v3012 = vunpack.c.h.b16 %v2820
        %v3013 = vunpack.c.l.b16 %v2822
        %v3014 = vunpack.c.h.b16 %v2822
        %v3015 = vunpack.c.l.b16 %v2824
        %v3016 = vunpack.c.h.b16 %v2824
        %v3017 = vunpack.c.l.b16 %v2826
        %v3018 = vunpack.c.h.b16 %v2826
        %v3019 = vunpack.c.l.b16 %v2828
        %v3020 = vunpack.c.h.b16 %v2828
        %v3021 = vunpack.c.l.b16 %v2830
        %v3022 = vunpack.c.h.b16 %v2830
        %v3023 = vunpack.c.l.b16 %v2832
        %v3024 = vunpack.c.h.b16 %v2832
        %v3025 = vunpack.c.l.b16 %v2834
        %v3026 = vunpack.c.h.b16 %v2834
        %v3027 = vunpack.c.l.b16 %v2836
        %v3028 = vunpack.c.h.b16 %v2836
        %v3029 = vunpack.c.l.b16 %v2838
        %v3030 = vunpack.c.h.b16 %v2838
        %v3031 = vunpack.c.l.b16 %v2840
        %v3032 = vunpack.c.h.b16 %v2840
        %v3033 = vunpack.c.l.b16 %v2842
        %v3034 = vunpack.c.h.b16 %v2842
        %v3035 = vunpack.c.l.b16 %v2844
        %v3036 = vunpack.c.h.b16 %v2844
        %v3037 = vunpack.c.l.b16 %v2846
        %v3038 = vunpack.c.h.b16 %v2846
        %v3039 = vunpack.c.l.b16 %v2848
        %v3040 = vunpack.c.h.b16 %v2848
        %v3041 = vunpack.c.l.b16 %v2850
        %v3042 = vunpack.c.h.b16 %v2850
        %v3043 = vunpack.c.l.b16 %v2852
        %v3044 = vunpack.c.h.b16 %v2852
        %v3045 = vunpack.c.l.b16 %v2854
        %v3046 = vunpack.c.h.b16 %v2854
        %v3047 = vunpack.c.l.b16 %v2856
        %v3048 = vunpack.c.h.b16 %v2856
        %v3049 = vunpack.c.l.b16 %v2858
        %v3050 = vunpack.c.h.b16 %v2858
        %v3051 = vunpack.c.l.b16 %v2860
        %v3052 = vunpack.c.h.b16 %v2860
        %v3053 = vunpack.c.l.b16 %v2862
        %v3054 = vunpack.c.h.b16 %v2862
        %v3055 = vunpack.c.l.b16 %v2864
        %v3056 = vunpack.c.h.b16 %v2864
        %v3057 = vunpack.c.l.b16 %v2866
        %v3058 = vunpack.c.h.b16 %v2866
        %v3059 = vunpack.c.l.b16 %v2868
        %v3060 = vunpack.c.h.b16 %v2868
        %v3061 = vunpack.c.l.b16 %v2870
        %v3062 = vunpack.c.h.b16 %v2870
        %v3063 = vunpack.c.l.b16 %v2872
        %v3064 = vunpack.c.h.b16 %v2872
        %v3065 = vunpack.c.l.b16 %v2874
        %v3066 = vunpack.c.h.b16 %v2874
        %v3067 = vunpack.c.l.b16 %v2876
        %v3068 = vunpack.c.h.b16 %v2876
        %v3069 = vunpack.c.l.b16 %v2878
        %v3070 = vunpack.c.h.b16 %v2878
        %v3071 = vunpack.c.l.b16 %v2880
        %v3072 = vunpack.c.h.b16 %v2880
        %v3073 = vunpack.c.l.b16 %v2882
        %v3074 = vunpack.c.h.b16 %v2882
        %v3075 = vunpack.c.l.b16 %v2884
        %v3076 = vunpack.c.h.b16 %v2884
        %v3077 = vunpack.c.l.b16 %v2886
        %v3078 = vunpack.c.h.b16 %v2886
        %v3079 = vunpack.c.l.b16 %v2888
        %v3080 = vunpack.c.h.b16 %v2888
        %v3081 = vunpack.c.l.b16 %v2890
        %v3082 = vunpack.c.h.b16 %v2890
        %v3083 = vunpack.c.l.b16 %v2892
        %v3084 = vunpack.c.h.b16 %v2892
        %v3085 = vunpack.c.l.b16 %v2894
        %v3086 = vunpack.c.h.b16 %v2894
        %v3087 = vunpack.c.l.b16 %v2896
        %v3088 = vunpack.c.h.b16 %v2896
        %v3089 = vunpack.c.l.b16 %v2898
        %v3090 = vunpack.c.h.b16 %v2898
        %v3091 = vunpack.c.l.b16 %v2900
        %v3092 = vunpack.c.h.b16 %v2900
        %v3093 = vunpack.c.l.b16 %v2902
        %v3094 = vunpack.c.h.b16 %v2902
        %v3095 = vunpack.c.l.b16 %v2904
        %v3096 = vunpack.c.h.b16 %v2904
        %v3097 = vunpack.c.l.b16 %v2906
        %v3098 = vunpack.c.h.b16 %v2906
        %v3099 = vunpack.c.l.b16 %v2908
        %v3100 = vunpack.c.h.b16 %v2908
        %v3101 = vunpack.c.l.b16 %v2910
        %v3102 = vunpack.c.h.b16 %v2910
        %v3103 = vunpack.c.l.b16 %v2912
        %v3104 = vunpack.c.h.b16 %v2912
        %v3105 = vunpack.c.l.b16 %v2914
        %v3106 = vunpack.c.h.b16 %v2914
        %v3107 = vpack.c.b16 %v2979, %v2979
        %v3108 = vpack.c.b16 %v2980, %v2980
        %v3109 = vpack.c.b16 %v2981, %v2981
        %v3110 = vpack.c.b16 %v2982, %v2982
        %v3111 = vpack.c.b16 %v2983, %v2983
        %v3112 = vpack.c.b16 %v2984, %v2984
        %v3113 = vpack.c.b16 %v2985, %v2985
        %v3114 = vpack.c.b16 %v2986, %v2986
        %v3115 = vpack.c.b16 %v2987, %v2987
        %v3116 = vpack.c.b16 %v2988, %v2988
        %v3117 = vpack.c.b16 %v2989, %v2989
        %v3118 = vpack.c.b16 %v2990, %v2990
        %v3119 = vpack.c.b16 %v2991, %v2991
        %v3120 = vpack.c.b16 %v2992, %v2992
        %v3121 = vpack.c.b16 %v2993, %v2993
        %v3122 = vpack.c.b16 %v2994, %v2994
        %v3123 = vpack.c.b16 %v2995, %v2995
        %v3124 = vpack.c.b16 %v2996, %v2996
        %v3125 = vpack.c.b16 %v2997, %v2997
        %v3126 = vpack.c.b16 %v2998, %v2998
        %v3127 = vpack.c.b16 %v2999, %v2999
        %v3128 = vpack.c.b16 %v3000, %v3000
        %v3129 = vpack.c.b16 %v3001, %v3001
        %v3130 = vpack.c.b16 %v3002, %v3002
        %v3131 = vpack.c.b16 %v3003, %v3003
        %v3132 = vpack.c.b16 %v3004, %v3004
        %v3133 = vpack.c.b16 %v3005, %v3005
        %v3134 = vpack.c.b16 %v3006, %v3006
        %v3135 = vpack.c.b16 %v3007, %v3007
        %v3136 = vpack.c.b16 %v3008, %v3008
        %v3137 = vpack.c.b16 %v3009, %v3009
        %v3138 = vpack.c.b16 %v3010, %v3010
        %v3139 = vpack.c.b16 %v3011, %v3011
        %v3140 = vpack.c.b16 %v3012, %v3012
        %v3141 = vpack.c.b16 %v3013, %v3013
        %v3142 = vpack.c.b16 %v3014, %v3014
        %v3143 = vpack.c.b16 %v3015, %v3015
        %v3144 = vpack.c.b16 %v3016, %v3016
        %v3145 = vpack.c.b16 %v3017, %v3017
        %v3146 = vpack.c.b16 %v3018, %v3018
        %v3147 = vpack.c.b16 %v3019, %v3019
        %v3148 = vpack.c.b16 %v3020, %v3020
        %v3149 = vpack.c.b16 %v3021, %v3021
        %v3150 = vpack.c.b16 %v3022, %v3022
        %v3151 = vpack.c.b16 %v3023, %v3023
        %v3152 = vpack.c.b16 %v3024, %v3024
        %v3153 = vpack.c.b16 %v3025, %v3025
        %v3154 = vpack.c.b16 %v3026, %v3026
        %v3155 = vpack.c.b16 %v3027, %v3027
        %v3156 = vpack.c.b16 %v3028, %v3028
        %v3157 = vpack.c.b16 %v3029, %v3029
        %v3158 = vpack.c.b16 %v3030, %v3030
        %v3159 = vpack.c.b16 %v3031, %v3031
        %v3160 = vpack.c.b16 %v3032, %v3032
        %v3161 = vpack.c.b16 %v3033, %v3033
        %v3162 = vpack.c.b16 %v3034, %v3034
        %v3163 = vpack.c.b16 %v3035, %v3035
        %v3164 = vpack.c.b16 %v3036, %v3036
        %v3165 = vpack.c.b16 %v3037, %v3037
        %v3166 = vpack.c.b16 %v3038, %v3038
        %v3167 = vpack.c.b16 %v3039, %v3039
        %v3168 = vpack.c.b16 %v3040, %v3040
        %v3169 = vpack.c.b16 %v3041, %v3041
        %v3170 = vpack.c.b16 %v3042, %v3042
        %v3171 = vpack.c.b16 %v3043, %v3043
        %v3172 = vpack.c.b16 %v3044, %v3044
        %v3173 = vpack.c.b16 %v3045, %v3045
        %v3174 = vpack.c.b16 %v3046, %v3046
        %v3175 = vpack.c.b16 %v3047, %v3047
        %v3176 = vpack.c.b16 %v3048, %v3048
        %v3177 = vpack.c.b16 %v3049, %v3049
        %v3178 = vpack.c.b16 %v3050, %v3050
        %v3179 = vpack.c.b16 %v3051, %v3051
        %v3180 = vpack.c.b16 %v3052, %v3052
        %v3181 = vpack.c.b16 %v3053, %v3053
        %v3182 = vpack.c.b16 %v3054, %v3054
        %v3183 = vpack.c.b16 %v3055, %v3055
        %v3184 = vpack.c.b16 %v3056, %v3056
        %v3185 = vpack.c.b16 %v3057, %v3057
        %v3186 = vpack.c.b16 %v3058, %v3058
        %v3187 = vpack.c.b16 %v3059, %v3059
        %v3188 = vpack.c.b16 %v3060, %v3060
        %v3189 = vpack.c.b16 %v3061, %v3061
        %v3190 = vpack.c.b16 %v3062, %v3062
        %v3191 = vpack.c.b16 %v3063, %v3063
        %v3192 = vpack.c.b16 %v3064, %v3064
        %v3193 = vpack.c.b16 %v3065, %v3065
        %v3194 = vpack.c.b16 %v3066, %v3066
        %v3195 = vpack.c.b16 %v3067, %v3067
        %v3196 = vpack.c.b16 %v3068, %v3068
        %v3197 = vpack.c.b16 %v3069, %v3069
        %v3198 = vpack.c.b16 %v3070, %v3070
        %v3199 = vpack.c.b16 %v3071, %v3071
        %v3200 = vpack.c.b16 %v3072, %v3072
        %v3201 = vpack.c.b16 %v3073, %v3073
        %v3202 = vpack.c.b16 %v3074, %v3074
        %v3203 = vpack.c.b16 %v3075, %v3075
        %v3204 = vpack.c.b16 %v3076, %v3076
        %v3205 = vpack.c.b16 %v3077, %v3077
        %v3206 = vpack.c.b16 %v3078, %v3078
        %v3207 = vpack.c.b16 %v3079, %v3079
        %v3208 = vpack.c.b16 %v3080, %v3080
        %v3209 = vpack.c.b16 %v3081, %v3081
        %v3210 = vpack.c.b16 %v3082, %v3082
        %v3211 = vpack.c.b16 %v3083, %v3083
        %v3212 = vpack.c.b16 %v3084, %v3084
        %v3213 = vpack.c.b16 %v3085, %v3085
        %v3214 = vpack.c.b16 %v3086, %v3086
        %v3215 = vpack.c.b16 %v3087, %v3087
        %v3216 = vpack.c.b16 %v3088, %v3088
        %v3217 = vpack.c.b16 %v3089, %v3089
        %v3218 = vpack.c.b16 %v3090, %v3090
        %v3219 = vpack.c.b16 %v3091, %v3091
        %v3220 = vpack.c.b16 %v3092, %v3092
        %v3221 = vpack.c.b16 %v3093, %v3093
        %v3222 = vpack.c.b16 %v3094, %v3094
        %v3223 = vpack.c.b16 %v3095, %v3095
        %v3224 = vpack.c.b16 %v3096, %v3096
        %v3225 = vpack.c.b16 %v3097, %v3097
        %v3226 = vpack.c.b16 %v3098, %v3098
        %v3227 = vpack.c.b16 %v3099, %v3099
        %v3228 = vpack.c.b16 %v3100, %v3100
        %v3229 = vpack.c.b16 %v3101, %v3101
        %v3230 = vpack.c.b16 %v3102, %v3102
        %v3231 = vpack.c.b16 %v3103, %v3103
        %v3232 = vpack.c.b16 %v3104, %v3104
        %v3233 = vpack.c.b16 %v3105, %v3105
        %v3234 = vpack.c.b16 %v3106, %v3106
        %vm3235 = vsmask.f32 3328
        %vm3236 = vsmask.f32 7440
        %vm3237 = vmor %vm3235, %vm3236
        %v3239 = vshrl.u32 %v3107, 16
        %v3241 = vrot.slane %v3239, 4
        %v3242 = vshll.u32 %v3107, 16
        %v3244 = vrot.slane %v3242, 5
        %v3245 = vor.u32 %v3241, %v3244
        %v3246 = vrot.slane %v3245, 4
        %v3248 = vshll.u32 %v3108, 16
        %v3250 = vrot.slane %v3248, 5
        %v3251 = vsel %vm3237, %v3246, %v3250
        %v3252 = vshrl.u32 %v3108, 16
        %v3254 = vrot.slane %v3252, 4
        %v3255 = vor.u32 %v3254, %v3250
        %v3256 = vrot.slane %v3255, 4
        %v3258 = vshll.u32 %v3109, 16
        %v3260 = vrot.slane %v3258, 5
        %v3261 = vsel %vm3237, %v3256, %v3260
        %v3262 = vshrl.u32 %v3109, 16
        %v3264 = vrot.slane %v3262, 4
        %v3265 = vor.u32 %v3264, %v3260
        %v3266 = vrot.slane %v3265, 4
        %v3268 = vshll.u32 %v3110, 16
        %v3270 = vrot.slane %v3268, 5
        %v3271 = vsel %vm3237, %v3266, %v3270
        %v3273 = vshrl.u32 %v3111, 16
        %v3275 = vrot.slane %v3273, 4
        %v3276 = vshll.u32 %v3111, 16
        %v3278 = vrot.slane %v3276, 5
        %v3279 = vor.u32 %v3275, %v3278
        %v3280 = vrot.slane %v3279, 4
        %v3282 = vshll.u32 %v3112, 16
        %v3284 = vrot.slane %v3282, 5
        %v3285 = vsel %vm3237, %v3280, %v3284
        %v3286 = vshrl.u32 %v3112, 16
        %v3288 = vrot.slane %v3286, 4
        %v3289 = vor.u32 %v3288, %v3284
        %v3290 = vrot.slane %v3289, 4
        %v3292 = vshll.u32 %v3113, 16
        %v3294 = vrot.slane %v3292, 5
        %v3295 = vsel %vm3237, %v3290, %v3294
        %v3296 = vshrl.u32 %v3113, 16
        %v3298 = vrot.slane %v3296, 4
        %v3299 = vor.u32 %v3298, %v3294
        %v3300 = vrot.slane %v3299, 4
        %v3302 = vshll.u32 %v3114, 16
        %v3304 = vrot.slane %v3302, 5
        %v3305 = vsel %vm3237, %v3300, %v3304
        %v3307 = vshrl.u32 %v3115, 16
        %v3309 = vrot.slane %v3307, 4
        %v3310 = vshll.u32 %v3115, 16
        %v3312 = vrot.slane %v3310, 5
        %v3313 = vor.u32 %v3309, %v3312
        %v3314 = vrot.slane %v3313, 4
        %v3316 = vshll.u32 %v3116, 16
        %v3318 = vrot.slane %v3316, 5
        %v3319 = vsel %vm3237, %v3314, %v3318
        %v3320 = vshrl.u32 %v3116, 16
        %v3322 = vrot.slane %v3320, 4
        %v3323 = vor.u32 %v3322, %v3318
        %v3324 = vrot.slane %v3323, 4
        %v3326 = vshll.u32 %v3117, 16
        %v3328 = vrot.slane %v3326, 5
        %v3329 = vsel %vm3237, %v3324, %v3328
        %v3330 = vshrl.u32 %v3117, 16
        %v3332 = vrot.slane %v3330, 4
        %v3333 = vor.u32 %v3332, %v3328
        %v3334 = vrot.slane %v3333, 4
        %v3336 = vshll.u32 %v3118, 16
        %v3338 = vrot.slane %v3336, 5
        %v3339 = vsel %vm3237, %v3334, %v3338
        %v3341 = vshrl.u32 %v3119, 16
        %v3343 = vrot.slane %v3341, 4
        %v3344 = vshll.u32 %v3119, 16
        %v3346 = vrot.slane %v3344, 5
        %v3347 = vor.u32 %v3343, %v3346
        %v3348 = vrot.slane %v3347, 4
        %v3350 = vshll.u32 %v3120, 16
        %v3352 = vrot.slane %v3350, 5
        %v3353 = vsel %vm3237, %v3348, %v3352
        %v3354 = vshrl.u32 %v3120, 16
        %v3356 = vrot.slane %v3354, 4
        %v3357 = vor.u32 %v3356, %v3352
        %v3358 = vrot.slane %v3357, 4
        %v3360 = vshll.u32 %v3121, 16
        %v3362 = vrot.slane %v3360, 5
        %v3363 = vsel %vm3237, %v3358, %v3362
        %v3364 = vshrl.u32 %v3121, 16
        %v3366 = vrot.slane %v3364, 4
        %v3367 = vor.u32 %v3366, %v3362
        %v3368 = vrot.slane %v3367, 4
        %v3370 = vshll.u32 %v3122, 16
        %v3372 = vrot.slane %v3370, 5
        %v3373 = vsel %vm3237, %v3368, %v3372
        %v3375 = vshrl.u32 %v3123, 16
        %v3377 = vrot.slane %v3375, 4
        %v3378 = vshll.u32 %v3123, 16
        %v3380 = vrot.slane %v3378, 5
        %v3381 = vor.u32 %v3377, %v3380
        %v3382 = vrot.slane %v3381, 4
        %v3384 = vshll.u32 %v3124, 16
        %v3386 = vrot.slane %v3384, 5
        %v3387 = vsel %vm3237, %v3382, %v3386
        %v3388 = vshrl.u32 %v3124, 16
        %v3390 = vrot.slane %v3388, 4
        %v3391 = vor.u32 %v3390, %v3386
        %v3392 = vrot.slane %v3391, 4
        %v3394 = vshll.u32 %v3125, 16
        %v3396 = vrot.slane %v3394, 5
        %v3397 = vsel %vm3237, %v3392, %v3396
        %v3398 = vshrl.u32 %v3125, 16
        %v3400 = vrot.slane %v3398, 4
        %v3401 = vor.u32 %v3400, %v3396
        %v3402 = vrot.slane %v3401, 4
        %v3404 = vshll.u32 %v3126, 16
        %v3406 = vrot.slane %v3404, 5
        %v3407 = vsel %vm3237, %v3402, %v3406
        %v3409 = vshrl.u32 %v3127, 16
        %v3411 = vrot.slane %v3409, 4
        %v3412 = vshll.u32 %v3127, 16
        %v3414 = vrot.slane %v3412, 5
        %v3415 = vor.u32 %v3411, %v3414
        %v3416 = vrot.slane %v3415, 4
        %v3418 = vshll.u32 %v3128, 16
        %v3420 = vrot.slane %v3418, 5
        %v3421 = vsel %vm3237, %v3416, %v3420
        %v3422 = vshrl.u32 %v3128, 16
        %v3424 = vrot.slane %v3422, 4
        %v3425 = vor.u32 %v3424, %v3420
        %v3426 = vrot.slane %v3425, 4
        %v3428 = vshll.u32 %v3129, 16
        %v3430 = vrot.slane %v3428, 5
        %v3431 = vsel %vm3237, %v3426, %v3430
        %v3432 = vshrl.u32 %v3129, 16
        %v3434 = vrot.slane %v3432, 4
        %v3435 = vor.u32 %v3434, %v3430
        %v3436 = vrot.slane %v3435, 4
        %v3438 = vshll.u32 %v3130, 16
        %v3440 = vrot.slane %v3438, 5
        %v3441 = vsel %vm3237, %v3436, %v3440
        %v3443 = vshrl.u32 %v3131, 16
        %v3445 = vrot.slane %v3443, 4
        %v3446 = vshll.u32 %v3131, 16
        %v3448 = vrot.slane %v3446, 5
        %v3449 = vor.u32 %v3445, %v3448
        %v3450 = vrot.slane %v3449, 4
        %v3452 = vshll.u32 %v3132, 16
        %v3454 = vrot.slane %v3452, 5
        %v3455 = vsel %vm3237, %v3450, %v3454
        %v3456 = vshrl.u32 %v3132, 16
        %v3458 = vrot.slane %v3456, 4
        %v3459 = vor.u32 %v3458, %v3454
        %v3460 = vrot.slane %v3459, 4
        %v3462 = vshll.u32 %v3133, 16
        %v3464 = vrot.slane %v3462, 5
        %v3465 = vsel %vm3237, %v3460, %v3464
        %v3466 = vshrl.u32 %v3133, 16
        %v3468 = vrot.slane %v3466, 4
        %v3469 = vor.u32 %v3468, %v3464
        %v3470 = vrot.slane %v3469, 4
        %v3472 = vshll.u32 %v3134, 16
        %v3474 = vrot.slane %v3472, 5
        %v3475 = vsel %vm3237, %v3470, %v3474
        %v3477 = vshrl.u32 %v3135, 16
        %v3479 = vrot.slane %v3477, 4
        %v3480 = vshll.u32 %v3135, 16
        %v3482 = vrot.slane %v3480, 5
        %v3483 = vor.u32 %v3479, %v3482
        %v3484 = vrot.slane %v3483, 4
        %v3486 = vshll.u32 %v3136, 16
        %v3488 = vrot.slane %v3486, 5
        %v3489 = vsel %vm3237, %v3484, %v3488
        %v3490 = vshrl.u32 %v3136, 16
        %v3492 = vrot.slane %v3490, 4
        %v3493 = vor.u32 %v3492, %v3488
        %v3494 = vrot.slane %v3493, 4
        %v3496 = vshll.u32 %v3137, 16
        %v3498 = vrot.slane %v3496, 5
        %v3499 = vsel %vm3237, %v3494, %v3498
        %v3500 = vshrl.u32 %v3137, 16
        %v3502 = vrot.slane %v3500, 4
        %v3503 = vor.u32 %v3502, %v3498
        %v3504 = vrot.slane %v3503, 4
        %v3506 = vshll.u32 %v3138, 16
        %v3508 = vrot.slane %v3506, 5
        %v3509 = vsel %vm3237, %v3504, %v3508
        %v3511 = vshrl.u32 %v3139, 16
        %v3513 = vrot.slane %v3511, 4
        %v3514 = vshll.u32 %v3139, 16
        %v3516 = vrot.slane %v3514, 5
        %v3517 = vor.u32 %v3513, %v3516
        %v3518 = vrot.slane %v3517, 4
        %v3520 = vshll.u32 %v3140, 16
        %v3522 = vrot.slane %v3520, 5
        %v3523 = vsel %vm3237, %v3518, %v3522
        %v3524 = vshrl.u32 %v3140, 16
        %v3526 = vrot.slane %v3524, 4
        %v3527 = vor.u32 %v3526, %v3522
        %v3528 = vrot.slane %v3527, 4
        %v3530 = vshll.u32 %v3141, 16
        %v3532 = vrot.slane %v3530, 5
        %v3533 = vsel %vm3237, %v3528, %v3532
        %v3534 = vshrl.u32 %v3141, 16
        %v3536 = vrot.slane %v3534, 4
        %v3537 = vor.u32 %v3536, %v3532
        %v3538 = vrot.slane %v3537, 4
        %v3540 = vshll.u32 %v3142, 16
        %v3542 = vrot.slane %v3540, 5
        %v3543 = vsel %vm3237, %v3538, %v3542
        %v3545 = vshrl.u32 %v3143, 16
        %v3547 = vrot.slane %v3545, 4
        %v3548 = vshll.u32 %v3143, 16
        %v3550 = vrot.slane %v3548, 5
        %v3551 = vor.u32 %v3547, %v3550
        %v3552 = vrot.slane %v3551, 4
        %v3554 = vshll.u32 %v3144, 16
        %v3556 = vrot.slane %v3554, 5
        %v3557 = vsel %vm3237, %v3552, %v3556
        %v3558 = vshrl.u32 %v3144, 16
        %v3560 = vrot.slane %v3558, 4
        %v3561 = vor.u32 %v3560, %v3556
        %v3562 = vrot.slane %v3561, 4
        %v3564 = vshll.u32 %v3145, 16
        %v3566 = vrot.slane %v3564, 5
        %v3567 = vsel %vm3237, %v3562, %v3566
        %v3568 = vshrl.u32 %v3145, 16
        %v3570 = vrot.slane %v3568, 4
        %v3571 = vor.u32 %v3570, %v3566
        %v3572 = vrot.slane %v3571, 4
        %v3574 = vshll.u32 %v3146, 16
        %v3576 = vrot.slane %v3574, 5
        %v3577 = vsel %vm3237, %v3572, %v3576
        %v3579 = vshrl.u32 %v3147, 16
        %v3581 = vrot.slane %v3579, 4
        %v3582 = vshll.u32 %v3147, 16
        %v3584 = vrot.slane %v3582, 5
        %v3585 = vor.u32 %v3581, %v3584
        %v3586 = vrot.slane %v3585, 4
        %v3588 = vshll.u32 %v3148, 16
        %v3590 = vrot.slane %v3588, 5
        %v3591 = vsel %vm3237, %v3586, %v3590
        %v3592 = vshrl.u32 %v3148, 16
        %v3594 = vrot.slane %v3592, 4
        %v3595 = vor.u32 %v3594, %v3590
        %v3596 = vrot.slane %v3595, 4
        %v3598 = vshll.u32 %v3149, 16
        %v3600 = vrot.slane %v3598, 5
        %v3601 = vsel %vm3237, %v3596, %v3600
        %v3602 = vshrl.u32 %v3149, 16
        %v3604 = vrot.slane %v3602, 4
        %v3605 = vor.u32 %v3604, %v3600
        %v3606 = vrot.slane %v3605, 4
        %v3608 = vshll.u32 %v3150, 16
        %v3610 = vrot.slane %v3608, 5
        %v3611 = vsel %vm3237, %v3606, %v3610
        %v3613 = vshrl.u32 %v3151, 16
        %v3615 = vrot.slane %v3613, 4
        %v3616 = vshll.u32 %v3151, 16
        %v3618 = vrot.slane %v3616, 5
        %v3619 = vor.u32 %v3615, %v3618
        %v3620 = vrot.slane %v3619, 4
        %v3622 = vshll.u32 %v3152, 16
        %v3624 = vrot.slane %v3622, 5
        %v3625 = vsel %vm3237, %v3620, %v3624
        %v3626 = vshrl.u32 %v3152, 16
        %v3628 = vrot.slane %v3626, 4
        %v3629 = vor.u32 %v3628, %v3624
        %v3630 = vrot.slane %v3629, 4
        %v3632 = vshll.u32 %v3153, 16
        %v3634 = vrot.slane %v3632, 5
        %v3635 = vsel %vm3237, %v3630, %v3634
        %v3636 = vshrl.u32 %v3153, 16
        %v3638 = vrot.slane %v3636, 4
        %v3639 = vor.u32 %v3638, %v3634
        %v3640 = vrot.slane %v3639, 4
        %v3642 = vshll.u32 %v3154, 16
        %v3644 = vrot.slane %v3642, 5
        %v3645 = vsel %vm3237, %v3640, %v3644
        %v3647 = vshrl.u32 %v3155, 16
        %v3649 = vrot.slane %v3647, 4
        %v3650 = vshll.u32 %v3155, 16
        %v3652 = vrot.slane %v3650, 5
        %v3653 = vor.u32 %v3649, %v3652
        %v3654 = vrot.slane %v3653, 4
        %v3656 = vshll.u32 %v3156, 16
        %v3658 = vrot.slane %v3656, 5
        %v3659 = vsel %vm3237, %v3654, %v3658
        %v3660 = vshrl.u32 %v3156, 16
        %v3662 = vrot.slane %v3660, 4
        %v3663 = vor.u32 %v3662, %v3658
        %v3664 = vrot.slane %v3663, 4
        %v3666 = vshll.u32 %v3157, 16
        %v3668 = vrot.slane %v3666, 5
        %v3669 = vsel %vm3237, %v3664, %v3668
        %v3670 = vshrl.u32 %v3157, 16
        %v3672 = vrot.slane %v3670, 4
        %v3673 = vor.u32 %v3672, %v3668
        %v3674 = vrot.slane %v3673, 4
        %v3676 = vshll.u32 %v3158, 16
        %v3678 = vrot.slane %v3676, 5
        %v3679 = vsel %vm3237, %v3674, %v3678
        %v3681 = vshrl.u32 %v3159, 16
        %v3683 = vrot.slane %v3681, 4
        %v3684 = vshll.u32 %v3159, 16
        %v3686 = vrot.slane %v3684, 5
        %v3687 = vor.u32 %v3683, %v3686
        %v3688 = vrot.slane %v3687, 4
        %v3690 = vshll.u32 %v3160, 16
        %v3692 = vrot.slane %v3690, 5
        %v3693 = vsel %vm3237, %v3688, %v3692
        %v3694 = vshrl.u32 %v3160, 16
        %v3696 = vrot.slane %v3694, 4
        %v3697 = vor.u32 %v3696, %v3692
        %v3698 = vrot.slane %v3697, 4
        %v3700 = vshll.u32 %v3161, 16
        %v3702 = vrot.slane %v3700, 5
        %v3703 = vsel %vm3237, %v3698, %v3702
        %v3704 = vshrl.u32 %v3161, 16
        %v3706 = vrot.slane %v3704, 4
        %v3707 = vor.u32 %v3706, %v3702
        %v3708 = vrot.slane %v3707, 4
        %v3710 = vshll.u32 %v3162, 16
        %v3712 = vrot.slane %v3710, 5
        %v3713 = vsel %vm3237, %v3708, %v3712
        %v3715 = vshrl.u32 %v3163, 16
        %v3717 = vrot.slane %v3715, 4
        %v3718 = vshll.u32 %v3163, 16
        %v3720 = vrot.slane %v3718, 5
        %v3721 = vor.u32 %v3717, %v3720
        %v3722 = vrot.slane %v3721, 4
        %v3724 = vshll.u32 %v3164, 16
        %v3726 = vrot.slane %v3724, 5
        %v3727 = vsel %vm3237, %v3722, %v3726
        %v3728 = vshrl.u32 %v3164, 16
        %v3730 = vrot.slane %v3728, 4
        %v3731 = vor.u32 %v3730, %v3726
        %v3732 = vrot.slane %v3731, 4
        %v3734 = vshll.u32 %v3165, 16
        %v3736 = vrot.slane %v3734, 5
        %v3737 = vsel %vm3237, %v3732, %v3736
        %v3738 = vshrl.u32 %v3165, 16
        %v3740 = vrot.slane %v3738, 4
        %v3741 = vor.u32 %v3740, %v3736
        %v3742 = vrot.slane %v3741, 4
        %v3744 = vshll.u32 %v3166, 16
        %v3746 = vrot.slane %v3744, 5
        %v3747 = vsel %vm3237, %v3742, %v3746
        %v3749 = vshrl.u32 %v3167, 16
        %v3751 = vrot.slane %v3749, 4
        %v3752 = vshll.u32 %v3167, 16
        %v3754 = vrot.slane %v3752, 5
        %v3755 = vor.u32 %v3751, %v3754
        %v3756 = vrot.slane %v3755, 4
        %v3758 = vshll.u32 %v3168, 16
        %v3760 = vrot.slane %v3758, 5
        %v3761 = vsel %vm3237, %v3756, %v3760
        %v3762 = vshrl.u32 %v3168, 16
        %v3764 = vrot.slane %v3762, 4
        %v3765 = vor.u32 %v3764, %v3760
        %v3766 = vrot.slane %v3765, 4
        %v3768 = vshll.u32 %v3169, 16
        %v3770 = vrot.slane %v3768, 5
        %v3771 = vsel %vm3237, %v3766, %v3770
        %v3772 = vshrl.u32 %v3169, 16
        %v3774 = vrot.slane %v3772, 4
        %v3775 = vor.u32 %v3774, %v3770
        %v3776 = vrot.slane %v3775, 4
        %v3778 = vshll.u32 %v3170, 16
        %v3780 = vrot.slane %v3778, 5
        %v3781 = vsel %vm3237, %v3776, %v3780
        %v3783 = vshrl.u32 %v3171, 16
        %v3785 = vrot.slane %v3783, 4
        %v3786 = vshll.u32 %v3171, 16
        %v3788 = vrot.slane %v3786, 5
        %v3789 = vor.u32 %v3785, %v3788
        %v3790 = vrot.slane %v3789, 4
        %v3792 = vshll.u32 %v3172, 16
        %v3794 = vrot.slane %v3792, 5
        %v3795 = vsel %vm3237, %v3790, %v3794
        %v3796 = vshrl.u32 %v3172, 16
        %v3798 = vrot.slane %v3796, 4
        %v3799 = vor.u32 %v3798, %v3794
        %v3800 = vrot.slane %v3799, 4
        %v3802 = vshll.u32 %v3173, 16
        %v3804 = vrot.slane %v3802, 5
        %v3805 = vsel %vm3237, %v3800, %v3804
        %v3806 = vshrl.u32 %v3173, 16
        %v3808 = vrot.slane %v3806, 4
        %v3809 = vor.u32 %v3808, %v3804
        %v3810 = vrot.slane %v3809, 4
        %v3812 = vshll.u32 %v3174, 16
        %v3814 = vrot.slane %v3812, 5
        %v3815 = vsel %vm3237, %v3810, %v3814
        %v3817 = vshrl.u32 %v3175, 16
        %v3819 = vrot.slane %v3817, 4
        %v3820 = vshll.u32 %v3175, 16
        %v3822 = vrot.slane %v3820, 5
        %v3823 = vor.u32 %v3819, %v3822
        %v3824 = vrot.slane %v3823, 4
        %v3826 = vshll.u32 %v3176, 16
        %v3828 = vrot.slane %v3826, 5
        %v3829 = vsel %vm3237, %v3824, %v3828
        %v3830 = vshrl.u32 %v3176, 16
        %v3832 = vrot.slane %v3830, 4
        %v3833 = vor.u32 %v3832, %v3828
        %v3834 = vrot.slane %v3833, 4
        %v3836 = vshll.u32 %v3177, 16
        %v3838 = vrot.slane %v3836, 5
        %v3839 = vsel %vm3237, %v3834, %v3838
        %v3840 = vshrl.u32 %v3177, 16
        %v3842 = vrot.slane %v3840, 4
        %v3843 = vor.u32 %v3842, %v3838
        %v3844 = vrot.slane %v3843, 4
        %v3846 = vshll.u32 %v3178, 16
        %v3848 = vrot.slane %v3846, 5
        %v3849 = vsel %vm3237, %v3844, %v3848
        %v3851 = vshrl.u32 %v3179, 16
        %v3853 = vrot.slane %v3851, 4
        %v3854 = vshll.u32 %v3179, 16
        %v3856 = vrot.slane %v3854, 5
        %v3857 = vor.u32 %v3853, %v3856
        %v3858 = vrot.slane %v3857, 4
        %v3860 = vshll.u32 %v3180, 16
        %v3862 = vrot.slane %v3860, 5
        %v3863 = vsel %vm3237, %v3858, %v3862
        %v3864 = vshrl.u32 %v3180, 16
        %v3866 = vrot.slane %v3864, 4
        %v3867 = vor.u32 %v3866, %v3862
        %v3868 = vrot.slane %v3867, 4
        %v3870 = vshll.u32 %v3181, 16
        %v3872 = vrot.slane %v3870, 5
        %v3873 = vsel %vm3237, %v3868, %v3872
        %v3874 = vshrl.u32 %v3181, 16
        %v3876 = vrot.slane %v3874, 4
        %v3877 = vor.u32 %v3876, %v3872
        %v3878 = vrot.slane %v3877, 4
        %v3880 = vshll.u32 %v3182, 16
        %v3882 = vrot.slane %v3880, 5
        %v3883 = vsel %vm3237, %v3878, %v3882
        %v3885 = vshrl.u32 %v3183, 16
        %v3887 = vrot.slane %v3885, 4
        %v3888 = vshll.u32 %v3183, 16
        %v3890 = vrot.slane %v3888, 5
        %v3891 = vor.u32 %v3887, %v3890
        %v3892 = vrot.slane %v3891, 4
        %v3894 = vshll.u32 %v3184, 16
        %v3896 = vrot.slane %v3894, 5
        %v3897 = vsel %vm3237, %v3892, %v3896
        %v3898 = vshrl.u32 %v3184, 16
        %v3900 = vrot.slane %v3898, 4
        %v3901 = vor.u32 %v3900, %v3896
        %v3902 = vrot.slane %v3901, 4
        %v3904 = vshll.u32 %v3185, 16
        %v3906 = vrot.slane %v3904, 5
        %v3907 = vsel %vm3237, %v3902, %v3906
        %v3908 = vshrl.u32 %v3185, 16
        %v3910 = vrot.slane %v3908, 4
        %v3911 = vor.u32 %v3910, %v3906
        %v3912 = vrot.slane %v3911, 4
        %v3914 = vshll.u32 %v3186, 16
        %v3916 = vrot.slane %v3914, 5
        %v3917 = vsel %vm3237, %v3912, %v3916
        %v3919 = vshrl.u32 %v3187, 16
        %v3921 = vrot.slane %v3919, 4
        %v3922 = vshll.u32 %v3187, 16
        %v3924 = vrot.slane %v3922, 5
        %v3925 = vor.u32 %v3921, %v3924
        %v3926 = vrot.slane %v3925, 4
        %v3928 = vshll.u32 %v3188, 16
        %v3930 = vrot.slane %v3928, 5
        %v3931 = vsel %vm3237, %v3926, %v3930
        %v3932 = vshrl.u32 %v3188, 16
        %v3934 = vrot.slane %v3932, 4
        %v3935 = vor.u32 %v3934, %v3930
        %v3936 = vrot.slane %v3935, 4
        %v3938 = vshll.u32 %v3189, 16
        %v3940 = vrot.slane %v3938, 5
        %v3941 = vsel %vm3237, %v3936, %v3940
        %v3942 = vshrl.u32 %v3189, 16
        %v3944 = vrot.slane %v3942, 4
        %v3945 = vor.u32 %v3944, %v3940
        %v3946 = vrot.slane %v3945, 4
        %v3948 = vshll.u32 %v3190, 16
        %v3950 = vrot.slane %v3948, 5
        %v3951 = vsel %vm3237, %v3946, %v3950
        %v3953 = vshrl.u32 %v3191, 16
        %v3955 = vrot.slane %v3953, 4
        %v3956 = vshll.u32 %v3191, 16
        %v3958 = vrot.slane %v3956, 5
        %v3959 = vor.u32 %v3955, %v3958
        %v3960 = vrot.slane %v3959, 4
        %v3962 = vshll.u32 %v3192, 16
        %v3964 = vrot.slane %v3962, 5
        %v3965 = vsel %vm3237, %v3960, %v3964
        %v3966 = vshrl.u32 %v3192, 16
        %v3968 = vrot.slane %v3966, 4
        %v3969 = vor.u32 %v3968, %v3964
        %v3970 = vrot.slane %v3969, 4
        %v3972 = vshll.u32 %v3193, 16
        %v3974 = vrot.slane %v3972, 5
        %v3975 = vsel %vm3237, %v3970, %v3974
        %v3976 = vshrl.u32 %v3193, 16
        %v3978 = vrot.slane %v3976, 4
        %v3979 = vor.u32 %v3978, %v3974
        %v3980 = vrot.slane %v3979, 4
        %v3982 = vshll.u32 %v3194, 16
        %v3984 = vrot.slane %v3982, 5
        %v3985 = vsel %vm3237, %v3980, %v3984
        %v3987 = vshrl.u32 %v3195, 16
        %v3989 = vrot.slane %v3987, 4
        %v3990 = vshll.u32 %v3195, 16
        %v3992 = vrot.slane %v3990, 5
        %v3993 = vor.u32 %v3989, %v3992
        %v3994 = vrot.slane %v3993, 4
        %v3996 = vshll.u32 %v3196, 16
        %v3998 = vrot.slane %v3996, 5
        %v3999 = vsel %vm3237, %v3994, %v3998
        %v4000 = vshrl.u32 %v3196, 16
        %v4002 = vrot.slane %v4000, 4
        %v4003 = vor.u32 %v4002, %v3998
        %v4004 = vrot.slane %v4003, 4
        %v4006 = vshll.u32 %v3197, 16
        %v4008 = vrot.slane %v4006, 5
        %v4009 = vsel %vm3237, %v4004, %v4008
        %v4010 = vshrl.u32 %v3197, 16
        %v4012 = vrot.slane %v4010, 4
        %v4013 = vor.u32 %v4012, %v4008
        %v4014 = vrot.slane %v4013, 4
        %v4016 = vshll.u32 %v3198, 16
        %v4018 = vrot.slane %v4016, 5
        %v4019 = vsel %vm3237, %v4014, %v4018
        %v4021 = vshrl.u32 %v3199, 16
        %v4023 = vrot.slane %v4021, 4
        %v4024 = vshll.u32 %v3199, 16
        %v4026 = vrot.slane %v4024, 5
        %v4027 = vor.u32 %v4023, %v4026
        %v4028 = vrot.slane %v4027, 4
        %v4030 = vshll.u32 %v3200, 16
        %v4032 = vrot.slane %v4030, 5
        %v4033 = vsel %vm3237, %v4028, %v4032
        %v4034 = vshrl.u32 %v3200, 16
        %v4036 = vrot.slane %v4034, 4
        %v4037 = vor.u32 %v4036, %v4032
        %v4038 = vrot.slane %v4037, 4
        %v4040 = vshll.u32 %v3201, 16
        %v4042 = vrot.slane %v4040, 5
        %v4043 = vsel %vm3237, %v4038, %v4042
        %v4044 = vshrl.u32 %v3201, 16
        %v4046 = vrot.slane %v4044, 4
        %v4047 = vor.u32 %v4046, %v4042
        %v4048 = vrot.slane %v4047, 4
        %v4050 = vshll.u32 %v3202, 16
        %v4052 = vrot.slane %v4050, 5
        %v4053 = vsel %vm3237, %v4048, %v4052
        %v4055 = vshrl.u32 %v3203, 16
        %v4057 = vrot.slane %v4055, 4
        %v4058 = vshll.u32 %v3203, 16
        %v4060 = vrot.slane %v4058, 5
        %v4061 = vor.u32 %v4057, %v4060
        %v4062 = vrot.slane %v4061, 4
        %v4064 = vshll.u32 %v3204, 16
        %v4066 = vrot.slane %v4064, 5
        %v4067 = vsel %vm3237, %v4062, %v4066
        %v4068 = vshrl.u32 %v3204, 16
        %v4070 = vrot.slane %v4068, 4
        %v4071 = vor.u32 %v4070, %v4066
        %v4072 = vrot.slane %v4071, 4
        %v4074 = vshll.u32 %v3205, 16
        %v4076 = vrot.slane %v4074, 5
        %v4077 = vsel %vm3237, %v4072, %v4076
        %v4078 = vshrl.u32 %v3205, 16
        %v4080 = vrot.slane %v4078, 4
        %v4081 = vor.u32 %v4080, %v4076
        %v4082 = vrot.slane %v4081, 4
        %v4084 = vshll.u32 %v3206, 16
        %v4086 = vrot.slane %v4084, 5
        %v4087 = vsel %vm3237, %v4082, %v4086
        %v4089 = vshrl.u32 %v3207, 16
        %v4091 = vrot.slane %v4089, 4
        %v4092 = vshll.u32 %v3207, 16
        %v4094 = vrot.slane %v4092, 5
        %v4095 = vor.u32 %v4091, %v4094
        %v4096 = vrot.slane %v4095, 4
        %v4098 = vshll.u32 %v3208, 16
        %v4100 = vrot.slane %v4098, 5
        %v4101 = vsel %vm3237, %v4096, %v4100
        %v4102 = vshrl.u32 %v3208, 16
        %v4104 = vrot.slane %v4102, 4
        %v4105 = vor.u32 %v4104, %v4100
        %v4106 = vrot.slane %v4105, 4
        %v4108 = vshll.u32 %v3209, 16
        %v4110 = vrot.slane %v4108, 5
        %v4111 = vsel %vm3237, %v4106, %v4110
        %v4112 = vshrl.u32 %v3209, 16
        %v4114 = vrot.slane %v4112, 4
        %v4115 = vor.u32 %v4114, %v4110
        %v4116 = vrot.slane %v4115, 4
        %v4118 = vshll.u32 %v3210, 16
        %v4120 = vrot.slane %v4118, 5
        %v4121 = vsel %vm3237, %v4116, %v4120
        %v4123 = vshrl.u32 %v3211, 16
        %v4125 = vrot.slane %v4123, 4
        %v4126 = vshll.u32 %v3211, 16
        %v4128 = vrot.slane %v4126, 5
        %v4129 = vor.u32 %v4125, %v4128
        %v4130 = vrot.slane %v4129, 4
        %v4132 = vshll.u32 %v3212, 16
        %v4134 = vrot.slane %v4132, 5
        %v4135 = vsel %vm3237, %v4130, %v4134
        %v4136 = vshrl.u32 %v3212, 16
        %v4138 = vrot.slane %v4136, 4
        %v4139 = vor.u32 %v4138, %v4134
        %v4140 = vrot.slane %v4139, 4
        %v4142 = vshll.u32 %v3213, 16
        %v4144 = vrot.slane %v4142, 5
        %v4145 = vsel %vm3237, %v4140, %v4144
        %v4146 = vshrl.u32 %v3213, 16
        %v4148 = vrot.slane %v4146, 4
        %v4149 = vor.u32 %v4148, %v4144
        %v4150 = vrot.slane %v4149, 4
        %v4152 = vshll.u32 %v3214, 16
        %v4154 = vrot.slane %v4152, 5
        %v4155 = vsel %vm3237, %v4150, %v4154
        %v4157 = vshrl.u32 %v3215, 16
        %v4159 = vrot.slane %v4157, 4
        %v4160 = vshll.u32 %v3215, 16
        %v4162 = vrot.slane %v4160, 5
        %v4163 = vor.u32 %v4159, %v4162
        %v4164 = vrot.slane %v4163, 4
        %v4166 = vshll.u32 %v3216, 16
        %v4168 = vrot.slane %v4166, 5
        %v4169 = vsel %vm3237, %v4164, %v4168
        %v4170 = vshrl.u32 %v3216, 16
        %v4172 = vrot.slane %v4170, 4
        %v4173 = vor.u32 %v4172, %v4168
        %v4174 = vrot.slane %v4173, 4
        %v4176 = vshll.u32 %v3217, 16
        %v4178 = vrot.slane %v4176, 5
        %v4179 = vsel %vm3237, %v4174, %v4178
        %v4180 = vshrl.u32 %v3217, 16
        %v4182 = vrot.slane %v4180, 4
        %v4183 = vor.u32 %v4182, %v4178
        %v4184 = vrot.slane %v4183, 4
        %v4186 = vshll.u32 %v3218, 16
        %v4188 = vrot.slane %v4186, 5
        %v4189 = vsel %vm3237, %v4184, %v4188
        %v4191 = vshrl.u32 %v3219, 16
        %v4193 = vrot.slane %v4191, 4
        %v4194 = vshll.u32 %v3219, 16
        %v4196 = vrot.slane %v4194, 5
        %v4197 = vor.u32 %v4193, %v4196
        %v4198 = vrot.slane %v4197, 4
        %v4200 = vshll.u32 %v3220, 16
        %v4202 = vrot.slane %v4200, 5
        %v4203 = vsel %vm3237, %v4198, %v4202
        %v4204 = vshrl.u32 %v3220, 16
        %v4206 = vrot.slane %v4204, 4
        %v4207 = vor.u32 %v4206, %v4202
        %v4208 = vrot.slane %v4207, 4
        %v4210 = vshll.u32 %v3221, 16
        %v4212 = vrot.slane %v4210, 5
        %v4213 = vsel %vm3237, %v4208, %v4212
        %v4214 = vshrl.u32 %v3221, 16
        %v4216 = vrot.slane %v4214, 4
        %v4217 = vor.u32 %v4216, %v4212
        %v4218 = vrot.slane %v4217, 4
        %v4220 = vshll.u32 %v3222, 16
        %v4222 = vrot.slane %v4220, 5
        %v4223 = vsel %vm3237, %v4218, %v4222
        %v4225 = vshrl.u32 %v3223, 16
        %v4227 = vrot.slane %v4225, 4
        %v4228 = vshll.u32 %v3223, 16
        %v4230 = vrot.slane %v4228, 5
        %v4231 = vor.u32 %v4227, %v4230
        %v4232 = vrot.slane %v4231, 4
        %v4234 = vshll.u32 %v3224, 16
        %v4236 = vrot.slane %v4234, 5
        %v4237 = vsel %vm3237, %v4232, %v4236
        %v4238 = vshrl.u32 %v3224, 16
        %v4240 = vrot.slane %v4238, 4
        %v4241 = vor.u32 %v4240, %v4236
        %v4242 = vrot.slane %v4241, 4
        %v4244 = vshll.u32 %v3225, 16
        %v4246 = vrot.slane %v4244, 5
        %v4247 = vsel %vm3237, %v4242, %v4246
        %v4248 = vshrl.u32 %v3225, 16
        %v4250 = vrot.slane %v4248, 4
        %v4251 = vor.u32 %v4250, %v4246
        %v4252 = vrot.slane %v4251, 4
        %v4254 = vshll.u32 %v3226, 16
        %v4256 = vrot.slane %v4254, 5
        %v4257 = vsel %vm3237, %v4252, %v4256
        %v4259 = vshrl.u32 %v3227, 16
        %v4261 = vrot.slane %v4259, 4
        %v4262 = vshll.u32 %v3227, 16
        %v4264 = vrot.slane %v4262, 5
        %v4265 = vor.u32 %v4261, %v4264
        %v4266 = vrot.slane %v4265, 4
        %v4268 = vshll.u32 %v3228, 16
        %v4270 = vrot.slane %v4268, 5
        %v4271 = vsel %vm3237, %v4266, %v4270
        %v4272 = vshrl.u32 %v3228, 16
        %v4274 = vrot.slane %v4272, 4
        %v4275 = vor.u32 %v4274, %v4270
        %v4276 = vrot.slane %v4275, 4
        %v4278 = vshll.u32 %v3229, 16
        %v4280 = vrot.slane %v4278, 5
        %v4281 = vsel %vm3237, %v4276, %v4280
        %v4282 = vshrl.u32 %v3229, 16
        %v4284 = vrot.slane %v4282, 4
        %v4285 = vor.u32 %v4284, %v4280
        %v4286 = vrot.slane %v4285, 4
        %v4288 = vshll.u32 %v3230, 16
        %v4290 = vrot.slane %v4288, 5
        %v4291 = vsel %vm3237, %v4286, %v4290
        %v4293 = vshrl.u32 %v3231, 16
        %v4295 = vrot.slane %v4293, 4
        %v4296 = vshll.u32 %v3231, 16
        %v4298 = vrot.slane %v4296, 5
        %v4299 = vor.u32 %v4295, %v4298
        %v4300 = vrot.slane %v4299, 4
        %v4302 = vshll.u32 %v3232, 16
        %v4304 = vrot.slane %v4302, 5
        %v4305 = vsel %vm3237, %v4300, %v4304
        %v4306 = vshrl.u32 %v3232, 16
        %v4308 = vrot.slane %v4306, 4
        %v4309 = vor.u32 %v4308, %v4304
        %v4310 = vrot.slane %v4309, 4
        %v4312 = vshll.u32 %v3233, 16
        %v4314 = vrot.slane %v4312, 5
        %v4315 = vsel %vm3237, %v4310, %v4314
        %v4316 = vshrl.u32 %v3233, 16
        %v4318 = vrot.slane %v4316, 4
        %v4319 = vor.u32 %v4318, %v4314
        %v4320 = vrot.slane %v4319, 4
        %v4322 = vshll.u32 %v3234, 16
        %v4324 = vrot.slane %v4322, 5
        %v4325 = vsel %vm3237, %v4320, %v4324
        %v4326 = vld [vmem:[%s1] sm:$0xf]
        %v4327 = vld [vmem:[%s1 + $0x4] sm:$0xf]
        %v4328 = vld [vmem:[%s1 + $0x8] sm:$0xf]
        %v4329 = vld [vmem:[%s1 + $0xc] sm:$0xf]
        %v4330 = vld [vmem:[%s2] sm:$0xff]
        %v4331 = vld [vmem:[%s2 + $0x8] sm:$0xff]
        %v4332 = vld [vmem:[%s2 + $0x10] sm:$0xff]
        %v4333 = vld [vmem:[%s2 + $0x18] sm:$0xff]
        %4335 = vset.pattern.permute.xlu0 0
        %4336 = vperm.xlu0 %4335, %v4330
        %v4337 = vpop.permute.xlu0 %4336
        %4340 = vset.pattern.permute.xlu0 0
        %4341 = vperm.xlu0 %4340, %v4331
        %v4342 = vpop.permute.xlu0 %4341
        %4345 = vset.pattern.permute.xlu0 0
        %4346 = vperm.xlu0 %4345, %v4332
        %v4347 = vpop.permute.xlu0 %4346
        %4350 = vset.pattern.permute.xlu0 0
        %4351 = vperm.xlu0 %4350, %v4333
        %v4352 = vpop.permute.xlu0 %4351
        %v4358 = vunpack.c.l.b16 %v4326
        %v4359 = vunpack.c.l.b16 %v4327
        %v4360 = vunpack.c.l.b16 %v4328
        %v4361 = vunpack.c.l.b16 %v4329
        %v4362 = vpack.c.b16 %v4359, %v4358
        %v4363 = vpack.c.b16 %v4361, %v4360
        %v4364 = vunpack.c.l.b16 %v3251
        %v4365 = vunpack.c.l.b16 %v3261
        %v4366 = vunpack.c.l.b16 %v3271
        %v4367 = vunpack.c.l.b16 %v3285
        %v4368 = vunpack.c.l.b16 %v3295
        %v4369 = vunpack.c.l.b16 %v3305
        %v4370 = vunpack.c.l.b16 %v3319
        %v4371 = vunpack.c.l.b16 %v3329
        %v4372 = vunpack.c.l.b16 %v3339
        %v4373 = vunpack.c.l.b16 %v3353
        %v4374 = vunpack.c.l.b16 %v3363
        %v4375 = vunpack.c.l.b16 %v3373
        %v4376 = vunpack.c.l.b16 %v3387
        %v4377 = vunpack.c.l.b16 %v3397
        %v4378 = vunpack.c.l.b16 %v3407
        %v4379 = vunpack.c.l.b16 %v3421
        %v4380 = vunpack.c.l.b16 %v3431
        %v4381 = vunpack.c.l.b16 %v3441
        %v4382 = vunpack.c.l.b16 %v3455
        %v4383 = vunpack.c.l.b16 %v3465
        %v4384 = vunpack.c.l.b16 %v3475
        %v4385 = vunpack.c.l.b16 %v3489
        %v4386 = vunpack.c.l.b16 %v3499
        %v4387 = vunpack.c.l.b16 %v3509
        %v4388 = vunpack.c.l.b16 %v3523
        %v4389 = vunpack.c.l.b16 %v3533
        %v4390 = vunpack.c.l.b16 %v3543
        %v4391 = vunpack.c.l.b16 %v3557
        %v4392 = vunpack.c.l.b16 %v3567
        %v4393 = vunpack.c.l.b16 %v3577
        %v4394 = vunpack.c.l.b16 %v3591
        %v4395 = vunpack.c.l.b16 %v3601
        %v4396 = vunpack.c.l.b16 %v3611
        %v4397 = vunpack.c.l.b16 %v3625
        %v4398 = vunpack.c.l.b16 %v3635
        %v4399 = vunpack.c.l.b16 %v3645
        %v4400 = vunpack.c.l.b16 %v3659
        %v4401 = vunpack.c.l.b16 %v3669
        %v4402 = vunpack.c.l.b16 %v3679
        %v4403 = vunpack.c.l.b16 %v3693
        %v4404 = vunpack.c.l.b16 %v3703
        %v4405 = vunpack.c.l.b16 %v3713
        %v4406 = vunpack.c.l.b16 %v3727
        %v4407 = vunpack.c.l.b16 %v3737
        %v4408 = vunpack.c.l.b16 %v3747
        %v4409 = vunpack.c.l.b16 %v3761
        %v4410 = vunpack.c.l.b16 %v3771
        %v4411 = vunpack.c.l.b16 %v3781
        %v4412 = vunpack.c.l.b16 %v3795
        %v4413 = vunpack.c.l.b16 %v3805
        %v4414 = vunpack.c.l.b16 %v3815
        %v4415 = vunpack.c.l.b16 %v3829
        %v4416 = vunpack.c.l.b16 %v3839
        %v4417 = vunpack.c.l.b16 %v3849
        %v4418 = vunpack.c.l.b16 %v3863
        %v4419 = vunpack.c.l.b16 %v3873
        %v4420 = vunpack.c.l.b16 %v3883
        %v4421 = vunpack.c.l.b16 %v3897
        %v4422 = vunpack.c.l.b16 %v3907
        %v4423 = vunpack.c.l.b16 %v3917
        %v4424 = vunpack.c.l.b16 %v3931
        %v4425 = vunpack.c.l.b16 %v3941
        %v4426 = vunpack.c.l.b16 %v3951
        %v4427 = vunpack.c.l.b16 %v3965
        %v4428 = vunpack.c.l.b16 %v3975
        %v4429 = vunpack.c.l.b16 %v3985
        %v4430 = vunpack.c.l.b16 %v3999
        %v4431 = vunpack.c.l.b16 %v4009
        %v4432 = vunpack.c.l.b16 %v4019
        %v4433 = vunpack.c.l.b16 %v4033
        %v4434 = vunpack.c.l.b16 %v4043
        %v4435 = vunpack.c.l.b16 %v4053
        %v4436 = vunpack.c.l.b16 %v4067
        %v4437 = vunpack.c.l.b16 %v4077
        %v4438 = vunpack.c.l.b16 %v4087
        %v4439 = vunpack.c.l.b16 %v4101
        %v4440 = vunpack.c.l.b16 %v4111
        %v4441 = vunpack.c.l.b16 %v4121
        %v4442 = vunpack.c.l.b16 %v4135
        %v4443 = vunpack.c.l.b16 %v4145
        %v4444 = vunpack.c.l.b16 %v4155
        %v4445 = vunpack.c.l.b16 %v4169
        %v4446 = vunpack.c.l.b16 %v4179
        %v4447 = vunpack.c.l.b16 %v4189
        %v4448 = vunpack.c.l.b16 %v4203
        %v4449 = vunpack.c.l.b16 %v4213
        %v4450 = vunpack.c.l.b16 %v4223
        %v4451 = vunpack.c.l.b16 %v4237
        %v4452 = vunpack.c.l.b16 %v4247
        %v4453 = vunpack.c.l.b16 %v4257
        %v4454 = vunpack.c.l.b16 %v4271
        %v4455 = vunpack.c.l.b16 %v4281
        %v4456 = vunpack.c.l.b16 %v4291
        %v4457 = vunpack.c.l.b16 %v4305
        %v4458 = vunpack.c.l.b16 %v4315
        %v4459 = vunpack.c.l.b16 %v4325
        %v4460 = vpack.c.b16 %v4365, %v4364
        %v4461 = vpack.c.b16 %v4367, %v4366
        %v4462 = vpack.c.b16 %v4369, %v4368
        %v4463 = vpack.c.b16 %v4371, %v4370
        %v4464 = vpack.c.b16 %v4373, %v4372
        %v4465 = vpack.c.b16 %v4375, %v4374
        %v4466 = vpack.c.b16 %v4377, %v4376
        %v4467 = vpack.c.b16 %v4379, %v4378
        %v4468 = vpack.c.b16 %v4381, %v4380
        %v4469 = vpack.c.b16 %v4383, %v4382
        %v4470 = vpack.c.b16 %v4385, %v4384
        %v4471 = vpack.c.b16 %v4387, %v4386
        %v4472 = vpack.c.b16 %v4389, %v4388
        %v4473 = vpack.c.b16 %v4391, %v4390
        %v4474 = vpack.c.b16 %v4393, %v4392
        %v4475 = vpack.c.b16 %v4395, %v4394
        %v4476 = vpack.c.b16 %v4397, %v4396
        %v4477 = vpack.c.b16 %v4399, %v4398
        %v4478 = vpack.c.b16 %v4401, %v4400
        %v4479 = vpack.c.b16 %v4403, %v4402
        %v4480 = vpack.c.b16 %v4405, %v4404
        %v4481 = vpack.c.b16 %v4407, %v4406
        %v4482 = vpack.c.b16 %v4409, %v4408
        %v4483 = vpack.c.b16 %v4411, %v4410
        %v4484 = vpack.c.b16 %v4413, %v4412
        %v4485 = vpack.c.b16 %v4415, %v4414
        %v4486 = vpack.c.b16 %v4417, %v4416
        %v4487 = vpack.c.b16 %v4419, %v4418
        %v4488 = vpack.c.b16 %v4421, %v4420
        %v4489 = vpack.c.b16 %v4423, %v4422
        %v4490 = vpack.c.b16 %v4425, %v4424
        %v4491 = vpack.c.b16 %v4427, %v4426
        %v4492 = vpack.c.b16 %v4429, %v4428
        %v4493 = vpack.c.b16 %v4431, %v4430
        %v4494 = vpack.c.b16 %v4433, %v4432
        %v4495 = vpack.c.b16 %v4435, %v4434
        %v4496 = vpack.c.b16 %v4437, %v4436
        %v4497 = vpack.c.b16 %v4439, %v4438
        %v4498 = vpack.c.b16 %v4441, %v4440
        %v4499 = vpack.c.b16 %v4443, %v4442
        %v4500 = vpack.c.b16 %v4445, %v4444
        %v4501 = vpack.c.b16 %v4447, %v4446
        %v4502 = vpack.c.b16 %v4449, %v4448
        %v4503 = vpack.c.b16 %v4451, %v4450
        %v4504 = vpack.c.b16 %v4453, %v4452
        %v4505 = vpack.c.b16 %v4455, %v4454
        %v4506 = vpack.c.b16 %v4457, %v4456
        %v4507 = vpack.c.b16 %v4459, %v4458
        %vm4508 = vcmask 130048
        %v4510 = vsel %vm4508, %v4362, 0
        %v4513 = vsel %vm4508, %v4363, 0
        %v4516 = vsel %vm4508, %v4460, 0
        %v4519 = vsel %vm4508, %v4461, 0
        %v4522 = vsel %vm4508, %v4462, 0
        %v4525 = vsel %vm4508, %v4463, 0
        %v4528 = vsel %vm4508, %v4464, 0
        %v4531 = vsel %vm4508, %v4465, 0
        %v4534 = vsel %vm4508, %v4466, 0
        %v4537 = vsel %vm4508, %v4467, 0
        %v4540 = vsel %vm4508, %v4468, 0
        %v4543 = vsel %vm4508, %v4469, 0
        %v4546 = vsel %vm4508, %v4470, 0
        %v4549 = vsel %vm4508, %v4471, 0
        %v4552 = vsel %vm4508, %v4472, 0
        %v4555 = vsel %vm4508, %v4473, 0
        %v4558 = vsel %vm4508, %v4474, 0
        %v4561 = vsel %vm4508, %v4475, 0
        %v4564 = vsel %vm4508, %v4476, 0
        %v4567 = vsel %vm4508, %v4477, 0
        %v4570 = vsel %vm4508, %v4478, 0
        %v4573 = vsel %vm4508, %v4479, 0
        %v4576 = vsel %vm4508, %v4480, 0
        %v4579 = vsel %vm4508, %v4481, 0
        %v4582 = vsel %vm4508, %v4482, 0
        %v4585 = vsel %vm4508, %v4483, 0
        %v4588 = vsel %vm4508, %v4484, 0
        %v4591 = vsel %vm4508, %v4485, 0
        %v4594 = vsel %vm4508, %v4486, 0
        %v4597 = vsel %vm4508, %v4487, 0
        %v4600 = vsel %vm4508, %v4488, 0
        %v4603 = vsel %vm4508, %v4489, 0
        %v4606 = vsel %vm4508, %v4490, 0
        %v4609 = vsel %vm4508, %v4491, 0
        %v4612 = vsel %vm4508, %v4492, 0
        %v4615 = vsel %vm4508, %v4493, 0
        %v4618 = vsel %vm4508, %v4494, 0
        %v4621 = vsel %vm4508, %v4495, 0
        %v4624 = vsel %vm4508, %v4496, 0
        %v4627 = vsel %vm4508, %v4497, 0
        %v4630 = vsel %vm4508, %v4498, 0
        %v4633 = vsel %vm4508, %v4499, 0
        %v4636 = vsel %vm4508, %v4500, 0
        %v4639 = vsel %vm4508, %v4501, 0
        %v4642 = vsel %vm4508, %v4502, 0
        %v4645 = vsel %vm4508, %v4503, 0
        %v4648 = vsel %vm4508, %v4504, 0
        %v4651 = vsel %vm4508, %v4505, 0
        %v4654 = vsel %vm4508, %v4506, 0
        %v4657 = vsel %vm4508, %v4507, 0
        %4659 = vmatpush.bf16.xpose.msra.mxu0 %v4537
        %4660 = vmatpush.bf16.xpose.msra.mxu0 %v4534
        %4661 = vmatpush.bf16.xpose.msra.mxu0 %v4531
        %4662 = vmatpush.bf16.xpose.msra.mxu0 %v4528
        %4663 = vmatpush.bf16.xpose.msra.mxu0 %v4525
        %4664 = vmatpush.bf16.xpose.msra.mxu0 %v4522
        %4665 = vmatpush.bf16.xpose.msra.mxu0 %v4519
        %4666 = vmatpush.bf16.xpose.msra.mxu0 %v4516
        %4667 = vmatmul.bf16.gmra.mxu0 %v4510
        %v4668 = vpop.f32.mrf.mxu0
        %v4669 = vadd.f32 %v4337, %v4668
        %v4670 = vpop.f32.mrf.mxu0
        %v4671 = vadd.f32 %v4342, %v4670
        %4672 = vmatmul.bf16.gmra.mxu0 %v4513
        %v4673 = vpop.f32.mrf.mxu0
        %v4674 = vadd.f32 %v4347, %v4673
        %v4675 = vpop.f32.mrf.mxu0
        %v4676 = vadd.f32 %v4352, %v4675
        %4677 = vdwg.mxu0
        %4678 = vmatpush.bf16.xpose.msra.mxu0 %v4561
        %4679 = vmatpush.bf16.xpose.msra.mxu0 %v4558
        %4680 = vmatpush.bf16.xpose.msra.mxu0 %v4555
        %4681 = vmatpush.bf16.xpose.msra.mxu0 %v4552
        %4682 = vmatpush.bf16.xpose.msra.mxu0 %v4549
        %4683 = vmatpush.bf16.xpose.msra.mxu0 %v4546
        %4684 = vmatpush.bf16.xpose.msra.mxu0 %v4543
        %4685 = vmatpush.bf16.xpose.msra.mxu0 %v4540
        %4686 = vmatmul.bf16.gmra.mxu0 %v4510
        %v4687 = vpop.f32.mrf.mxu0
        %v4688 = vadd.f32 %v4337, %v4687
        %v4689 = vpop.f32.mrf.mxu0
        %v4690 = vadd.f32 %v4342, %v4689
        %4691 = vmatmul.bf16.gmra.mxu0 %v4513
        %v4692 = vpop.f32.mrf.mxu0
        %v4693 = vadd.f32 %v4347, %v4692
        %v4694 = vpop.f32.mrf.mxu0
        %v4695 = vadd.f32 %v4352, %v4694
        %4696 = vdwg.mxu0
        %4697 = vmatpush.bf16.xpose.msra.mxu0 %v4585
        %4698 = vmatpush.bf16.xpose.msra.mxu0 %v4582
        %4699 = vmatpush.bf16.xpose.msra.mxu0 %v4579
        %4700 = vmatpush.bf16.xpose.msra.mxu0 %v4576
        %4701 = vmatpush.bf16.xpose.msra.mxu0 %v4573
        %4702 = vmatpush.bf16.xpose.msra.mxu0 %v4570
        %4703 = vmatpush.bf16.xpose.msra.mxu0 %v4567
        %4704 = vmatpush.bf16.xpose.msra.mxu0 %v4564
        %4705 = vmatmul.bf16.gmra.mxu0 %v4510
        %v4706 = vpop.f32.mrf.mxu0
        %v4707 = vadd.f32 %v4337, %v4706
        %v4708 = vpop.f32.mrf.mxu0
        %v4709 = vadd.f32 %v4342, %v4708
        %4710 = vmatmul.bf16.gmra.mxu0 %v4513
        %v4711 = vpop.f32.mrf.mxu0
        %v4712 = vadd.f32 %v4347, %v4711
        %v4713 = vpop.f32.mrf.mxu0
        %v4714 = vadd.f32 %v4352, %v4713
        %4715 = vdwg.mxu0
        %4716 = vmatpush.bf16.xpose.msra.mxu0 %v4609
        %4717 = vmatpush.bf16.xpose.msra.mxu0 %v4606
        %4718 = vmatpush.bf16.xpose.msra.mxu0 %v4603
        %4719 = vmatpush.bf16.xpose.msra.mxu0 %v4600
        %4720 = vmatpush.bf16.xpose.msra.mxu0 %v4597
        %4721 = vmatpush.bf16.xpose.msra.mxu0 %v4594
        %4722 = vmatpush.bf16.xpose.msra.mxu0 %v4591
        %4723 = vmatpush.bf16.xpose.msra.mxu0 %v4588
        %4724 = vmatmul.bf16.gmra.mxu0 %v4510
        %v4725 = vpop.f32.mrf.mxu0
        %v4726 = vadd.f32 %v4337, %v4725
        %v4727 = vpop.f32.mrf.mxu0
        %v4728 = vadd.f32 %v4342, %v4727
        %4729 = vmatmul.bf16.gmra.mxu0 %v4513
        %v4730 = vpop.f32.mrf.mxu0
        %v4731 = vadd.f32 %v4347, %v4730
        %v4732 = vpop.f32.mrf.mxu0
        %v4733 = vadd.f32 %v4352, %v4732
        %4734 = vdwg.mxu0
        %4735 = vmatpush.bf16.xpose.msra.mxu0 %v4633
        %4736 = vmatpush.bf16.xpose.msra.mxu0 %v4630
        %4737 = vmatpush.bf16.xpose.msra.mxu0 %v4627
        %4738 = vmatpush.bf16.xpose.msra.mxu0 %v4624
        %4739 = vmatpush.bf16.xpose.msra.mxu0 %v4621
        %4740 = vmatpush.bf16.xpose.msra.mxu0 %v4618
        %4741 = vmatpush.bf16.xpose.msra.mxu0 %v4615
        %4742 = vmatpush.bf16.xpose.msra.mxu0 %v4612
        %4743 = vmatmul.bf16.gmra.mxu0 %v4510
        %v4744 = vpop.f32.mrf.mxu0
        %v4745 = vadd.f32 %v4337, %v4744
        %v4746 = vpop.f32.mrf.mxu0
        %v4747 = vadd.f32 %v4342, %v4746
        %4748 = vmatmul.bf16.gmra.mxu0 %v4513
        %v4749 = vpop.f32.mrf.mxu0
        %v4750 = vadd.f32 %v4347, %v4749
        %v4751 = vpop.f32.mrf.mxu0
        %v4752 = vadd.f32 %v4352, %v4751
        %4753 = vdwg.mxu0
        %4754 = vmatpush.bf16.xpose.msra.mxu0 %v4657
        %4755 = vmatpush.bf16.xpose.msra.mxu0 %v4654
        %4756 = vmatpush.bf16.xpose.msra.mxu0 %v4651
        %4757 = vmatpush.bf16.xpose.msra.mxu0 %v4648
        %4758 = vmatpush.bf16.xpose.msra.mxu0 %v4645
        %4759 = vmatpush.bf16.xpose.msra.mxu0 %v4642
        %4760 = vmatpush.bf16.xpose.msra.mxu0 %v4639
        %4761 = vmatpush.bf16.xpose.msra.mxu0 %v4636
        %4762 = vmatmul.bf16.gmra.mxu0 %v4510
        %v4763 = vpop.f32.mrf.mxu0
        %v4764 = vadd.f32 %v4337, %v4763
        %v4765 = vpop.f32.mrf.mxu0
        %v4766 = vadd.f32 %v4342, %v4765
        %4767 = vmatmul.bf16.gmra.mxu0 %v4513
        %v4768 = vpop.f32.mrf.mxu0
        %v4769 = vadd.f32 %v4347, %v4768
        %v4770 = vpop.f32.mrf.mxu0
        %v4771 = vadd.f32 %v4352, %v4770
        %4772 = vdwg.mxu0
        %4773 = vst [vmem:[%s177] sm:$0xff] %v4669
        %4774 = vst [vmem:[%s177 + $0x8] sm:$0xff] %v4688
        %4775 = vst [vmem:[%s177 + $0x10] sm:$0xff] %v4707
        %4776 = vst [vmem:[%s177 + $0x18] sm:$0xff] %v4726
        %4777 = vst [vmem:[%s177 + $0x20] sm:$0xff] %v4745
        %4778 = vst [vmem:[%s177 + $0x28] sm:$0xff] %v4764
        %4779 = vst [vmem:[%s177 + $0x30] sm:$0xff] %v4671
        %4780 = vst [vmem:[%s177 + $0x38] sm:$0xff] %v4690
        %4781 = vst [vmem:[%s177 + $0x40] sm:$0xff] %v4709
        %4782 = vst [vmem:[%s177 + $0x48] sm:$0xff] %v4728
        %4783 = vst [vmem:[%s177 + $0x50] sm:$0xff] %v4747
        %4784 = vst [vmem:[%s177 + $0x58] sm:$0xff] %v4766
        %4785 = vst [vmem:[%s177 + $0x60] sm:$0xff] %v4674
        %4786 = vst [vmem:[%s177 + $0x68] sm:$0xff] %v4693
        %4787 = vst [vmem:[%s177 + $0x70] sm:$0xff] %v4712
        %4788 = vst [vmem:[%s177 + $0x78] sm:$0xff] %v4731
        %4789 = vst [vmem:[%s177 + $0x80] sm:$0xff] %v4750
        %4790 = vst [vmem:[%s177 + $0x88] sm:$0xff] %v4769
        %4791 = vst [vmem:[%s177 + $0x90] sm:$0xff] %v4676
        %4792 = vst [vmem:[%s177 + $0x98] sm:$0xff] %v4695
        %4793 = vst [vmem:[%s177 + $0xa0] sm:$0xff] %v4714
        %4794 = vst [vmem:[%s177 + $0xa8] sm:$0xff] %v4733
        %4795 = vst [vmem:[%s177 + $0xb0] sm:$0xff] %v4752
        %4796 = vst [vmem:[%s177 + $0xb8] sm:$0xff] %v4771
        %s4797 = sand.u32 %s107, 1
        %s4798 = scalar_lea.sflag [#allocation3], %s4797
        %s4799 = sand.u32 %s107, 1
        %s4800 = smul.addr %s4799, 192
        %s4801 = scalar_lea.vmem [#allocation2], %s4800
        // Predicated region
        $region33: #{tpu_custom_call.1} parent=31 // pred_check
          %p4802 = pneg %p117
        $region34: #{tpu_custom_call.1} parent=31 // pred_check_branch
          %4804 = sbr.rel (%p4802) target = $region36
        $region35: #{tpu_custom_call.1} parent=31 // pred_region
          %4806 = vsyncadd %s4798, 0
          %s4807 = smul.addr %s22, 24
          %s4808 = smul.addr %s21, 24
          %s4809 = sadd.s32 %s4807, %s4808
          %s4810 = smul.addr %s4809, 8
          %s4811 = scalar_lea.hbm %s3, %s4810
          %s4812 = sshll.u32 %s4801, 4
          %s4813 = int_to_ptr.vmem [resolvable:$true] %s4812
          %s4814 = sshll.u32 %s4811, 4
          %s4815 = int_to_ptr.hbm [resolvable:$true] %s4814
          %4820 = dma.vmem_to_hbm [thread:$0]  %s4813, 3072, %s4815, %s4798, 768, 768, 48
        $region36: #{tpu_custom_call.1} parent=31 // pred_fallthru
          _
      $region32: #{tpu_custom_call.1} parent=5 // pred_fallthru
        _
      %p4821 = scmp.le.s32.totalorder 2, %s12
      // Predicated region
      $region37: #{tpu_custom_call.1} parent=5 // pred_check
        %p4822 = pneg %p4821
      $region38: #{tpu_custom_call.1} parent=5 // pred_check_branch
        %4824 = sbr.rel (%p4822) target = $region40
      $region39: #{tpu_custom_call.1} parent=5 // pred_region
        %s4825 = ssub.s32 %s12, 2
        // Predicated region
        $region41: #{tpu_custom_call.1} parent=39 // pred_check
          %p4826 = pneg %p123
        $region42: #{tpu_custom_call.1} parent=39 // pred_check_branch
          %4828 = sbr.rel (%p4826) target = $region44
        $region43: #{tpu_custom_call.1} parent=39 // pred_region
          %s4829 = sand.u32 %s108, 1
          %s4830 = scalar_lea.sflag [#allocation3], %s4829
          %s4831 = sand.u32 %s108, 1
          %s4832 = smul.addr %s4831, 192
          %s4833 = scalar_lea.vmem [#allocation2], %s4832
          %4835 = dma.done %s4830, 3072
        $region44: #{tpu_custom_call.1} parent=39 // pred_fallthru
          _
      $region40: #{tpu_custom_call.1} parent=5 // pred_fallthru
        _
    $region6: #{tpu_custom_call.1} parent=1 // loop_footer
      %s16 = sadd.s32 1, %s12
    $region7: #{tpu_custom_call.1} parent=1 // loop_footer_branch
      %11 = sbr.rel target = $region3
    $region8: #{tpu_custom_call.1} parent=1 // loop_exit
      _
    %4836 = vsyncpa [#allocation3], 1
    %s4837 = scalar_lea.sflag [#allocation3], 1
    %4838 = vsyncpa %s4837, 1

</llo_original>
